<compile_context>
chip_gen: v7x
topology: tpu7x:2x2x1
jax: 0.10.0
libtpu: 0.0.40
codegen_flags: <defaults>
</compile_context>

<pallas_src>
import jax
import jax.numpy as jnp
from jax.experimental import pallas as pl
from jax.experimental.pallas import tpu as pltpu

NEG_SLOPE = 0.01  # nn.LeakyReLU default
PREC = jax.lax.Precision.HIGHEST

# Charge-conjugation / parity permutation used in forward() (self-inverse).
CP_PERM = jnp.array([3, 4, 5, 0, 1, 2, 9, 10, 11, 6, 7, 8, 12, 13],
                    dtype=jnp.int32)


def _leaky_relu(v):
    return jnp.where(v > 0, v, NEG_SLOPE * v)


def _dot(a, b):
    return jnp.dot(a, b, preferred_element_type=jnp.float32, precision=PREC)


def mlp_cp_kernel(x_ref,
                  w1t_ref, w1cpt_ref, b1_ref,
                  w2t_ref, b2_ref,
                  w3t_ref, b3_ref,
                  w4t_ref, b4_ref,
                  w5_ref,
                  o_ref):
    """Per-batch-tile hot path, batch-on-lanes layout, both CP branches fused."""
    tr = x_ref.shape[1]                      # batch tile (multiple of 128)
    x = x_ref[...]                           # [14, TR]

    # Layer 1: branch A uses W1^T, branch B uses the signed-permuted W1cp^T
    # (the CP input transform is folded into the weights).  Stack the two
    # branch activations along the lane/batch axis so the rest of the network
    # runs once on [*, 2*TR].
    ha = _dot(w1t_ref[...], x)               # [80, TR]
    hb = _dot(w1cpt_ref[...], x)             # [80, TR]
    h = jnp.concatenate([ha, hb], axis=1)    # [80, 2*TR]
    h = _leaky_relu(h + b1_ref[...])

    # Layers 2-4: a single lane-dense dot per layer covers both branches.
    h = _leaky_relu(_dot(w2t_ref[...], h) + b2_ref[...])   # [80, 2*TR]
    h = _leaky_relu(_dot(w3t_ref[...], h) + b3_ref[...])   # [40, 2*TR]
    h = _leaky_relu(_dot(w4t_ref[...], h) + b4_ref[...])   # [20, 2*TR]

    # Final 20->1 layer off the MXU: (ha4 - hb4) weighted-sum over the feature
    # (sublane) axis on the VPU/XLU.  The last-layer bias cancels here.
    d = h[:, :tr] - h[:, tr:]                               # [20, TR]
    o_ref[...] = jnp.sum(w5_ref[...] * d, axis=0, keepdims=True)   # [1, TR]


def init_params(key):
    """Deterministic init matching PyTorch nn.Linear default (U[-1/sqrt(fan_in), +])."""
    sizes = [(14, 80), (80, 80), (80, 40), (40, 20), (20, 1)]
    params = []
    for i, (fan_in, fan_out) in enumerate(sizes):
        kw, kb = jax.random.split(jax.random.fold_in(key, i))
        bound = 1.0 / jnp.sqrt(float(fan_in))
        w = jax.random.uniform(kw, (fan_in, fan_out), jnp.float32, -bound, bound)
        b = jax.random.uniform(kb, (1, fan_out), jnp.float32, -bound, bound)
        params.append((w, b))
    return params


def _round_up(n, m):
    return ((n + m - 1) // m) * m


@jax.jit
def network_forward(x, params):
    """Full module: f(x) - f(cpx), fused into one lane-tiled Pallas kernel."""
    B = x.shape[0]
    (w1, b1), (w2, b2), (w3, b3), (w4, b4), (w5, _b5) = params

    # Fold the CP branch into layer-1 weights: cpx @ W1 == x @ (-W1[perm, :]).
    w1cp = -w1[CP_PERM, :]

    # Transposed ("batch on lanes") operands — KB-sized, wrapper-side is free.
    w1t, w1cpt = w1.T, w1cp.T                 # [80, 14]
    w2t, w3t, w4t = w2.T, w3.T, w4.T          # [80,80], [40,80], [20,40]
    b1c, b2c, b3c, b4c = b1.T, b2.T, b3.T, b4.T   # [dout, 1] column biases
    w5c = w5                                  # [20, 1] column

    # Tile policy: lanes hold the batch. Pad only to a multiple of 128, cap the
    # tile at 2048 lanes, and force >=2 grid steps when possible so v7x's two
    # TensorCores both get work (grid axis is "parallel").
    LANE = 128
    TR_CAP = 2048
    r = _round_up(B, LANE)
    num_tiles = max(pl.cdiv(r, TR_CAP), 2 if r >= 2 * LANE else 1)
    TR = _round_up(pl.cdiv(r, num_tiles), LANE)
    Rpad = TR * num_tiles

    x_t = jnp.pad(x.T, ((0, 0), (0, Rpad - B)))        # [14, Rpad]

    def resident(arr):
        # Full-array block, constant index_map -> stays in VMEM across the grid.
        return pl.BlockSpec(arr.shape, lambda i: (0, 0))

    out_t = pl.pallas_call(
        mlp_cp_kernel,
        out_shape=jax.ShapeDtypeStruct((1, Rpad), jnp.float32),
        grid=(num_tiles,),
        in_specs=[
            pl.BlockSpec((14, TR), lambda i: (0, i)),   # x tile (lane-tiled)
            resident(w1t), resident(w1cpt), resident(b1c),
            resident(w2t), resident(b2c),
            resident(w3t), resident(b3c),
            resident(w4t), resident(b4c),
            resident(w5c),
        ],
        out_specs=pl.BlockSpec((1, TR), lambda i: (0, i)),   # lane-dense output
        compiler_params=pltpu.CompilerParams(
            dimension_semantics=("parallel",)),
    )(x_t, w1t, w1cpt, b1c, w2t, b2c, w3t, b3c, w4t, b4c, w5c)

    return out_t.reshape(Rpad, 1)[:B]


if __name__ == "__main__":
    key = jax.random.PRNGKey(0)
    k_x, k_x2, k_p = jax.random.split(key, 3)
    params = init_params(k_p)

    # Pure-JAX reference (same precision) of the original PyTorch semantics.
    def ref_mlp(h):
        for i, (w, b) in enumerate(params):
            h = jnp.dot(h, w, precision=PREC) + b
            if i < len(params) - 1:
                h = jnp.where(h > 0, h, NEG_SLOPE * h)
        return h

    def ref_network(x):
        return ref_mlp(x) - ref_mlp(-x[:, CP_PERM])

    # Small batch (single grid step).
    B = 8
    x = jax.random.normal(k_x, (B, 14), dtype=jnp.float32)
    out = network_forward(x, params)
    jax.block_until_ready(out)
    assert out.shape == (B, 1), out.shape
    ref = ref_network(x)
    assert jnp.allclose(out, ref, atol=1e-5, rtol=1e-5), (
        float(jnp.max(jnp.abs(out - ref))))

    # Larger, non-multiple-of-128 batch: exercises padding + >=2 grid steps.
    B2 = 300
    x2 = jax.random.normal(k_x2, (B2, 14), dtype=jnp.float32)
    out2 = network_forward(x2, params)
    jax.block_until_ready(out2)
    assert out2.shape == (B2, 1), out2.shape
    ref2 = ref_network(x2)
    assert jnp.allclose(out2, ref2, atol=1e-5, rtol=1e-5), (
        float(jnp.max(jnp.abs(out2 - ref2))))

    print("KERNEL_OK")
</pallas_src>

<mosaic_0001>
module attributes {stable_mosaic.version = 11 : i64} {
  func.func @mlp_cp_kernel(%arg0: i32, %arg1: memref<14x128xf32, #tpu.memory_space<vmem>>, %arg2: memref<80x14xf32, #tpu.memory_space<vmem>>, %arg3: memref<80x14xf32, #tpu.memory_space<vmem>>, %arg4: memref<80x1xf32, #tpu.memory_space<vmem>>, %arg5: memref<80x80xf32, #tpu.memory_space<vmem>>, %arg6: memref<80x1xf32, #tpu.memory_space<vmem>>, %arg7: memref<40x80xf32, #tpu.memory_space<vmem>>, %arg8: memref<40x1xf32, #tpu.memory_space<vmem>>, %arg9: memref<20x40xf32, #tpu.memory_space<vmem>>, %arg10: memref<20x1xf32, #tpu.memory_space<vmem>>, %arg11: memref<20x1xf32, #tpu.memory_space<vmem>>, %arg12: memref<1x128xf32, #tpu.memory_space<vmem>>) attributes {dimension_semantics = [#tpu.dimension_semantics<parallel>], iteration_bounds = array<i64: 1>, scalar_prefetch = 0 : i64, scratch_operands = 0 : i64, tpu.core_type = #tpu.core_type<tc>, window_params = [{transform_indices = @transform_0, window_bounds = array<i64: 14, 128>}, {pipeline_mode = #tpu.pipeline_mode<synchronous>, transform_indices = @transform_1, window_bounds = array<i64: 80, 14>}, {pipeline_mode = #tpu.pipeline_mode<synchronous>, transform_indices = @transform_2, window_bounds = array<i64: 80, 14>}, {pipeline_mode = #tpu.pipeline_mode<synchronous>, transform_indices = @transform_3, window_bounds = array<i64: 80, 1>}, {pipeline_mode = #tpu.pipeline_mode<synchronous>, transform_indices = @transform_4, window_bounds = array<i64: 80, 80>}, {pipeline_mode = #tpu.pipeline_mode<synchronous>, transform_indices = @transform_5, window_bounds = array<i64: 80, 1>}, {pipeline_mode = #tpu.pipeline_mode<synchronous>, transform_indices = @transform_6, window_bounds = array<i64: 40, 80>}, {pipeline_mode = #tpu.pipeline_mode<synchronous>, transform_indices = @transform_7, window_bounds = array<i64: 40, 1>}, {pipeline_mode = #tpu.pipeline_mode<synchronous>, transform_indices = @transform_8, window_bounds = array<i64: 20, 40>}, {pipeline_mode = #tpu.pipeline_mode<synchronous>, transform_indices = @transform_9, window_bounds = array<i64: 20, 1>}, {pipeline_mode = #tpu.pipeline_mode<synchronous>, transform_indices = @transform_10, window_bounds = array<i64: 20, 1>}, {transform_indices = @transform_11, window_bounds = array<i64: 1, 128>}]} {
    %c0 = arith.constant 0 : index
    %c0_0 = arith.constant 0 : index
    %0 = vector.load %arg1[%c0, %c0_0] : memref<14x128xf32, #tpu.memory_space<vmem>>, vector<14x128xf32>
    %c0_1 = arith.constant 0 : index
    %c0_2 = arith.constant 0 : index
    %1 = vector.load %arg2[%c0_1, %c0_2] : memref<80x14xf32, #tpu.memory_space<vmem>>, vector<80x14xf32>
    %cst = arith.constant dense<0.000000e+00> : vector<80x128xf32>
    %2 = tpu.matmul %1, %0, %cst {dimension_numbers = #tpu.dot_dimension_numbers<[1], [0], [0], [1], [0, 0, 1, 1], [], []>, precision = #tpu.contract_precision<fp32>} : vector<80x14xf32>, vector<14x128xf32>, vector<80x128xf32> -> vector<80x128xf32>
    %c0_3 = arith.constant 0 : index
    %c0_4 = arith.constant 0 : index
    %3 = vector.load %arg3[%c0_3, %c0_4] : memref<80x14xf32, #tpu.memory_space<vmem>>, vector<80x14xf32>
    %cst_5 = arith.constant dense<0.000000e+00> : vector<80x128xf32>
    %4 = tpu.matmul %3, %0, %cst_5 {dimension_numbers = #tpu.dot_dimension_numbers<[1], [0], [0], [1], [0, 0, 1, 1], [], []>, precision = #tpu.contract_precision<fp32>} : vector<80x14xf32>, vector<14x128xf32>, vector<80x128xf32> -> vector<80x128xf32>
    %5 = tpu.concatenate %2, %4 in 1 : vector<80x128xf32>, vector<80x128xf32> -> vector<80x256xf32>
    %c0_6 = arith.constant 0 : index
    %c0_7 = arith.constant 0 : index
    %6 = vector.load %arg4[%c0_6, %c0_7] : memref<80x1xf32, #tpu.memory_space<vmem>>, vector<80x1xf32>
    %7 = vector.broadcast %6 : vector<80x1xf32> to vector<80x256xf32>
    %8 = arith.addf %5, %7 : vector<80x256xf32>
    %cst_8 = arith.constant 0.000000e+00 : f32
    %9 = vector.broadcast %cst_8 : f32 to vector<80x256xf32>
    %10 = arith.cmpf ogt, %8, %9 : vector<80x256xf32>
    %cst_9 = arith.constant 0.00999999977 : f32
    %11 = vector.broadcast %cst_9 : f32 to vector<80x256xf32>
    %12 = arith.mulf %11, %8 : vector<80x256xf32>
    %13 = arith.select %10, %8, %12 : vector<80x256xi1>, vector<80x256xf32>
    %c0_10 = arith.constant 0 : index
    %c0_11 = arith.constant 0 : index
    %14 = vector.load %arg5[%c0_10, %c0_11] : memref<80x80xf32, #tpu.memory_space<vmem>>, vector<80x80xf32>
    %cst_12 = arith.constant dense<0.000000e+00> : vector<80x256xf32>
    %15 = tpu.matmul %14, %13, %cst_12 {dimension_numbers = #tpu.dot_dimension_numbers<[1], [0], [0], [1], [0, 0, 1, 1], [], []>, precision = #tpu.contract_precision<fp32>} : vector<80x80xf32>, vector<80x256xf32>, vector<80x256xf32> -> vector<80x256xf32>
    %c0_13 = arith.constant 0 : index
    %c0_14 = arith.constant 0 : index
    %16 = vector.load %arg6[%c0_13, %c0_14] : memref<80x1xf32, #tpu.memory_space<vmem>>, vector<80x1xf32>
    %17 = vector.broadcast %16 : vector<80x1xf32> to vector<80x256xf32>
    %18 = arith.addf %15, %17 : vector<80x256xf32>
    %cst_15 = arith.constant 0.000000e+00 : f32
    %19 = vector.broadcast %cst_15 : f32 to vector<80x256xf32>
    %20 = arith.cmpf ogt, %18, %19 : vector<80x256xf32>
    %cst_16 = arith.constant 0.00999999977 : f32
    %21 = vector.broadcast %cst_16 : f32 to vector<80x256xf32>
    %22 = arith.mulf %21, %18 : vector<80x256xf32>
    %23 = arith.select %20, %18, %22 : vector<80x256xi1>, vector<80x256xf32>
    %c0_17 = arith.constant 0 : index
    %c0_18 = arith.constant 0 : index
    %24 = vector.load %arg7[%c0_17, %c0_18] : memref<40x80xf32, #tpu.memory_space<vmem>>, vector<40x80xf32>
    %cst_19 = arith.constant dense<0.000000e+00> : vector<40x256xf32>
    %25 = tpu.matmul %24, %23, %cst_19 {dimension_numbers = #tpu.dot_dimension_numbers<[1], [0], [0], [1], [0, 0, 1, 1], [], []>, precision = #tpu.contract_precision<fp32>} : vector<40x80xf32>, vector<80x256xf32>, vector<40x256xf32> -> vector<40x256xf32>
    %c0_20 = arith.constant 0 : index
    %c0_21 = arith.constant 0 : index
    %26 = vector.load %arg8[%c0_20, %c0_21] : memref<40x1xf32, #tpu.memory_space<vmem>>, vector<40x1xf32>
    %27 = vector.broadcast %26 : vector<40x1xf32> to vector<40x256xf32>
    %28 = arith.addf %25, %27 : vector<40x256xf32>
    %cst_22 = arith.constant 0.000000e+00 : f32
    %29 = vector.broadcast %cst_22 : f32 to vector<40x256xf32>
    %30 = arith.cmpf ogt, %28, %29 : vector<40x256xf32>
    %cst_23 = arith.constant 0.00999999977 : f32
    %31 = vector.broadcast %cst_23 : f32 to vector<40x256xf32>
    %32 = arith.mulf %31, %28 : vector<40x256xf32>
    %33 = arith.select %30, %28, %32 : vector<40x256xi1>, vector<40x256xf32>
    %c0_24 = arith.constant 0 : index
    %c0_25 = arith.constant 0 : index
    %34 = vector.load %arg9[%c0_24, %c0_25] : memref<20x40xf32, #tpu.memory_space<vmem>>, vector<20x40xf32>
    %cst_26 = arith.constant dense<0.000000e+00> : vector<20x256xf32>
    %35 = tpu.matmul %34, %33, %cst_26 {dimension_numbers = #tpu.dot_dimension_numbers<[1], [0], [0], [1], [0, 0, 1, 1], [], []>, precision = #tpu.contract_precision<fp32>} : vector<20x40xf32>, vector<40x256xf32>, vector<20x256xf32> -> vector<20x256xf32>
    %c0_27 = arith.constant 0 : index
    %c0_28 = arith.constant 0 : index
    %36 = vector.load %arg10[%c0_27, %c0_28] : memref<20x1xf32, #tpu.memory_space<vmem>>, vector<20x1xf32>
    %37 = vector.broadcast %36 : vector<20x1xf32> to vector<20x256xf32>
    %38 = arith.addf %35, %37 : vector<20x256xf32>
    %cst_29 = arith.constant 0.000000e+00 : f32
    %39 = vector.broadcast %cst_29 : f32 to vector<20x256xf32>
    %40 = arith.cmpf ogt, %38, %39 : vector<20x256xf32>
    %cst_30 = arith.constant 0.00999999977 : f32
    %41 = vector.broadcast %cst_30 : f32 to vector<20x256xf32>
    %42 = arith.mulf %41, %38 : vector<20x256xf32>
    %43 = arith.select %40, %38, %42 : vector<20x256xi1>, vector<20x256xf32>
    %44 = vector.extract_strided_slice %43 {offsets = [0, 0], sizes = [20, 128], strides = [1, 1]} : vector<20x256xf32> to vector<20x128xf32>
    %45 = vector.extract_strided_slice %43 {offsets = [0, 128], sizes = [20, 128], strides = [1, 1]} : vector<20x256xf32> to vector<20x128xf32>
    %46 = arith.subf %44, %45 : vector<20x128xf32>
    %c0_31 = arith.constant 0 : index
    %c0_32 = arith.constant 0 : index
    %47 = vector.load %arg11[%c0_31, %c0_32] : memref<20x1xf32, #tpu.memory_space<vmem>>, vector<20x1xf32>
    %48 = vector.broadcast %47 : vector<20x1xf32> to vector<20x128xf32>
    %49 = arith.mulf %48, %46 : vector<20x128xf32>
    %cst_33 = arith.constant dense<0.000000e+00> : vector<128xf32>
    %50 = vector.multi_reduction <add>, %49, %cst_33 [0] : vector<20x128xf32> to vector<128xf32>
    %51 = vector.shape_cast %50 : vector<128xf32> to vector<1x128xf32>
    %c0_34 = arith.constant 0 : index
    %c0_35 = arith.constant 0 : index
    %52 = vector.load %arg12[%c0_34, %c0_35] : memref<1x128xf32, #tpu.memory_space<vmem>>, vector<1x128xf32>
    tpu.vector_store %arg12[%c0_34, %c0_35], %51 {strides = array<i32>} : memref<1x128xf32, #tpu.memory_space<vmem>>, vector<1x128xf32>,
    return
  }
  func.func @transform_0(%arg0: i32) -> (i32, i32) {
    %c0_i32 = arith.constant 0 : i32
    %c0_i32_0 = arith.constant 0 : i32
    return %c0_i32, %arg0 : i32, i32
  }
  func.func @transform_1(%arg0: i32) -> (i32, i32) {
    %c0_i32 = arith.constant 0 : i32
    %c0_i32_0 = arith.constant 0 : i32
    %c0_i32_1 = arith.constant 0 : i32
    return %c0_i32, %c0_i32_0 : i32, i32
  }
  func.func @transform_2(%arg0: i32) -> (i32, i32) {
    %c0_i32 = arith.constant 0 : i32
    %c0_i32_0 = arith.constant 0 : i32
    %c0_i32_1 = arith.constant 0 : i32
    return %c0_i32, %c0_i32_0 : i32, i32
  }
  func.func @transform_3(%arg0: i32) -> (i32, i32) {
    %c0_i32 = arith.constant 0 : i32
    %c0_i32_0 = arith.constant 0 : i32
    %c0_i32_1 = arith.constant 0 : i32
    return %c0_i32, %c0_i32_0 : i32, i32
  }
  func.func @transform_4(%arg0: i32) -> (i32, i32) {
    %c0_i32 = arith.constant 0 : i32
    %c0_i32_0 = arith.constant 0 : i32
    %c0_i32_1 = arith.constant 0 : i32
    return %c0_i32, %c0_i32_0 : i32, i32
  }
  func.func @transform_5(%arg0: i32) -> (i32, i32) {
    %c0_i32 = arith.constant 0 : i32
    %c0_i32_0 = arith.constant 0 : i32
    %c0_i32_1 = arith.constant 0 : i32
    return %c0_i32, %c0_i32_0 : i32, i32
  }
  func.func @transform_6(%arg0: i32) -> (i32, i32) {
    %c0_i32 = arith.constant 0 : i32
    %c0_i32_0 = arith.constant 0 : i32
    %c0_i32_1 = arith.constant 0 : i32
    return %c0_i32, %c0_i32_0 : i32, i32
  }
  func.func @transform_7(%arg0: i32) -> (i32, i32) {
    %c0_i32 = arith.constant 0 : i32
    %c0_i32_0 = arith.constant 0 : i32
    %c0_i32_1 = arith.constant 0 : i32
    return %c0_i32, %c0_i32_0 : i32, i32
  }
  func.func @transform_8(%arg0: i32) -> (i32, i32) {
    %c0_i32 = arith.constant 0 : i32
    %c0_i32_0 = arith.constant 0 : i32
    %c0_i32_1 = arith.constant 0 : i32
    return %c0_i32, %c0_i32_0 : i32, i32
  }
  func.func @transform_9(%arg0: i32) -> (i32, i32) {
    %c0_i32 = arith.constant 0 : i32
    %c0_i32_0 = arith.constant 0 : i32
    %c0_i32_1 = arith.constant 0 : i32
    return %c0_i32, %c0_i32_0 : i32, i32
  }
  func.func @transform_10(%arg0: i32) -> (i32, i32) {
    %c0_i32 = arith.constant 0 : i32
    %c0_i32_0 = arith.constant 0 : i32
    %c0_i32_1 = arith.constant 0 : i32
    return %c0_i32, %c0_i32_0 : i32, i32
  }
  func.func @transform_11(%arg0: i32) -> (i32, i32) {
    %c0_i32 = arith.constant 0 : i32
    %c0_i32_0 = arith.constant 0 : i32
    return %c0_i32, %arg0 : i32, i32
  }
}

</mosaic_0001>

<llo_original>
// kernel: neg.2
$region0: #{neg.2}
  #allocation0 [shape = 's32[1]{0}', space=sflag, size = 0x4, scoped, tag = 'scoped memory for neg.2']
  %s0 = inlined_call_operand.vmem [shape: f32[14,80], index: 0, kind: input, shape index: {}]
  %s1 = inlined_call_operand.vmem [shape: f32[14,80], index: 1, kind: output, shape index: {}]
  %v2 = vld [vmem:[%s0] sm:$0xff]
  %3 = xla_tuple %v2
  %4 = xla_tuple %3
  %v5 = vxor.u32 %v2, 2147483648
  %6 = xla_tuple %v5
  %7 = vst [vmem:[%s1] sm:$0xff] %v5
  %s8 = scalar_lea.vmem %s0, 8
  %v9 = vld [vmem:[%s8] sm:$0xff]
  %10 = xla_tuple %v9
  %11 = xla_tuple %10
  %v12 = vxor.u32 %v9, 2147483648
  %13 = xla_tuple %v12
  %s14 = scalar_lea.vmem %s1, 8
  %15 = vst [vmem:[%s14] sm:$0xff] %v12

// kernel: network_forward.1
$region0: #{network_forward.1}
  #allocation0 [shape = 'u32[]', space=smem, size = 0x4, offset = 0x4, fixed_abs, tag = 'smem constant byte address 0x4 - core index']
  #allocation1 [shape = 'u32[144,128]{1,0:T(1,128)}', space=vmem, size = 0x12000, scoped, tag = 'internal scratch']
  %s0 = inlined_call_operand.vmem [shape: f32[14,128], index: 0, kind: input, shape index: {}]
  %s1 = inlined_call_operand.vmem [shape: f32[80,14], index: 1, kind: input, shape index: {}]
  %s2 = inlined_call_operand.vmem [shape: f32[80,14], index: 2, kind: input, shape index: {}]
  %s3 = inlined_call_operand.vmem [shape: f32[80,1], index: 3, kind: input, shape index: {}]
  %s4 = inlined_call_operand.vmem [shape: f32[80,80], index: 4, kind: input, shape index: {}]
  %s5 = inlined_call_operand.vmem [shape: f32[80,1], index: 5, kind: input, shape index: {}]
  %s6 = inlined_call_operand.vmem [shape: f32[40,80], index: 6, kind: input, shape index: {}]
  %s7 = inlined_call_operand.vmem [shape: f32[40,1], index: 7, kind: input, shape index: {}]
  %s8 = inlined_call_operand.vmem [shape: f32[20,40], index: 8, kind: input, shape index: {}]
  %s9 = inlined_call_operand.vmem [shape: f32[20,1], index: 9, kind: input, shape index: {}]
  %s10 = inlined_call_operand.vmem [shape: f32[20,1], index: 10, kind: input, shape index: {}]
  %s11 = inlined_call_operand.vmem [shape: f32[1,128], index: 11, kind: output, shape index: {}]
  %s12 = sld [smem:[#allocation0]]
  $region54: #{network_forward.1} parent=0
    _
  %s14 = ssub.s32 1, %s12
  %s15 = scalar_select 0, %s14, %s12
  // Predicated region
  $region2: #{network_forward.1} parent=0 // pred_check
    _
  $region3: #{network_forward.1} parent=0 // pred_check_branch
    %17 = sbr.rel (0) target = $region5
  $region4: #{network_forward.1} parent=0 // pred_region
    _
  $region5: #{network_forward.1} parent=0 // pred_fallthru
    _
  // Predicated region
  $region6: #{network_forward.1} parent=0 // pred_check
    _
  $region7: #{network_forward.1} parent=0 // pred_check_branch
    %19 = sbr.rel (0) target = $region9
  $region8: #{network_forward.1} parent=0 // pred_region
    _
  $region9: #{network_forward.1} parent=0 // pred_fallthru
    _
  // Predicated region
  $region10: #{network_forward.1} parent=0 // pred_check
    _
  $region11: #{network_forward.1} parent=0 // pred_check_branch
    %21 = sbr.rel (0) target = $region13
  $region12: #{network_forward.1} parent=0 // pred_region
    _
  $region13: #{network_forward.1} parent=0 // pred_fallthru
    _
  // Predicated region
  $region14: #{network_forward.1} parent=0 // pred_check
    _
  $region15: #{network_forward.1} parent=0 // pred_check_branch
    %23 = sbr.rel (0) target = $region17
  $region16: #{network_forward.1} parent=0 // pred_region
    _
  $region17: #{network_forward.1} parent=0 // pred_fallthru
    _
  // Predicated region
  $region18: #{network_forward.1} parent=0 // pred_check
    _
  $region19: #{network_forward.1} parent=0 // pred_check_branch
    %25 = sbr.rel (0) target = $region21
  $region20: #{network_forward.1} parent=0 // pred_region
    _
  $region21: #{network_forward.1} parent=0 // pred_fallthru
    _
  // Predicated region
  $region22: #{network_forward.1} parent=0 // pred_check
    _
  $region23: #{network_forward.1} parent=0 // pred_check_branch
    %27 = sbr.rel (0) target = $region25
  $region24: #{network_forward.1} parent=0 // pred_region
    _
  $region25: #{network_forward.1} parent=0 // pred_fallthru
    _
  // Predicated region
  $region26: #{network_forward.1} parent=0 // pred_check
    _
  $region27: #{network_forward.1} parent=0 // pred_check_branch
    %29 = sbr.rel (0) target = $region29
  $region28: #{network_forward.1} parent=0 // pred_region
    _
  $region29: #{network_forward.1} parent=0 // pred_fallthru
    _
  // Predicated region
  $region30: #{network_forward.1} parent=0 // pred_check
    _
  $region31: #{network_forward.1} parent=0 // pred_check_branch
    %31 = sbr.rel (0) target = $region33
  $region32: #{network_forward.1} parent=0 // pred_region
    _
  $region33: #{network_forward.1} parent=0 // pred_fallthru
    _
  // Predicated region
  $region34: #{network_forward.1} parent=0 // pred_check
    _
  $region35: #{network_forward.1} parent=0 // pred_check_branch
    %33 = sbr.rel (0) target = $region37
  $region36: #{network_forward.1} parent=0 // pred_region
    _
  $region37: #{network_forward.1} parent=0 // pred_fallthru
    _
  // Predicated region
  $region38: #{network_forward.1} parent=0 // pred_check
    _
  $region39: #{network_forward.1} parent=0 // pred_check_branch
    %35 = sbr.rel (0) target = $region41
  $region40: #{network_forward.1} parent=0 // pred_region
    _
  $region41: #{network_forward.1} parent=0 // pred_fallthru
    _
  // Predicated region
  $region42: #{network_forward.1} parent=0 // pred_check
    _
  $region43: #{network_forward.1} parent=0 // pred_check_branch
    %37 = sbr.rel (0) target = $region45
  $region44: #{network_forward.1} parent=0 // pred_region
    _
  $region45: #{network_forward.1} parent=0 // pred_fallthru
    _
  %v38 = vld [vmem:[%s0] sm:$0xff]
  %v39 = vld [vmem:[%s0 + $0x8] sm:$0x3f]
  %v40 = vld [vmem:[%s1] sm:$0xff]
  %v41 = vld [vmem:[%s1 + $0x8] sm:$0xff]
  %v42 = vld [vmem:[%s1 + $0x10] sm:$0xff]
  %v43 = vld [vmem:[%s1 + $0x18] sm:$0xff]
  %v44 = vld [vmem:[%s1 + $0x20] sm:$0xff]
  %v45 = vld [vmem:[%s1 + $0x28] sm:$0xff]
  %v46 = vld [vmem:[%s1 + $0x30] sm:$0xff]
  %v47 = vld [vmem:[%s1 + $0x38] sm:$0xff]
  %v48 = vld [vmem:[%s1 + $0x40] sm:$0xff]
  %v49 = vld [vmem:[%s1 + $0x48] sm:$0xff]
  %vm50 = vcmask 113664
  %v52 = vsel %vm50, %v40, 0
  %v55 = vsel %vm50, %v41, 0
  %v58 = vsel %vm50, %v42, 0
  %v61 = vsel %vm50, %v43, 0
  %v64 = vsel %vm50, %v44, 0
  %v67 = vsel %vm50, %v45, 0
  %v70 = vsel %vm50, %v46, 0
  %v73 = vsel %vm50, %v47, 0
  %v76 = vsel %vm50, %v48, 0
  %v79 = vsel %vm50, %v49, 0
  %vm81 = vcmask 1045504
  %v83 = vsel %vm81, %v39, 0
  %85 = vmatprep.subr.mxu0 0.0
  %v86 = vand.u32 %v38, 4294901760
  %87 = vmatpush1.msra.mxu0 %v86
  %88 = vmatprep.subr.mxu0 0.0
  %v89 = vand.u32 %v83, 4294901760
  %90 = vmatpush1.msra.mxu0 %v89
  %91 = vmatprep.subr.mxu0 0.0
  %92 = vmatpush1.msra.mxu0 0.0
  %93 = vmatprep.subr.mxu0 0.0
  %94 = vmatpush1.msra.mxu0 0.0
  %95 = vmatprep.subr.mxu0 0.0
  %96 = vmatpush1.msra.mxu0 0.0
  %97 = vmatprep.subr.mxu0 0.0
  %98 = vmatpush1.msra.mxu0 0.0
  %99 = vmatprep.subr.mxu0 0.0
  %100 = vmatpush1.msra.mxu0 0.0
  %101 = vmatprep.subr.mxu0 0.0
  %102 = vmatpush1.msra.mxu0 0.0
  %103 = vmatprep.subr.mxu0 0.0
  %104 = vmatpush1.msra.mxu0 0.0
  %105 = vmatprep.subr.mxu0 0.0
  %106 = vmatpush1.msra.mxu0 0.0
  %107 = vmatprep.subr.mxu0 0.0
  %108 = vmatpush1.msra.mxu0 0.0
  %109 = vmatprep.subr.mxu0 0.0
  %110 = vmatpush1.msra.mxu0 0.0
  %111 = vmatprep.subr.mxu0 0.0
  %112 = vmatpush1.msra.mxu0 0.0
  %113 = vmatprep.subr.mxu0 0.0
  %114 = vmatpush1.msra.mxu0 0.0
  %115 = vmatprep.subr.mxu0 0.0
  %116 = vmatpush1.msra.mxu0 0.0
  %117 = vmatprep.subr.mxu0 0.0
  %118 = vmatpush1.msra.mxu0 0.0
  %119 = vmatprep.subr.mxu0 0.0
  %120 = vmatpush1.msra.mxu0 0.0
  %121 = vmatprep.subr.mxu0 0.0
  %122 = vmatpush1.msra.mxu0 0.0
  %123 = vmatprep.subr.mxu0 0.0
  %124 = vmatpush1.msra.mxu0 0.0
  %125 = vmatprep.subr.mxu0 0.0
  %126 = vmatpush1.msra.mxu0 0.0
  %127 = vmatprep.subr.mxu0 0.0
  %128 = vmatpush1.msra.mxu0 0.0
  %129 = vmatprep.subr.mxu0 0.0
  %130 = vmatpush1.msra.mxu0 0.0
  %131 = vmatprep.subr.mxu0 0.0
  %132 = vmatpush1.msra.mxu0 0.0
  %133 = vmatprep.subr.mxu0 0.0
  %134 = vmatpush1.msra.mxu0 0.0
  %135 = vmatprep.subr.mxu0 0.0
  %136 = vmatpush1.msra.mxu0 0.0
  %137 = vmatprep.subr.mxu0 0.0
  %138 = vmatpush1.msra.mxu0 0.0
  %139 = vmatprep.subr.mxu0 0.0
  %140 = vmatpush1.msra.mxu0 0.0
  %141 = vmatprep.subr.mxu0 0.0
  %142 = vmatpush1.msra.mxu0 0.0
  %143 = vmatprep.subr.mxu0 0.0
  %144 = vmatpush1.msra.mxu0 0.0
  %145 = vmatprep.subr.mxu0 0.0
  %146 = vmatpush1.msra.mxu0 0.0
  %147 = vmatprep.subr.mxu0 0.0
  %148 = vmatpush1.msra.mxu0 0.0
  %149 = vmatprep.subr.mxu0 0.0
  %150 = vmatpush1.msra.mxu0 0.0
  %151 = vmatprep.mubr.f32.mxu0 0.0
  %v152 = vand.u32 %v52, 4294901760
  %v153 = vsub.f32 %v52, %v152
  %v154 = vand.u32 %v153, 4294901760
  %v155 = vsub.f32 %v153, %v154
  %v156 = vand.u32 %v155, 4294901760
  %157 = vmatmul.mubr.f32.gmra.mrb[0].mxu0 %v156
  %v158 = vpop.f32.mrb[0].mxu0
  %v159 = vadd.f32 0.0, %v158
  %v160 = vpop.f32.mrb[0].mxu0
  %161 = vmatprep.mubr.f32.mxu0 0.0
  %v162 = vand.u32 %v55, 4294901760
  %v163 = vsub.f32 %v55, %v162
  %v164 = vand.u32 %v163, 4294901760
  %v165 = vsub.f32 %v163, %v164
  %v166 = vand.u32 %v165, 4294901760
  %167 = vmatmul.mubr.f32.gmra.mrb[0].mxu0 %v166
  %v168 = vpop.f32.mrb[0].mxu0
  %v169 = vadd.f32 0.0, %v168
  %v170 = vpop.f32.mrb[0].mxu0
  %171 = vmatprep.mubr.f32.mxu0 0.0
  %v172 = vand.u32 %v58, 4294901760
  %v173 = vsub.f32 %v58, %v172
  %v174 = vand.u32 %v173, 4294901760
  %v175 = vsub.f32 %v173, %v174
  %v176 = vand.u32 %v175, 4294901760
  %177 = vmatmul.mubr.f32.gmra.mrb[0].mxu0 %v176
  %v178 = vpop.f32.mrb[0].mxu0
  %v179 = vadd.f32 0.0, %v178
  %v180 = vpop.f32.mrb[0].mxu0
  %181 = vmatprep.mubr.f32.mxu0 0.0
  %v182 = vand.u32 %v61, 4294901760
  %v183 = vsub.f32 %v61, %v182
  %v184 = vand.u32 %v183, 4294901760
  %v185 = vsub.f32 %v183, %v184
  %v186 = vand.u32 %v185, 4294901760
  %187 = vmatmul.mubr.f32.gmra.mrb[0].mxu0 %v186
  %v188 = vpop.f32.mrb[0].mxu0
  %v189 = vadd.f32 0.0, %v188
  %v190 = vpop.f32.mrb[0].mxu0
  %191 = vmatprep.mubr.f32.mxu0 0.0
  %v192 = vand.u32 %v64, 4294901760
  %v193 = vsub.f32 %v64, %v192
  %v194 = vand.u32 %v193, 4294901760
  %v195 = vsub.f32 %v193, %v194
  %v196 = vand.u32 %v195, 4294901760
  %197 = vmatmul.mubr.f32.gmra.mrb[0].mxu0 %v196
  %v198 = vpop.f32.mrb[0].mxu0
  %v199 = vadd.f32 0.0, %v198
  %v200 = vpop.f32.mrb[0].mxu0
  %201 = vmatprep.mubr.f32.mxu0 0.0
  %v202 = vand.u32 %v67, 4294901760
  %v203 = vsub.f32 %v67, %v202
  %v204 = vand.u32 %v203, 4294901760
  %v205 = vsub.f32 %v203, %v204
  %v206 = vand.u32 %v205, 4294901760
  %207 = vmatmul.mubr.f32.gmra.mrb[0].mxu0 %v206
  %v208 = vpop.f32.mrb[0].mxu0
  %v209 = vadd.f32 0.0, %v208
  %v210 = vpop.f32.mrb[0].mxu0
  %211 = vmatprep.mubr.f32.mxu0 0.0
  %v212 = vand.u32 %v70, 4294901760
  %v213 = vsub.f32 %v70, %v212
  %v214 = vand.u32 %v213, 4294901760
  %v215 = vsub.f32 %v213, %v214
  %v216 = vand.u32 %v215, 4294901760
  %217 = vmatmul.mubr.f32.gmra.mrb[0].mxu0 %v216
  %v218 = vpop.f32.mrb[0].mxu0
  %v219 = vadd.f32 0.0, %v218
  %v220 = vpop.f32.mrb[0].mxu0
  %221 = vmatprep.mubr.f32.mxu0 0.0
  %v222 = vand.u32 %v73, 4294901760
  %v223 = vsub.f32 %v73, %v222
  %v224 = vand.u32 %v223, 4294901760
  %v225 = vsub.f32 %v223, %v224
  %v226 = vand.u32 %v225, 4294901760
  %227 = vmatmul.mubr.f32.gmra.mrb[0].mxu0 %v226
  %v228 = vpop.f32.mrb[0].mxu0
  %v229 = vadd.f32 0.0, %v228
  %v230 = vpop.f32.mrb[0].mxu0
  %231 = vmatprep.mubr.f32.mxu0 0.0
  %v232 = vand.u32 %v76, 4294901760
  %v233 = vsub.f32 %v76, %v232
  %v234 = vand.u32 %v233, 4294901760
  %v235 = vsub.f32 %v233, %v234
  %v236 = vand.u32 %v235, 4294901760
  %237 = vmatmul.mubr.f32.gmra.mrb[0].mxu0 %v236
  %v238 = vpop.f32.mrb[0].mxu0
  %v239 = vadd.f32 0.0, %v238
  %v240 = vpop.f32.mrb[0].mxu0
  %241 = vmatprep.mubr.f32.mxu0 0.0
  %v242 = vand.u32 %v79, 4294901760
  %v243 = vsub.f32 %v79, %v242
  %v244 = vand.u32 %v243, 4294901760
  %v245 = vsub.f32 %v243, %v244
  %v246 = vand.u32 %v245, 4294901760
  %247 = vmatmul.mubr.f32.gmra.mrb[0].mxu0 %v246
  %v248 = vpop.f32.mrb[0].mxu0
  %v249 = vadd.f32 0.0, %v248
  %v250 = vpop.f32.mrb[0].mxu0
  %251 = vdwg.mxu0
  %252 = vmatprep.subr.mxu0 0.0
  %v253 = vand.u32 %v38, 4294901760
  %v254 = vsub.f32 %v38, %v253
  %v255 = vand.u32 %v254, 4294901760
  %v256 = vsub.f32 %v254, %v255
  %v257 = vand.u32 %v256, 4294901760
  %258 = vmatpush1.msra.mxu0 %v257
  %259 = vmatprep.subr.mxu0 0.0
  %v260 = vand.u32 %v83, 4294901760
  %v261 = vsub.f32 %v83, %v260
  %v262 = vand.u32 %v261, 4294901760
  %v263 = vsub.f32 %v261, %v262
  %v264 = vand.u32 %v263, 4294901760
  %265 = vmatpush1.msra.mxu0 %v264
  %266 = vmatprep.subr.mxu0 0.0
  %267 = vmatpush1.msra.mxu0 0.0
  %268 = vmatprep.subr.mxu0 0.0
  %269 = vmatpush1.msra.mxu0 0.0
  %270 = vmatprep.subr.mxu0 0.0
  %271 = vmatpush1.msra.mxu0 0.0
  %272 = vmatprep.subr.mxu0 0.0
  %273 = vmatpush1.msra.mxu0 0.0
  %274 = vmatprep.subr.mxu0 0.0
  %275 = vmatpush1.msra.mxu0 0.0
  %276 = vmatprep.subr.mxu0 0.0
  %277 = vmatpush1.msra.mxu0 0.0
  %278 = vmatprep.subr.mxu0 0.0
  %279 = vmatpush1.msra.mxu0 0.0
  %280 = vmatprep.subr.mxu0 0.0
  %281 = vmatpush1.msra.mxu0 0.0
  %282 = vmatprep.subr.mxu0 0.0
  %283 = vmatpush1.msra.mxu0 0.0
  %284 = vmatprep.subr.mxu0 0.0
  %285 = vmatpush1.msra.mxu0 0.0
  %286 = vmatprep.subr.mxu0 0.0
  %287 = vmatpush1.msra.mxu0 0.0
  %288 = vmatprep.subr.mxu0 0.0
  %289 = vmatpush1.msra.mxu0 0.0
  %290 = vmatprep.subr.mxu0 0.0
  %291 = vmatpush1.msra.mxu0 0.0
  %292 = vmatprep.subr.mxu0 0.0
  %293 = vmatpush1.msra.mxu0 0.0
  %294 = vmatprep.subr.mxu0 0.0
  %295 = vmatpush1.msra.mxu0 0.0
  %296 = vmatprep.subr.mxu0 0.0
  %297 = vmatpush1.msra.mxu0 0.0
  %298 = vmatprep.subr.mxu0 0.0
  %299 = vmatpush1.msra.mxu0 0.0
  %300 = vmatprep.subr.mxu0 0.0
  %301 = vmatpush1.msra.mxu0 0.0
  %302 = vmatprep.subr.mxu0 0.0
  %303 = vmatpush1.msra.mxu0 0.0
  %304 = vmatprep.subr.mxu0 0.0
  %305 = vmatpush1.msra.mxu0 0.0
  %306 = vmatprep.subr.mxu0 0.0
  %307 = vmatpush1.msra.mxu0 0.0
  %308 = vmatprep.subr.mxu0 0.0
  %309 = vmatpush1.msra.mxu0 0.0
  %310 = vmatprep.subr.mxu0 0.0
  %311 = vmatpush1.msra.mxu0 0.0
  %312 = vmatprep.subr.mxu0 0.0
  %313 = vmatpush1.msra.mxu0 0.0
  %314 = vmatprep.subr.mxu0 0.0
  %315 = vmatpush1.msra.mxu0 0.0
  %316 = vmatprep.subr.mxu0 0.0
  %317 = vmatpush1.msra.mxu0 0.0
  %318 = vmatprep.subr.mxu0 0.0
  %319 = vmatpush1.msra.mxu0 0.0
  %320 = vmatprep.subr.mxu0 0.0
  %321 = vmatpush1.msra.mxu0 0.0
  %322 = vmatprep.subr.mxu0 0.0
  %323 = vmatpush1.msra.mxu0 0.0
  %324 = vmatprep.subr.mxu0 0.0
  %325 = vmatpush1.msra.mxu0 0.0
  %326 = vmatprep.mubr.f32.mxu0 0.0
  %v327 = vand.u32 %v52, 4294901760
  %328 = vmatmul.mubr.f32.gmra.mrb[0].mxu0 %v327
  %v329 = vpop.f32.mrb[0].mxu0
  %v330 = vadd.f32 %v159, %v329
  %v331 = vpop.f32.mrb[0].mxu0
  %332 = vmatprep.mubr.f32.mxu0 0.0
  %v333 = vand.u32 %v55, 4294901760
  %334 = vmatmul.mubr.f32.gmra.mrb[0].mxu0 %v333
  %v335 = vpop.f32.mrb[0].mxu0
  %v336 = vadd.f32 %v169, %v335
  %v337 = vpop.f32.mrb[0].mxu0
  %338 = vmatprep.mubr.f32.mxu0 0.0
  %v339 = vand.u32 %v58, 4294901760
  %340 = vmatmul.mubr.f32.gmra.mrb[0].mxu0 %v339
  %v341 = vpop.f32.mrb[0].mxu0
  %v342 = vadd.f32 %v179, %v341
  %v343 = vpop.f32.mrb[0].mxu0
  %344 = vmatprep.mubr.f32.mxu0 0.0
  %v345 = vand.u32 %v61, 4294901760
  %346 = vmatmul.mubr.f32.gmra.mrb[0].mxu0 %v345
  %v347 = vpop.f32.mrb[0].mxu0
  %v348 = vadd.f32 %v189, %v347
  %v349 = vpop.f32.mrb[0].mxu0
  %350 = vmatprep.mubr.f32.mxu0 0.0
  %v351 = vand.u32 %v64, 4294901760
  %352 = vmatmul.mubr.f32.gmra.mrb[0].mxu0 %v351
  %v353 = vpop.f32.mrb[0].mxu0
  %v354 = vadd.f32 %v199, %v353
  %v355 = vpop.f32.mrb[0].mxu0
  %356 = vmatprep.mubr.f32.mxu0 0.0
  %v357 = vand.u32 %v67, 4294901760
  %358 = vmatmul.mubr.f32.gmra.mrb[0].mxu0 %v357
  %v359 = vpop.f32.mrb[0].mxu0
  %v360 = vadd.f32 %v209, %v359
  %v361 = vpop.f32.mrb[0].mxu0
  %362 = vmatprep.mubr.f32.mxu0 0.0
  %v363 = vand.u32 %v70, 4294901760
  %364 = vmatmul.mubr.f32.gmra.mrb[0].mxu0 %v363
  %v365 = vpop.f32.mrb[0].mxu0
  %v366 = vadd.f32 %v219, %v365
  %v367 = vpop.f32.mrb[0].mxu0
  %368 = vmatprep.mubr.f32.mxu0 0.0
  %v369 = vand.u32 %v73, 4294901760
  %370 = vmatmul.mubr.f32.gmra.mrb[0].mxu0 %v369
  %v371 = vpop.f32.mrb[0].mxu0
  %v372 = vadd.f32 %v229, %v371
  %v373 = vpop.f32.mrb[0].mxu0
  %374 = vmatprep.mubr.f32.mxu0 0.0
  %v375 = vand.u32 %v76, 4294901760
  %376 = vmatmul.mubr.f32.gmra.mrb[0].mxu0 %v375
  %v377 = vpop.f32.mrb[0].mxu0
  %v378 = vadd.f32 %v239, %v377
  %v379 = vpop.f32.mrb[0].mxu0
  %380 = vmatprep.mubr.f32.mxu0 0.0
  %v381 = vand.u32 %v79, 4294901760
  %382 = vmatmul.mubr.f32.gmra.mrb[0].mxu0 %v381
  %v383 = vpop.f32.mrb[0].mxu0
  %v384 = vadd.f32 %v249, %v383
  %v385 = vpop.f32.mrb[0].mxu0
  %386 = vdwg.mxu0
  %387 = vmatprep.subr.mxu0 0.0
  %v388 = vand.u32 %v38, 4294901760
  %v389 = vsub.f32 %v38, %v388
  %390 = vmatpush1.msra.mxu0 %v389
  %391 = vmatprep.subr.mxu0 0.0
  %v392 = vand.u32 %v83, 4294901760
  %v393 = vsub.f32 %v83, %v392
  %394 = vmatpush1.msra.mxu0 %v393
  %395 = vmatprep.subr.mxu0 0.0
  %396 = vmatpush1.msra.mxu0 0.0
  %397 = vmatprep.subr.mxu0 0.0
  %398 = vmatpush1.msra.mxu0 0.0
  %399 = vmatprep.subr.mxu0 0.0
  %400 = vmatpush1.msra.mxu0 0.0
  %401 = vmatprep.subr.mxu0 0.0
  %402 = vmatpush1.msra.mxu0 0.0
  %403 = vmatprep.subr.mxu0 0.0
  %404 = vmatpush1.msra.mxu0 0.0
  %405 = vmatprep.subr.mxu0 0.0
  %406 = vmatpush1.msra.mxu0 0.0
  %407 = vmatprep.subr.mxu0 0.0
  %408 = vmatpush1.msra.mxu0 0.0
  %409 = vmatprep.subr.mxu0 0.0
  %410 = vmatpush1.msra.mxu0 0.0
  %411 = vmatprep.subr.mxu0 0.0
  %412 = vmatpush1.msra.mxu0 0.0
  %413 = vmatprep.subr.mxu0 0.0
  %414 = vmatpush1.msra.mxu0 0.0
  %415 = vmatprep.subr.mxu0 0.0
  %416 = vmatpush1.msra.mxu0 0.0
  %417 = vmatprep.subr.mxu0 0.0
  %418 = vmatpush1.msra.mxu0 0.0
  %419 = vmatprep.subr.mxu0 0.0
  %420 = vmatpush1.msra.mxu0 0.0
  %421 = vmatprep.subr.mxu0 0.0
  %422 = vmatpush1.msra.mxu0 0.0
  %423 = vmatprep.subr.mxu0 0.0
  %424 = vmatpush1.msra.mxu0 0.0
  %425 = vmatprep.subr.mxu0 0.0
  %426 = vmatpush1.msra.mxu0 0.0
  %427 = vmatprep.subr.mxu0 0.0
  %428 = vmatpush1.msra.mxu0 0.0
  %429 = vmatprep.subr.mxu0 0.0
  %430 = vmatpush1.msra.mxu0 0.0
  %431 = vmatprep.subr.mxu0 0.0
  %432 = vmatpush1.msra.mxu0 0.0
  %433 = vmatprep.subr.mxu0 0.0
  %434 = vmatpush1.msra.mxu0 0.0
  %435 = vmatprep.subr.mxu0 0.0
  %436 = vmatpush1.msra.mxu0 0.0
  %437 = vmatprep.subr.mxu0 0.0
  %438 = vmatpush1.msra.mxu0 0.0
  %439 = vmatprep.subr.mxu0 0.0
  %440 = vmatpush1.msra.mxu0 0.0
  %441 = vmatprep.subr.mxu0 0.0
  %442 = vmatpush1.msra.mxu0 0.0
  %443 = vmatprep.subr.mxu0 0.0
  %444 = vmatpush1.msra.mxu0 0.0
  %445 = vmatprep.subr.mxu0 0.0
  %446 = vmatpush1.msra.mxu0 0.0
  %447 = vmatprep.subr.mxu0 0.0
  %448 = vmatpush1.msra.mxu0 0.0
  %449 = vmatprep.subr.mxu0 0.0
  %450 = vmatpush1.msra.mxu0 0.0
  %451 = vmatprep.subr.mxu0 0.0
  %452 = vmatpush1.msra.mxu0 0.0
  %453 = vmatprep.subr.mxu0 0.0
  %454 = vmatpush1.msra.mxu0 0.0
  %455 = vmatprep.mubr.f32.mxu0 0.0
  %v456 = vand.u32 %v52, 4294901760
  %v457 = vsub.f32 %v52, %v456
  %458 = vmatmul.mubr.f32.gmra.mrb[0].mxu0 %v457
  %v459 = vpop.f32.mrb[0].mxu0
  %v460 = vadd.f32 %v330, %v459
  %v461 = vpop.f32.mrb[0].mxu0
  %462 = vmatprep.mubr.f32.mxu0 0.0
  %v463 = vand.u32 %v55, 4294901760
  %v464 = vsub.f32 %v55, %v463
  %465 = vmatmul.mubr.f32.gmra.mrb[0].mxu0 %v464
  %v466 = vpop.f32.mrb[0].mxu0
  %v467 = vadd.f32 %v336, %v466
  %v468 = vpop.f32.mrb[0].mxu0
  %469 = vmatprep.mubr.f32.mxu0 0.0
  %v470 = vand.u32 %v58, 4294901760
  %v471 = vsub.f32 %v58, %v470
  %472 = vmatmul.mubr.f32.gmra.mrb[0].mxu0 %v471
  %v473 = vpop.f32.mrb[0].mxu0
  %v474 = vadd.f32 %v342, %v473
  %v475 = vpop.f32.mrb[0].mxu0
  %476 = vmatprep.mubr.f32.mxu0 0.0
  %v477 = vand.u32 %v61, 4294901760
  %v478 = vsub.f32 %v61, %v477
  %479 = vmatmul.mubr.f32.gmra.mrb[0].mxu0 %v478
  %v480 = vpop.f32.mrb[0].mxu0
  %v481 = vadd.f32 %v348, %v480
  %v482 = vpop.f32.mrb[0].mxu0
  %483 = vmatprep.mubr.f32.mxu0 0.0
  %v484 = vand.u32 %v64, 4294901760
  %v485 = vsub.f32 %v64, %v484
  %486 = vmatmul.mubr.f32.gmra.mrb[0].mxu0 %v485
  %v487 = vpop.f32.mrb[0].mxu0
  %v488 = vadd.f32 %v354, %v487
  %v489 = vpop.f32.mrb[0].mxu0
  %490 = vmatprep.mubr.f32.mxu0 0.0
  %v491 = vand.u32 %v67, 4294901760
  %v492 = vsub.f32 %v67, %v491
  %493 = vmatmul.mubr.f32.gmra.mrb[0].mxu0 %v492
  %v494 = vpop.f32.mrb[0].mxu0
  %v495 = vadd.f32 %v360, %v494
  %v496 = vpop.f32.mrb[0].mxu0
  %497 = vmatprep.mubr.f32.mxu0 0.0
  %v498 = vand.u32 %v70, 4294901760
  %v499 = vsub.f32 %v70, %v498
  %500 = vmatmul.mubr.f32.gmra.mrb[0].mxu0 %v499
  %v501 = vpop.f32.mrb[0].mxu0
  %v502 = vadd.f32 %v366, %v501
  %v503 = vpop.f32.mrb[0].mxu0
  %504 = vmatprep.mubr.f32.mxu0 0.0
  %v505 = vand.u32 %v73, 4294901760
  %v506 = vsub.f32 %v73, %v505
  %507 = vmatmul.mubr.f32.gmra.mrb[0].mxu0 %v506
  %v508 = vpop.f32.mrb[0].mxu0
  %v509 = vadd.f32 %v372, %v508
  %v510 = vpop.f32.mrb[0].mxu0
  %511 = vmatprep.mubr.f32.mxu0 0.0
  %v512 = vand.u32 %v76, 4294901760
  %v513 = vsub.f32 %v76, %v512
  %514 = vmatmul.mubr.f32.gmra.mrb[0].mxu0 %v513
  %v515 = vpop.f32.mrb[0].mxu0
  %v516 = vadd.f32 %v378, %v515
  %v517 = vpop.f32.mrb[0].mxu0
  %518 = vmatprep.mubr.f32.mxu0 0.0
  %v519 = vand.u32 %v79, 4294901760
  %v520 = vsub.f32 %v79, %v519
  %521 = vmatmul.mubr.f32.gmra.mrb[0].mxu0 %v520
  %v522 = vpop.f32.mrb[0].mxu0
  %v523 = vadd.f32 %v384, %v522
  %v524 = vpop.f32.mrb[0].mxu0
  %525 = vdwg.mxu0
  %526 = vmatprep.subr.mxu0 0.0
  %v527 = vand.u32 %v38, 4294901760
  %528 = vmatpush1.msra.mxu0 %v527
  %529 = vmatprep.subr.mxu0 0.0
  %v530 = vand.u32 %v83, 4294901760
  %531 = vmatpush1.msra.mxu0 %v530
  %532 = vmatprep.subr.mxu0 0.0
  %533 = vmatpush1.msra.mxu0 0.0
  %534 = vmatprep.subr.mxu0 0.0
  %535 = vmatpush1.msra.mxu0 0.0
  %536 = vmatprep.subr.mxu0 0.0
  %537 = vmatpush1.msra.mxu0 0.0
  %538 = vmatprep.subr.mxu0 0.0
  %539 = vmatpush1.msra.mxu0 0.0
  %540 = vmatprep.subr.mxu0 0.0
  %541 = vmatpush1.msra.mxu0 0.0
  %542 = vmatprep.subr.mxu0 0.0
  %543 = vmatpush1.msra.mxu0 0.0
  %544 = vmatprep.subr.mxu0 0.0
  %545 = vmatpush1.msra.mxu0 0.0
  %546 = vmatprep.subr.mxu0 0.0
  %547 = vmatpush1.msra.mxu0 0.0
  %548 = vmatprep.subr.mxu0 0.0
  %549 = vmatpush1.msra.mxu0 0.0
  %550 = vmatprep.subr.mxu0 0.0
  %551 = vmatpush1.msra.mxu0 0.0
  %552 = vmatprep.subr.mxu0 0.0
  %553 = vmatpush1.msra.mxu0 0.0
  %554 = vmatprep.subr.mxu0 0.0
  %555 = vmatpush1.msra.mxu0 0.0
  %556 = vmatprep.subr.mxu0 0.0
  %557 = vmatpush1.msra.mxu0 0.0
  %558 = vmatprep.subr.mxu0 0.0
  %559 = vmatpush1.msra.mxu0 0.0
  %560 = vmatprep.subr.mxu0 0.0
  %561 = vmatpush1.msra.mxu0 0.0
  %562 = vmatprep.subr.mxu0 0.0
  %563 = vmatpush1.msra.mxu0 0.0
  %564 = vmatprep.subr.mxu0 0.0
  %565 = vmatpush1.msra.mxu0 0.0
  %566 = vmatprep.subr.mxu0 0.0
  %567 = vmatpush1.msra.mxu0 0.0
  %568 = vmatprep.subr.mxu0 0.0
  %569 = vmatpush1.msra.mxu0 0.0
  %570 = vmatprep.subr.mxu0 0.0
  %571 = vmatpush1.msra.mxu0 0.0
  %572 = vmatprep.subr.mxu0 0.0
  %573 = vmatpush1.msra.mxu0 0.0
  %574 = vmatprep.subr.mxu0 0.0
  %575 = vmatpush1.msra.mxu0 0.0
  %576 = vmatprep.subr.mxu0 0.0
  %577 = vmatpush1.msra.mxu0 0.0
  %578 = vmatprep.subr.mxu0 0.0
  %579 = vmatpush1.msra.mxu0 0.0
  %580 = vmatprep.subr.mxu0 0.0
  %581 = vmatpush1.msra.mxu0 0.0
  %582 = vmatprep.subr.mxu0 0.0
  %583 = vmatpush1.msra.mxu0 0.0
  %584 = vmatprep.subr.mxu0 0.0
  %585 = vmatpush1.msra.mxu0 0.0
  %586 = vmatprep.subr.mxu0 0.0
  %587 = vmatpush1.msra.mxu0 0.0
  %588 = vmatprep.subr.mxu0 0.0
  %589 = vmatpush1.msra.mxu0 0.0
  %590 = vmatprep.subr.mxu0 0.0
  %591 = vmatpush1.msra.mxu0 0.0
  %592 = vmatprep.mubr.f32.mxu0 0.0
  %v593 = vand.u32 %v52, 4294901760
  %v594 = vsub.f32 %v52, %v593
  %v595 = vand.u32 %v594, 4294901760
  %596 = vmatmul.mubr.f32.gmra.mrb[0].mxu0 %v595
  %v597 = vpop.f32.mrb[0].mxu0
  %v598 = vadd.f32 %v460, %v597
  %v599 = vpop.f32.mrb[0].mxu0
  %600 = vmatprep.mubr.f32.mxu0 0.0
  %v601 = vand.u32 %v55, 4294901760
  %v602 = vsub.f32 %v55, %v601
  %v603 = vand.u32 %v602, 4294901760
  %604 = vmatmul.mubr.f32.gmra.mrb[0].mxu0 %v603
  %v605 = vpop.f32.mrb[0].mxu0
  %v606 = vadd.f32 %v467, %v605
  %v607 = vpop.f32.mrb[0].mxu0
  %608 = vmatprep.mubr.f32.mxu0 0.0
  %v609 = vand.u32 %v58, 4294901760
  %v610 = vsub.f32 %v58, %v609
  %v611 = vand.u32 %v610, 4294901760
  %612 = vmatmul.mubr.f32.gmra.mrb[0].mxu0 %v611
  %v613 = vpop.f32.mrb[0].mxu0
  %v614 = vadd.f32 %v474, %v613
  %v615 = vpop.f32.mrb[0].mxu0
  %616 = vmatprep.mubr.f32.mxu0 0.0
  %v617 = vand.u32 %v61, 4294901760
  %v618 = vsub.f32 %v61, %v617
  %v619 = vand.u32 %v618, 4294901760
  %620 = vmatmul.mubr.f32.gmra.mrb[0].mxu0 %v619
  %v621 = vpop.f32.mrb[0].mxu0
  %v622 = vadd.f32 %v481, %v621
  %v623 = vpop.f32.mrb[0].mxu0
  %624 = vmatprep.mubr.f32.mxu0 0.0
  %v625 = vand.u32 %v64, 4294901760
  %v626 = vsub.f32 %v64, %v625
  %v627 = vand.u32 %v626, 4294901760
  %628 = vmatmul.mubr.f32.gmra.mrb[0].mxu0 %v627
  %v629 = vpop.f32.mrb[0].mxu0
  %v630 = vadd.f32 %v488, %v629
  %v631 = vpop.f32.mrb[0].mxu0
  %632 = vmatprep.mubr.f32.mxu0 0.0
  %v633 = vand.u32 %v67, 4294901760
  %v634 = vsub.f32 %v67, %v633
  %v635 = vand.u32 %v634, 4294901760
  %636 = vmatmul.mubr.f32.gmra.mrb[0].mxu0 %v635
  %v637 = vpop.f32.mrb[0].mxu0
  %v638 = vadd.f32 %v495, %v637
  %v639 = vpop.f32.mrb[0].mxu0
  %640 = vmatprep.mubr.f32.mxu0 0.0
  %v641 = vand.u32 %v70, 4294901760
  %v642 = vsub.f32 %v70, %v641
  %v643 = vand.u32 %v642, 4294901760
  %644 = vmatmul.mubr.f32.gmra.mrb[0].mxu0 %v643
  %v645 = vpop.f32.mrb[0].mxu0
  %v646 = vadd.f32 %v502, %v645
  %v647 = vpop.f32.mrb[0].mxu0
  %648 = vmatprep.mubr.f32.mxu0 0.0
  %v649 = vand.u32 %v73, 4294901760
  %v650 = vsub.f32 %v73, %v649
  %v651 = vand.u32 %v650, 4294901760
  %652 = vmatmul.mubr.f32.gmra.mrb[0].mxu0 %v651
  %v653 = vpop.f32.mrb[0].mxu0
  %v654 = vadd.f32 %v509, %v653
  %v655 = vpop.f32.mrb[0].mxu0
  %656 = vmatprep.mubr.f32.mxu0 0.0
  %v657 = vand.u32 %v76, 4294901760
  %v658 = vsub.f32 %v76, %v657
  %v659 = vand.u32 %v658, 4294901760
  %660 = vmatmul.mubr.f32.gmra.mrb[0].mxu0 %v659
  %v661 = vpop.f32.mrb[0].mxu0
  %v662 = vadd.f32 %v516, %v661
  %v663 = vpop.f32.mrb[0].mxu0
  %664 = vmatprep.mubr.f32.mxu0 0.0
  %v665 = vand.u32 %v79, 4294901760
  %v666 = vsub.f32 %v79, %v665
  %v667 = vand.u32 %v666, 4294901760
  %668 = vmatmul.mubr.f32.gmra.mrb[0].mxu0 %v667
  %v669 = vpop.f32.mrb[0].mxu0
  %v670 = vadd.f32 %v523, %v669
  %v671 = vpop.f32.mrb[0].mxu0
  %672 = vdwg.mxu0
  %673 = vmatprep.subr.mxu0 0.0
  %v674 = vand.u32 %v38, 4294901760
  %v675 = vsub.f32 %v38, %v674
  %v676 = vand.u32 %v675, 4294901760
  %677 = vmatpush1.msra.mxu0 %v676
  %678 = vmatprep.subr.mxu0 0.0
  %v679 = vand.u32 %v83, 4294901760
  %v680 = vsub.f32 %v83, %v679
  %v681 = vand.u32 %v680, 4294901760
  %682 = vmatpush1.msra.mxu0 %v681
  %683 = vmatprep.subr.mxu0 0.0
  %684 = vmatpush1.msra.mxu0 0.0
  %685 = vmatprep.subr.mxu0 0.0
  %686 = vmatpush1.msra.mxu0 0.0
  %687 = vmatprep.subr.mxu0 0.0
  %688 = vmatpush1.msra.mxu0 0.0
  %689 = vmatprep.subr.mxu0 0.0
  %690 = vmatpush1.msra.mxu0 0.0
  %691 = vmatprep.subr.mxu0 0.0
  %692 = vmatpush1.msra.mxu0 0.0
  %693 = vmatprep.subr.mxu0 0.0
  %694 = vmatpush1.msra.mxu0 0.0
  %695 = vmatprep.subr.mxu0 0.0
  %696 = vmatpush1.msra.mxu0 0.0
  %697 = vmatprep.subr.mxu0 0.0
  %698 = vmatpush1.msra.mxu0 0.0
  %699 = vmatprep.subr.mxu0 0.0
  %700 = vmatpush1.msra.mxu0 0.0
  %701 = vmatprep.subr.mxu0 0.0
  %702 = vmatpush1.msra.mxu0 0.0
  %703 = vmatprep.subr.mxu0 0.0
  %704 = vmatpush1.msra.mxu0 0.0
  %705 = vmatprep.subr.mxu0 0.0
  %706 = vmatpush1.msra.mxu0 0.0
  %707 = vmatprep.subr.mxu0 0.0
  %708 = vmatpush1.msra.mxu0 0.0
  %709 = vmatprep.subr.mxu0 0.0
  %710 = vmatpush1.msra.mxu0 0.0
  %711 = vmatprep.subr.mxu0 0.0
  %712 = vmatpush1.msra.mxu0 0.0
  %713 = vmatprep.subr.mxu0 0.0
  %714 = vmatpush1.msra.mxu0 0.0
  %715 = vmatprep.subr.mxu0 0.0
  %716 = vmatpush1.msra.mxu0 0.0
  %717 = vmatprep.subr.mxu0 0.0
  %718 = vmatpush1.msra.mxu0 0.0
  %719 = vmatprep.subr.mxu0 0.0
  %720 = vmatpush1.msra.mxu0 0.0
  %721 = vmatprep.subr.mxu0 0.0
  %722 = vmatpush1.msra.mxu0 0.0
  %723 = vmatprep.subr.mxu0 0.0
  %724 = vmatpush1.msra.mxu0 0.0
  %725 = vmatprep.subr.mxu0 0.0
  %726 = vmatpush1.msra.mxu0 0.0
  %727 = vmatprep.subr.mxu0 0.0
  %728 = vmatpush1.msra.mxu0 0.0
  %729 = vmatprep.subr.mxu0 0.0
  %730 = vmatpush1.msra.mxu0 0.0
  %731 = vmatprep.subr.mxu0 0.0
  %732 = vmatpush1.msra.mxu0 0.0
  %733 = vmatprep.subr.mxu0 0.0
  %734 = vmatpush1.msra.mxu0 0.0
  %735 = vmatprep.subr.mxu0 0.0
  %736 = vmatpush1.msra.mxu0 0.0
  %737 = vmatprep.subr.mxu0 0.0
  %738 = vmatpush1.msra.mxu0 0.0
  %739 = vmatprep.subr.mxu0 0.0
  %740 = vmatpush1.msra.mxu0 0.0
  %741 = vmatprep.subr.mxu0 0.0
  %742 = vmatpush1.msra.mxu0 0.0
  %743 = vmatprep.mubr.f32.mxu0 0.0
  %v744 = vand.u32 %v52, 4294901760
  %745 = vmatmul.mubr.f32.gmra.mrb[0].mxu0 %v744
  %v746 = vpop.f32.mrb[0].mxu0
  %v747 = vadd.f32 %v598, %v746
  %v748 = vpop.f32.mrb[0].mxu0
  %749 = vmatprep.mubr.f32.mxu0 0.0
  %v750 = vand.u32 %v55, 4294901760
  %751 = vmatmul.mubr.f32.gmra.mrb[0].mxu0 %v750
  %v752 = vpop.f32.mrb[0].mxu0
  %v753 = vadd.f32 %v606, %v752
  %v754 = vpop.f32.mrb[0].mxu0
  %755 = vmatprep.mubr.f32.mxu0 0.0
  %v756 = vand.u32 %v58, 4294901760
  %757 = vmatmul.mubr.f32.gmra.mrb[0].mxu0 %v756
  %v758 = vpop.f32.mrb[0].mxu0
  %v759 = vadd.f32 %v614, %v758
  %v760 = vpop.f32.mrb[0].mxu0
  %761 = vmatprep.mubr.f32.mxu0 0.0
  %v762 = vand.u32 %v61, 4294901760
  %763 = vmatmul.mubr.f32.gmra.mrb[0].mxu0 %v762
  %v764 = vpop.f32.mrb[0].mxu0
  %v765 = vadd.f32 %v622, %v764
  %v766 = vpop.f32.mrb[0].mxu0
  %767 = vmatprep.mubr.f32.mxu0 0.0
  %v768 = vand.u32 %v64, 4294901760
  %769 = vmatmul.mubr.f32.gmra.mrb[0].mxu0 %v768
  %v770 = vpop.f32.mrb[0].mxu0
  %v771 = vadd.f32 %v630, %v770
  %v772 = vpop.f32.mrb[0].mxu0
  %773 = vmatprep.mubr.f32.mxu0 0.0
  %v774 = vand.u32 %v67, 4294901760
  %775 = vmatmul.mubr.f32.gmra.mrb[0].mxu0 %v774
  %v776 = vpop.f32.mrb[0].mxu0
  %v777 = vadd.f32 %v638, %v776
  %v778 = vpop.f32.mrb[0].mxu0
  %779 = vmatprep.mubr.f32.mxu0 0.0
  %v780 = vand.u32 %v70, 4294901760
  %781 = vmatmul.mubr.f32.gmra.mrb[0].mxu0 %v780
  %v782 = vpop.f32.mrb[0].mxu0
  %v783 = vadd.f32 %v646, %v782
  %v784 = vpop.f32.mrb[0].mxu0
  %785 = vmatprep.mubr.f32.mxu0 0.0
  %v786 = vand.u32 %v73, 4294901760
  %787 = vmatmul.mubr.f32.gmra.mrb[0].mxu0 %v786
  %v788 = vpop.f32.mrb[0].mxu0
  %v789 = vadd.f32 %v654, %v788
  %v790 = vpop.f32.mrb[0].mxu0
  %791 = vmatprep.mubr.f32.mxu0 0.0
  %v792 = vand.u32 %v76, 4294901760
  %793 = vmatmul.mubr.f32.gmra.mrb[0].mxu0 %v792
  %v794 = vpop.f32.mrb[0].mxu0
  %v795 = vadd.f32 %v662, %v794
  %v796 = vpop.f32.mrb[0].mxu0
  %797 = vmatprep.mubr.f32.mxu0 0.0
  %v798 = vand.u32 %v79, 4294901760
  %799 = vmatmul.mubr.f32.gmra.mrb[0].mxu0 %v798
  %v800 = vpop.f32.mrb[0].mxu0
  %v801 = vadd.f32 %v670, %v800
  %v802 = vpop.f32.mrb[0].mxu0
  %803 = vdwg.mxu0
  %804 = vmatprep.subr.mxu0 0.0
  %v805 = vand.u32 %v38, 4294901760
  %806 = vmatpush1.msra.mxu0 %v805
  %807 = vmatprep.subr.mxu0 0.0
  %v808 = vand.u32 %v83, 4294901760
  %809 = vmatpush1.msra.mxu0 %v808
  %810 = vmatprep.subr.mxu0 0.0
  %811 = vmatpush1.msra.mxu0 0.0
  %812 = vmatprep.subr.mxu0 0.0
  %813 = vmatpush1.msra.mxu0 0.0
  %814 = vmatprep.subr.mxu0 0.0
  %815 = vmatpush1.msra.mxu0 0.0
  %816 = vmatprep.subr.mxu0 0.0
  %817 = vmatpush1.msra.mxu0 0.0
  %818 = vmatprep.subr.mxu0 0.0
  %819 = vmatpush1.msra.mxu0 0.0
  %820 = vmatprep.subr.mxu0 0.0
  %821 = vmatpush1.msra.mxu0 0.0
  %822 = vmatprep.subr.mxu0 0.0
  %823 = vmatpush1.msra.mxu0 0.0
  %824 = vmatprep.subr.mxu0 0.0
  %825 = vmatpush1.msra.mxu0 0.0
  %826 = vmatprep.subr.mxu0 0.0
  %827 = vmatpush1.msra.mxu0 0.0
  %828 = vmatprep.subr.mxu0 0.0
  %829 = vmatpush1.msra.mxu0 0.0
  %830 = vmatprep.subr.mxu0 0.0
  %831 = vmatpush1.msra.mxu0 0.0
  %832 = vmatprep.subr.mxu0 0.0
  %833 = vmatpush1.msra.mxu0 0.0
  %834 = vmatprep.subr.mxu0 0.0
  %835 = vmatpush1.msra.mxu0 0.0
  %836 = vmatprep.subr.mxu0 0.0
  %837 = vmatpush1.msra.mxu0 0.0
  %838 = vmatprep.subr.mxu0 0.0
  %839 = vmatpush1.msra.mxu0 0.0
  %840 = vmatprep.subr.mxu0 0.0
  %841 = vmatpush1.msra.mxu0 0.0
  %842 = vmatprep.subr.mxu0 0.0
  %843 = vmatpush1.msra.mxu0 0.0
  %844 = vmatprep.subr.mxu0 0.0
  %845 = vmatpush1.msra.mxu0 0.0
  %846 = vmatprep.subr.mxu0 0.0
  %847 = vmatpush1.msra.mxu0 0.0
  %848 = vmatprep.subr.mxu0 0.0
  %849 = vmatpush1.msra.mxu0 0.0
  %850 = vmatprep.subr.mxu0 0.0
  %851 = vmatpush1.msra.mxu0 0.0
  %852 = vmatprep.subr.mxu0 0.0
  %853 = vmatpush1.msra.mxu0 0.0
  %854 = vmatprep.subr.mxu0 0.0
  %855 = vmatpush1.msra.mxu0 0.0
  %856 = vmatprep.subr.mxu0 0.0
  %857 = vmatpush1.msra.mxu0 0.0
  %858 = vmatprep.subr.mxu0 0.0
  %859 = vmatpush1.msra.mxu0 0.0
  %860 = vmatprep.subr.mxu0 0.0
  %861 = vmatpush1.msra.mxu0 0.0
  %862 = vmatprep.subr.mxu0 0.0
  %863 = vmatpush1.msra.mxu0 0.0
  %864 = vmatprep.subr.mxu0 0.0
  %865 = vmatpush1.msra.mxu0 0.0
  %866 = vmatprep.subr.mxu0 0.0
  %867 = vmatpush1.msra.mxu0 0.0
  %868 = vmatprep.subr.mxu0 0.0
  %869 = vmatpush1.msra.mxu0 0.0
  %870 = vmatprep.mubr.f32.mxu0 0.0
  %v871 = vand.u32 %v52, 4294901760
  %872 = vmatmul.mubr.f32.gmra.mrb[0].mxu0 %v871
  %v873 = vpop.f32.mrb[0].mxu0
  %v874 = vadd.f32 %v747, %v873
  %v875 = vpop.f32.mrb[0].mxu0
  %876 = vmatprep.mubr.f32.mxu0 0.0
  %v877 = vand.u32 %v55, 4294901760
  %878 = vmatmul.mubr.f32.gmra.mrb[0].mxu0 %v877
  %v879 = vpop.f32.mrb[0].mxu0
  %v880 = vadd.f32 %v753, %v879
  %v881 = vpop.f32.mrb[0].mxu0
  %882 = vmatprep.mubr.f32.mxu0 0.0
  %v883 = vand.u32 %v58, 4294901760
  %884 = vmatmul.mubr.f32.gmra.mrb[0].mxu0 %v883
  %v885 = vpop.f32.mrb[0].mxu0
  %v886 = vadd.f32 %v759, %v885
  %v887 = vpop.f32.mrb[0].mxu0
  %888 = vmatprep.mubr.f32.mxu0 0.0
  %v889 = vand.u32 %v61, 4294901760
  %890 = vmatmul.mubr.f32.gmra.mrb[0].mxu0 %v889
  %v891 = vpop.f32.mrb[0].mxu0
  %v892 = vadd.f32 %v765, %v891
  %v893 = vpop.f32.mrb[0].mxu0
  %894 = vmatprep.mubr.f32.mxu0 0.0
  %v895 = vand.u32 %v64, 4294901760
  %896 = vmatmul.mubr.f32.gmra.mrb[0].mxu0 %v895
  %v897 = vpop.f32.mrb[0].mxu0
  %v898 = vadd.f32 %v771, %v897
  %v899 = vpop.f32.mrb[0].mxu0
  %900 = vmatprep.mubr.f32.mxu0 0.0
  %v901 = vand.u32 %v67, 4294901760
  %902 = vmatmul.mubr.f32.gmra.mrb[0].mxu0 %v901
  %v903 = vpop.f32.mrb[0].mxu0
  %v904 = vadd.f32 %v777, %v903
  %v905 = vpop.f32.mrb[0].mxu0
  %906 = vmatprep.mubr.f32.mxu0 0.0
  %v907 = vand.u32 %v70, 4294901760
  %908 = vmatmul.mubr.f32.gmra.mrb[0].mxu0 %v907
  %v909 = vpop.f32.mrb[0].mxu0
  %v910 = vadd.f32 %v783, %v909
  %v911 = vpop.f32.mrb[0].mxu0
  %912 = vmatprep.mubr.f32.mxu0 0.0
  %v913 = vand.u32 %v73, 4294901760
  %914 = vmatmul.mubr.f32.gmra.mrb[0].mxu0 %v913
  %v915 = vpop.f32.mrb[0].mxu0
  %v916 = vadd.f32 %v789, %v915
  %v917 = vpop.f32.mrb[0].mxu0
  %918 = vmatprep.mubr.f32.mxu0 0.0
  %v919 = vand.u32 %v76, 4294901760
  %920 = vmatmul.mubr.f32.gmra.mrb[0].mxu0 %v919
  %v921 = vpop.f32.mrb[0].mxu0
  %v922 = vadd.f32 %v795, %v921
  %v923 = vpop.f32.mrb[0].mxu0
  %924 = vmatprep.mubr.f32.mxu0 0.0
  %v925 = vand.u32 %v79, 4294901760
  %926 = vmatmul.mubr.f32.gmra.mrb[0].mxu0 %v925
  %v927 = vpop.f32.mrb[0].mxu0
  %v928 = vadd.f32 %v801, %v927
  %v929 = vpop.f32.mrb[0].mxu0
  %930 = vdwg.mxu0
  %v931 = vld [vmem:[%s2] sm:$0xff]
  %v932 = vld [vmem:[%s2 + $0x8] sm:$0xff]
  %v933 = vld [vmem:[%s2 + $0x10] sm:$0xff]
  %v934 = vld [vmem:[%s2 + $0x18] sm:$0xff]
  %v935 = vld [vmem:[%s2 + $0x20] sm:$0xff]
  %v936 = vld [vmem:[%s2 + $0x28] sm:$0xff]
  %v937 = vld [vmem:[%s2 + $0x30] sm:$0xff]
  %v938 = vld [vmem:[%s2 + $0x38] sm:$0xff]
  %v939 = vld [vmem:[%s2 + $0x40] sm:$0xff]
  %v940 = vld [vmem:[%s2 + $0x48] sm:$0xff]
  %v942 = vsel %vm50, %v931, 0
  %v945 = vsel %vm50, %v932, 0
  %v948 = vsel %vm50, %v933, 0
  %v951 = vsel %vm50, %v934, 0
  %v954 = vsel %vm50, %v935, 0
  %v957 = vsel %vm50, %v936, 0
  %v960 = vsel %vm50, %v937, 0
  %v963 = vsel %vm50, %v938, 0
  %v966 = vsel %vm50, %v939, 0
  %v969 = vsel %vm50, %v940, 0
  %971 = vmatprep.subr.mxu0 0.0
  %v972 = vand.u32 %v38, 4294901760
  %973 = vmatpush1.msra.mxu0 %v972
  %974 = vmatprep.subr.mxu0 0.0
  %v975 = vand.u32 %v83, 4294901760
  %976 = vmatpush1.msra.mxu0 %v975
  %977 = vmatprep.subr.mxu0 0.0
  %978 = vmatpush1.msra.mxu0 0.0
  %979 = vmatprep.subr.mxu0 0.0
  %980 = vmatpush1.msra.mxu0 0.0
  %981 = vmatprep.subr.mxu0 0.0
  %982 = vmatpush1.msra.mxu0 0.0
  %983 = vmatprep.subr.mxu0 0.0
  %984 = vmatpush1.msra.mxu0 0.0
  %985 = vmatprep.subr.mxu0 0.0
  %986 = vmatpush1.msra.mxu0 0.0
  %987 = vmatprep.subr.mxu0 0.0
  %988 = vmatpush1.msra.mxu0 0.0
  %989 = vmatprep.subr.mxu0 0.0
  %990 = vmatpush1.msra.mxu0 0.0
  %991 = vmatprep.subr.mxu0 0.0
  %992 = vmatpush1.msra.mxu0 0.0
  %993 = vmatprep.subr.mxu0 0.0
  %994 = vmatpush1.msra.mxu0 0.0
  %995 = vmatprep.subr.mxu0 0.0
  %996 = vmatpush1.msra.mxu0 0.0
  %997 = vmatprep.subr.mxu0 0.0
  %998 = vmatpush1.msra.mxu0 0.0
  %999 = vmatprep.subr.mxu0 0.0
  %1000 = vmatpush1.msra.mxu0 0.0
  %1001 = vmatprep.subr.mxu0 0.0
  %1002 = vmatpush1.msra.mxu0 0.0
  %1003 = vmatprep.subr.mxu0 0.0
  %1004 = vmatpush1.msra.mxu0 0.0
  %1005 = vmatprep.subr.mxu0 0.0
  %1006 = vmatpush1.msra.mxu0 0.0
  %1007 = vmatprep.subr.mxu0 0.0
  %1008 = vmatpush1.msra.mxu0 0.0
  %1009 = vmatprep.subr.mxu0 0.0
  %1010 = vmatpush1.msra.mxu0 0.0
  %1011 = vmatprep.subr.mxu0 0.0
  %1012 = vmatpush1.msra.mxu0 0.0
  %1013 = vmatprep.subr.mxu0 0.0
  %1014 = vmatpush1.msra.mxu0 0.0
  %1015 = vmatprep.subr.mxu0 0.0
  %1016 = vmatpush1.msra.mxu0 0.0
  %1017 = vmatprep.subr.mxu0 0.0
  %1018 = vmatpush1.msra.mxu0 0.0
  %1019 = vmatprep.subr.mxu0 0.0
  %1020 = vmatpush1.msra.mxu0 0.0
  %1021 = vmatprep.subr.mxu0 0.0
  %1022 = vmatpush1.msra.mxu0 0.0
  %1023 = vmatprep.subr.mxu0 0.0
  %1024 = vmatpush1.msra.mxu0 0.0
  %1025 = vmatprep.subr.mxu0 0.0
  %1026 = vmatpush1.msra.mxu0 0.0
  %1027 = vmatprep.subr.mxu0 0.0
  %1028 = vmatpush1.msra.mxu0 0.0
  %1029 = vmatprep.subr.mxu0 0.0
  %1030 = vmatpush1.msra.mxu0 0.0
  %1031 = vmatprep.subr.mxu0 0.0
  %1032 = vmatpush1.msra.mxu0 0.0
  %1033 = vmatprep.subr.mxu0 0.0
  %1034 = vmatpush1.msra.mxu0 0.0
  %1035 = vmatprep.subr.mxu0 0.0
  %1036 = vmatpush1.msra.mxu0 0.0
  %1037 = vmatprep.mubr.f32.mxu0 0.0
  %v1038 = vand.u32 %v942, 4294901760
  %v1039 = vsub.f32 %v942, %v1038
  %v1040 = vand.u32 %v1039, 4294901760
  %v1041 = vsub.f32 %v1039, %v1040
  %v1042 = vand.u32 %v1041, 4294901760
  %1043 = vmatmul.mubr.f32.gmra.mrb[0].mxu0 %v1042
  %v1044 = vpop.f32.mrb[0].mxu0
  %v1045 = vadd.f32 0.0, %v1044
  %v1046 = vpop.f32.mrb[0].mxu0
  %1047 = vmatprep.mubr.f32.mxu0 0.0
  %v1048 = vand.u32 %v945, 4294901760
  %v1049 = vsub.f32 %v945, %v1048
  %v1050 = vand.u32 %v1049, 4294901760
  %v1051 = vsub.f32 %v1049, %v1050
  %v1052 = vand.u32 %v1051, 4294901760
  %1053 = vmatmul.mubr.f32.gmra.mrb[0].mxu0 %v1052
  %v1054 = vpop.f32.mrb[0].mxu0
  %v1055 = vadd.f32 0.0, %v1054
  %v1056 = vpop.f32.mrb[0].mxu0
  %1057 = vmatprep.mubr.f32.mxu0 0.0
  %v1058 = vand.u32 %v948, 4294901760
  %v1059 = vsub.f32 %v948, %v1058
  %v1060 = vand.u32 %v1059, 4294901760
  %v1061 = vsub.f32 %v1059, %v1060
  %v1062 = vand.u32 %v1061, 4294901760
  %1063 = vmatmul.mubr.f32.gmra.mrb[0].mxu0 %v1062
  %v1064 = vpop.f32.mrb[0].mxu0
  %v1065 = vadd.f32 0.0, %v1064
  %v1066 = vpop.f32.mrb[0].mxu0
  %1067 = vmatprep.mubr.f32.mxu0 0.0
  %v1068 = vand.u32 %v951, 4294901760
  %v1069 = vsub.f32 %v951, %v1068
  %v1070 = vand.u32 %v1069, 4294901760
  %v1071 = vsub.f32 %v1069, %v1070
  %v1072 = vand.u32 %v1071, 4294901760
  %1073 = vmatmul.mubr.f32.gmra.mrb[0].mxu0 %v1072
  %v1074 = vpop.f32.mrb[0].mxu0
  %v1075 = vadd.f32 0.0, %v1074
  %v1076 = vpop.f32.mrb[0].mxu0
  %1077 = vmatprep.mubr.f32.mxu0 0.0
  %v1078 = vand.u32 %v954, 4294901760
  %v1079 = vsub.f32 %v954, %v1078
  %v1080 = vand.u32 %v1079, 4294901760
  %v1081 = vsub.f32 %v1079, %v1080
  %v1082 = vand.u32 %v1081, 4294901760
  %1083 = vmatmul.mubr.f32.gmra.mrb[0].mxu0 %v1082
  %v1084 = vpop.f32.mrb[0].mxu0
  %v1085 = vadd.f32 0.0, %v1084
  %v1086 = vpop.f32.mrb[0].mxu0
  %1087 = vmatprep.mubr.f32.mxu0 0.0
  %v1088 = vand.u32 %v957, 4294901760
  %v1089 = vsub.f32 %v957, %v1088
  %v1090 = vand.u32 %v1089, 4294901760
  %v1091 = vsub.f32 %v1089, %v1090
  %v1092 = vand.u32 %v1091, 4294901760
  %1093 = vmatmul.mubr.f32.gmra.mrb[0].mxu0 %v1092
  %v1094 = vpop.f32.mrb[0].mxu0
  %v1095 = vadd.f32 0.0, %v1094
  %v1096 = vpop.f32.mrb[0].mxu0
  %1097 = vmatprep.mubr.f32.mxu0 0.0
  %v1098 = vand.u32 %v960, 4294901760
  %v1099 = vsub.f32 %v960, %v1098
  %v1100 = vand.u32 %v1099, 4294901760
  %v1101 = vsub.f32 %v1099, %v1100
  %v1102 = vand.u32 %v1101, 4294901760
  %1103 = vmatmul.mubr.f32.gmra.mrb[0].mxu0 %v1102
  %v1104 = vpop.f32.mrb[0].mxu0
  %v1105 = vadd.f32 0.0, %v1104
  %v1106 = vpop.f32.mrb[0].mxu0
  %1107 = vmatprep.mubr.f32.mxu0 0.0
  %v1108 = vand.u32 %v963, 4294901760
  %v1109 = vsub.f32 %v963, %v1108
  %v1110 = vand.u32 %v1109, 4294901760
  %v1111 = vsub.f32 %v1109, %v1110
  %v1112 = vand.u32 %v1111, 4294901760
  %1113 = vmatmul.mubr.f32.gmra.mrb[0].mxu0 %v1112
  %v1114 = vpop.f32.mrb[0].mxu0
  %v1115 = vadd.f32 0.0, %v1114
  %v1116 = vpop.f32.mrb[0].mxu0
  %1117 = vmatprep.mubr.f32.mxu0 0.0
  %v1118 = vand.u32 %v966, 4294901760
  %v1119 = vsub.f32 %v966, %v1118
  %v1120 = vand.u32 %v1119, 4294901760
  %v1121 = vsub.f32 %v1119, %v1120
  %v1122 = vand.u32 %v1121, 4294901760
  %1123 = vmatmul.mubr.f32.gmra.mrb[0].mxu0 %v1122
  %v1124 = vpop.f32.mrb[0].mxu0
  %v1125 = vadd.f32 0.0, %v1124
  %v1126 = vpop.f32.mrb[0].mxu0
  %1127 = vmatprep.mubr.f32.mxu0 0.0
  %v1128 = vand.u32 %v969, 4294901760
  %v1129 = vsub.f32 %v969, %v1128
  %v1130 = vand.u32 %v1129, 4294901760
  %v1131 = vsub.f32 %v1129, %v1130
  %v1132 = vand.u32 %v1131, 4294901760
  %1133 = vmatmul.mubr.f32.gmra.mrb[0].mxu0 %v1132
  %v1134 = vpop.f32.mrb[0].mxu0
  %v1135 = vadd.f32 0.0, %v1134
  %v1136 = vpop.f32.mrb[0].mxu0
  %1137 = vdwg.mxu0
  %1138 = vmatprep.subr.mxu0 0.0
  %v1139 = vand.u32 %v38, 4294901760
  %v1140 = vsub.f32 %v38, %v1139
  %v1141 = vand.u32 %v1140, 4294901760
  %v1142 = vsub.f32 %v1140, %v1141
  %v1143 = vand.u32 %v1142, 4294901760
  %1144 = vmatpush1.msra.mxu0 %v1143
  %1145 = vmatprep.subr.mxu0 0.0
  %v1146 = vand.u32 %v83, 4294901760
  %v1147 = vsub.f32 %v83, %v1146
  %v1148 = vand.u32 %v1147, 4294901760
  %v1149 = vsub.f32 %v1147, %v1148
  %v1150 = vand.u32 %v1149, 4294901760
  %1151 = vmatpush1.msra.mxu0 %v1150
  %1152 = vmatprep.subr.mxu0 0.0
  %1153 = vmatpush1.msra.mxu0 0.0
  %1154 = vmatprep.subr.mxu0 0.0
  %1155 = vmatpush1.msra.mxu0 0.0
  %1156 = vmatprep.subr.mxu0 0.0
  %1157 = vmatpush1.msra.mxu0 0.0
  %1158 = vmatprep.subr.mxu0 0.0
  %1159 = vmatpush1.msra.mxu0 0.0
  %1160 = vmatprep.subr.mxu0 0.0
  %1161 = vmatpush1.msra.mxu0 0.0
  %1162 = vmatprep.subr.mxu0 0.0
  %1163 = vmatpush1.msra.mxu0 0.0
  %1164 = vmatprep.subr.mxu0 0.0
  %1165 = vmatpush1.msra.mxu0 0.0
  %1166 = vmatprep.subr.mxu0 0.0
  %1167 = vmatpush1.msra.mxu0 0.0
  %1168 = vmatprep.subr.mxu0 0.0
  %1169 = vmatpush1.msra.mxu0 0.0
  %1170 = vmatprep.subr.mxu0 0.0
  %1171 = vmatpush1.msra.mxu0 0.0
  %1172 = vmatprep.subr.mxu0 0.0
  %1173 = vmatpush1.msra.mxu0 0.0
  %1174 = vmatprep.subr.mxu0 0.0
  %1175 = vmatpush1.msra.mxu0 0.0
  %1176 = vmatprep.subr.mxu0 0.0
  %1177 = vmatpush1.msra.mxu0 0.0
  %1178 = vmatprep.subr.mxu0 0.0
  %1179 = vmatpush1.msra.mxu0 0.0
  %1180 = vmatprep.subr.mxu0 0.0
  %1181 = vmatpush1.msra.mxu0 0.0
  %1182 = vmatprep.subr.mxu0 0.0
  %1183 = vmatpush1.msra.mxu0 0.0
  %1184 = vmatprep.subr.mxu0 0.0
  %1185 = vmatpush1.msra.mxu0 0.0
  %1186 = vmatprep.subr.mxu0 0.0
  %1187 = vmatpush1.msra.mxu0 0.0
  %1188 = vmatprep.subr.mxu0 0.0
  %1189 = vmatpush1.msra.mxu0 0.0
  %1190 = vmatprep.subr.mxu0 0.0
  %1191 = vmatpush1.msra.mxu0 0.0
  %1192 = vmatprep.subr.mxu0 0.0
  %1193 = vmatpush1.msra.mxu0 0.0
  %1194 = vmatprep.subr.mxu0 0.0
  %1195 = vmatpush1.msra.mxu0 0.0
  %1196 = vmatprep.subr.mxu0 0.0
  %1197 = vmatpush1.msra.mxu0 0.0
  %1198 = vmatprep.subr.mxu0 0.0
  %1199 = vmatpush1.msra.mxu0 0.0
  %1200 = vmatprep.subr.mxu0 0.0
  %1201 = vmatpush1.msra.mxu0 0.0
  %1202 = vmatprep.subr.mxu0 0.0
  %1203 = vmatpush1.msra.mxu0 0.0
  %1204 = vmatprep.subr.mxu0 0.0
  %1205 = vmatpush1.msra.mxu0 0.0
  %1206 = vmatprep.subr.mxu0 0.0
  %1207 = vmatpush1.msra.mxu0 0.0
  %1208 = vmatprep.subr.mxu0 0.0
  %1209 = vmatpush1.msra.mxu0 0.0
  %1210 = vmatprep.subr.mxu0 0.0
  %1211 = vmatpush1.msra.mxu0 0.0
  %1212 = vmatprep.mubr.f32.mxu0 0.0
  %v1213 = vand.u32 %v942, 4294901760
  %1214 = vmatmul.mubr.f32.gmra.mrb[0].mxu0 %v1213
  %v1215 = vpop.f32.mrb[0].mxu0
  %v1216 = vadd.f32 %v1045, %v1215
  %v1217 = vpop.f32.mrb[0].mxu0
  %1218 = vmatprep.mubr.f32.mxu0 0.0
  %v1219 = vand.u32 %v945, 4294901760
  %1220 = vmatmul.mubr.f32.gmra.mrb[0].mxu0 %v1219
  %v1221 = vpop.f32.mrb[0].mxu0
  %v1222 = vadd.f32 %v1055, %v1221
  %v1223 = vpop.f32.mrb[0].mxu0
  %1224 = vmatprep.mubr.f32.mxu0 0.0
  %v1225 = vand.u32 %v948, 4294901760
  %1226 = vmatmul.mubr.f32.gmra.mrb[0].mxu0 %v1225
  %v1227 = vpop.f32.mrb[0].mxu0
  %v1228 = vadd.f32 %v1065, %v1227
  %v1229 = vpop.f32.mrb[0].mxu0
  %1230 = vmatprep.mubr.f32.mxu0 0.0
  %v1231 = vand.u32 %v951, 4294901760
  %1232 = vmatmul.mubr.f32.gmra.mrb[0].mxu0 %v1231
  %v1233 = vpop.f32.mrb[0].mxu0
  %v1234 = vadd.f32 %v1075, %v1233
  %v1235 = vpop.f32.mrb[0].mxu0
  %1236 = vmatprep.mubr.f32.mxu0 0.0
  %v1237 = vand.u32 %v954, 4294901760
  %1238 = vmatmul.mubr.f32.gmra.mrb[0].mxu0 %v1237
  %v1239 = vpop.f32.mrb[0].mxu0
  %v1240 = vadd.f32 %v1085, %v1239
  %v1241 = vpop.f32.mrb[0].mxu0
  %1242 = vmatprep.mubr.f32.mxu0 0.0
  %v1243 = vand.u32 %v957, 4294901760
  %1244 = vmatmul.mubr.f32.gmra.mrb[0].mxu0 %v1243
  %v1245 = vpop.f32.mrb[0].mxu0
  %v1246 = vadd.f32 %v1095, %v1245
  %v1247 = vpop.f32.mrb[0].mxu0
  %1248 = vmatprep.mubr.f32.mxu0 0.0
  %v1249 = vand.u32 %v960, 4294901760
  %1250 = vmatmul.mubr.f32.gmra.mrb[0].mxu0 %v1249
  %v1251 = vpop.f32.mrb[0].mxu0
  %v1252 = vadd.f32 %v1105, %v1251
  %v1253 = vpop.f32.mrb[0].mxu0
  %1254 = vmatprep.mubr.f32.mxu0 0.0
  %v1255 = vand.u32 %v963, 4294901760
  %1256 = vmatmul.mubr.f32.gmra.mrb[0].mxu0 %v1255
  %v1257 = vpop.f32.mrb[0].mxu0
  %v1258 = vadd.f32 %v1115, %v1257
  %v1259 = vpop.f32.mrb[0].mxu0
  %1260 = vmatprep.mubr.f32.mxu0 0.0
  %v1261 = vand.u32 %v966, 4294901760
  %1262 = vmatmul.mubr.f32.gmra.mrb[0].mxu0 %v1261
  %v1263 = vpop.f32.mrb[0].mxu0
  %v1264 = vadd.f32 %v1125, %v1263
  %v1265 = vpop.f32.mrb[0].mxu0
  %1266 = vmatprep.mubr.f32.mxu0 0.0
  %v1267 = vand.u32 %v969, 4294901760
  %1268 = vmatmul.mubr.f32.gmra.mrb[0].mxu0 %v1267
  %v1269 = vpop.f32.mrb[0].mxu0
  %v1270 = vadd.f32 %v1135, %v1269
  %v1271 = vpop.f32.mrb[0].mxu0
  %1272 = vdwg.mxu0
  %1273 = vmatprep.subr.mxu0 0.0
  %v1274 = vand.u32 %v38, 4294901760
  %v1275 = vsub.f32 %v38, %v1274
  %1276 = vmatpush1.msra.mxu0 %v1275
  %1277 = vmatprep.subr.mxu0 0.0
  %v1278 = vand.u32 %v83, 4294901760
  %v1279 = vsub.f32 %v83, %v1278
  %1280 = vmatpush1.msra.mxu0 %v1279
  %1281 = vmatprep.subr.mxu0 0.0
  %1282 = vmatpush1.msra.mxu0 0.0
  %1283 = vmatprep.subr.mxu0 0.0
  %1284 = vmatpush1.msra.mxu0 0.0
  %1285 = vmatprep.subr.mxu0 0.0
  %1286 = vmatpush1.msra.mxu0 0.0
  %1287 = vmatprep.subr.mxu0 0.0
  %1288 = vmatpush1.msra.mxu0 0.0
  %1289 = vmatprep.subr.mxu0 0.0
  %1290 = vmatpush1.msra.mxu0 0.0
  %1291 = vmatprep.subr.mxu0 0.0
  %1292 = vmatpush1.msra.mxu0 0.0
  %1293 = vmatprep.subr.mxu0 0.0
  %1294 = vmatpush1.msra.mxu0 0.0
  %1295 = vmatprep.subr.mxu0 0.0
  %1296 = vmatpush1.msra.mxu0 0.0
  %1297 = vmatprep.subr.mxu0 0.0
  %1298 = vmatpush1.msra.mxu0 0.0
  %1299 = vmatprep.subr.mxu0 0.0
  %1300 = vmatpush1.msra.mxu0 0.0
  %1301 = vmatprep.subr.mxu0 0.0
  %1302 = vmatpush1.msra.mxu0 0.0
  %1303 = vmatprep.subr.mxu0 0.0
  %1304 = vmatpush1.msra.mxu0 0.0
  %1305 = vmatprep.subr.mxu0 0.0
  %1306 = vmatpush1.msra.mxu0 0.0
  %1307 = vmatprep.subr.mxu0 0.0
  %1308 = vmatpush1.msra.mxu0 0.0
  %1309 = vmatprep.subr.mxu0 0.0
  %1310 = vmatpush1.msra.mxu0 0.0
  %1311 = vmatprep.subr.mxu0 0.0
  %1312 = vmatpush1.msra.mxu0 0.0
  %1313 = vmatprep.subr.mxu0 0.0
  %1314 = vmatpush1.msra.mxu0 0.0
  %1315 = vmatprep.subr.mxu0 0.0
  %1316 = vmatpush1.msra.mxu0 0.0
  %1317 = vmatprep.subr.mxu0 0.0
  %1318 = vmatpush1.msra.mxu0 0.0
  %1319 = vmatprep.subr.mxu0 0.0
  %1320 = vmatpush1.msra.mxu0 0.0
  %1321 = vmatprep.subr.mxu0 0.0
  %1322 = vmatpush1.msra.mxu0 0.0
  %1323 = vmatprep.subr.mxu0 0.0
  %1324 = vmatpush1.msra.mxu0 0.0
  %1325 = vmatprep.subr.mxu0 0.0
  %1326 = vmatpush1.msra.mxu0 0.0
  %1327 = vmatprep.subr.mxu0 0.0
  %1328 = vmatpush1.msra.mxu0 0.0
  %1329 = vmatprep.subr.mxu0 0.0
  %1330 = vmatpush1.msra.mxu0 0.0
  %1331 = vmatprep.subr.mxu0 0.0
  %1332 = vmatpush1.msra.mxu0 0.0
  %1333 = vmatprep.subr.mxu0 0.0
  %1334 = vmatpush1.msra.mxu0 0.0
  %1335 = vmatprep.subr.mxu0 0.0
  %1336 = vmatpush1.msra.mxu0 0.0
  %1337 = vmatprep.subr.mxu0 0.0
  %1338 = vmatpush1.msra.mxu0 0.0
  %1339 = vmatprep.subr.mxu0 0.0
  %1340 = vmatpush1.msra.mxu0 0.0
  %1341 = vmatprep.mubr.f32.mxu0 0.0
  %v1342 = vand.u32 %v942, 4294901760
  %v1343 = vsub.f32 %v942, %v1342
  %1344 = vmatmul.mubr.f32.gmra.mrb[0].mxu0 %v1343
  %v1345 = vpop.f32.mrb[0].mxu0
  %v1346 = vadd.f32 %v1216, %v1345
  %v1347 = vpop.f32.mrb[0].mxu0
  %1348 = vmatprep.mubr.f32.mxu0 0.0
  %v1349 = vand.u32 %v945, 4294901760
  %v1350 = vsub.f32 %v945, %v1349
  %1351 = vmatmul.mubr.f32.gmra.mrb[0].mxu0 %v1350
  %v1352 = vpop.f32.mrb[0].mxu0
  %v1353 = vadd.f32 %v1222, %v1352
  %v1354 = vpop.f32.mrb[0].mxu0
  %1355 = vmatprep.mubr.f32.mxu0 0.0
  %v1356 = vand.u32 %v948, 4294901760
  %v1357 = vsub.f32 %v948, %v1356
  %1358 = vmatmul.mubr.f32.gmra.mrb[0].mxu0 %v1357
  %v1359 = vpop.f32.mrb[0].mxu0
  %v1360 = vadd.f32 %v1228, %v1359
  %v1361 = vpop.f32.mrb[0].mxu0
  %1362 = vmatprep.mubr.f32.mxu0 0.0
  %v1363 = vand.u32 %v951, 4294901760
  %v1364 = vsub.f32 %v951, %v1363
  %1365 = vmatmul.mubr.f32.gmra.mrb[0].mxu0 %v1364
  %v1366 = vpop.f32.mrb[0].mxu0
  %v1367 = vadd.f32 %v1234, %v1366
  %v1368 = vpop.f32.mrb[0].mxu0
  %1369 = vmatprep.mubr.f32.mxu0 0.0
  %v1370 = vand.u32 %v954, 4294901760
  %v1371 = vsub.f32 %v954, %v1370
  %1372 = vmatmul.mubr.f32.gmra.mrb[0].mxu0 %v1371
  %v1373 = vpop.f32.mrb[0].mxu0
  %v1374 = vadd.f32 %v1240, %v1373
  %v1375 = vpop.f32.mrb[0].mxu0
  %1376 = vmatprep.mubr.f32.mxu0 0.0
  %v1377 = vand.u32 %v957, 4294901760
  %v1378 = vsub.f32 %v957, %v1377
  %1379 = vmatmul.mubr.f32.gmra.mrb[0].mxu0 %v1378
  %v1380 = vpop.f32.mrb[0].mxu0
  %v1381 = vadd.f32 %v1246, %v1380
  %v1382 = vpop.f32.mrb[0].mxu0
  %1383 = vmatprep.mubr.f32.mxu0 0.0
  %v1384 = vand.u32 %v960, 4294901760
  %v1385 = vsub.f32 %v960, %v1384
  %1386 = vmatmul.mubr.f32.gmra.mrb[0].mxu0 %v1385
  %v1387 = vpop.f32.mrb[0].mxu0
  %v1388 = vadd.f32 %v1252, %v1387
  %v1389 = vpop.f32.mrb[0].mxu0
  %1390 = vmatprep.mubr.f32.mxu0 0.0
  %v1391 = vand.u32 %v963, 4294901760
  %v1392 = vsub.f32 %v963, %v1391
  %1393 = vmatmul.mubr.f32.gmra.mrb[0].mxu0 %v1392
  %v1394 = vpop.f32.mrb[0].mxu0
  %v1395 = vadd.f32 %v1258, %v1394
  %v1396 = vpop.f32.mrb[0].mxu0
  %1397 = vmatprep.mubr.f32.mxu0 0.0
  %v1398 = vand.u32 %v966, 4294901760
  %v1399 = vsub.f32 %v966, %v1398
  %1400 = vmatmul.mubr.f32.gmra.mrb[0].mxu0 %v1399
  %v1401 = vpop.f32.mrb[0].mxu0
  %v1402 = vadd.f32 %v1264, %v1401
  %v1403 = vpop.f32.mrb[0].mxu0
  %1404 = vmatprep.mubr.f32.mxu0 0.0
  %v1405 = vand.u32 %v969, 4294901760
  %v1406 = vsub.f32 %v969, %v1405
  %1407 = vmatmul.mubr.f32.gmra.mrb[0].mxu0 %v1406
  %v1408 = vpop.f32.mrb[0].mxu0
  %v1409 = vadd.f32 %v1270, %v1408
  %v1410 = vpop.f32.mrb[0].mxu0
  %1411 = vdwg.mxu0
  %1412 = vmatprep.subr.mxu0 0.0
  %v1413 = vand.u32 %v38, 4294901760
  %1414 = vmatpush1.msra.mxu0 %v1413
  %1415 = vmatprep.subr.mxu0 0.0
  %v1416 = vand.u32 %v83, 4294901760
  %1417 = vmatpush1.msra.mxu0 %v1416
  %1418 = vmatprep.subr.mxu0 0.0
  %1419 = vmatpush1.msra.mxu0 0.0
  %1420 = vmatprep.subr.mxu0 0.0
  %1421 = vmatpush1.msra.mxu0 0.0
  %1422 = vmatprep.subr.mxu0 0.0
  %1423 = vmatpush1.msra.mxu0 0.0
  %1424 = vmatprep.subr.mxu0 0.0
  %1425 = vmatpush1.msra.mxu0 0.0
  %1426 = vmatprep.subr.mxu0 0.0
  %1427 = vmatpush1.msra.mxu0 0.0
  %1428 = vmatprep.subr.mxu0 0.0
  %1429 = vmatpush1.msra.mxu0 0.0
  %1430 = vmatprep.subr.mxu0 0.0
  %1431 = vmatpush1.msra.mxu0 0.0
  %1432 = vmatprep.subr.mxu0 0.0
  %1433 = vmatpush1.msra.mxu0 0.0
  %1434 = vmatprep.subr.mxu0 0.0
  %1435 = vmatpush1.msra.mxu0 0.0
  %1436 = vmatprep.subr.mxu0 0.0
  %1437 = vmatpush1.msra.mxu0 0.0
  %1438 = vmatprep.subr.mxu0 0.0
  %1439 = vmatpush1.msra.mxu0 0.0
  %1440 = vmatprep.subr.mxu0 0.0
  %1441 = vmatpush1.msra.mxu0 0.0
  %1442 = vmatprep.subr.mxu0 0.0
  %1443 = vmatpush1.msra.mxu0 0.0
  %1444 = vmatprep.subr.mxu0 0.0
  %1445 = vmatpush1.msra.mxu0 0.0
  %1446 = vmatprep.subr.mxu0 0.0
  %1447 = vmatpush1.msra.mxu0 0.0
  %1448 = vmatprep.subr.mxu0 0.0
  %1449 = vmatpush1.msra.mxu0 0.0
  %1450 = vmatprep.subr.mxu0 0.0
  %1451 = vmatpush1.msra.mxu0 0.0
  %1452 = vmatprep.subr.mxu0 0.0
  %1453 = vmatpush1.msra.mxu0 0.0
  %1454 = vmatprep.subr.mxu0 0.0
  %1455 = vmatpush1.msra.mxu0 0.0
  %1456 = vmatprep.subr.mxu0 0.0
  %1457 = vmatpush1.msra.mxu0 0.0
  %1458 = vmatprep.subr.mxu0 0.0
  %1459 = vmatpush1.msra.mxu0 0.0
  %1460 = vmatprep.subr.mxu0 0.0
  %1461 = vmatpush1.msra.mxu0 0.0
  %1462 = vmatprep.subr.mxu0 0.0
  %1463 = vmatpush1.msra.mxu0 0.0
  %1464 = vmatprep.subr.mxu0 0.0
  %1465 = vmatpush1.msra.mxu0 0.0
  %1466 = vmatprep.subr.mxu0 0.0
  %1467 = vmatpush1.msra.mxu0 0.0
  %1468 = vmatprep.subr.mxu0 0.0
  %1469 = vmatpush1.msra.mxu0 0.0
  %1470 = vmatprep.subr.mxu0 0.0
  %1471 = vmatpush1.msra.mxu0 0.0
  %1472 = vmatprep.subr.mxu0 0.0
  %1473 = vmatpush1.msra.mxu0 0.0
  %1474 = vmatprep.subr.mxu0 0.0
  %1475 = vmatpush1.msra.mxu0 0.0
  %1476 = vmatprep.subr.mxu0 0.0
  %1477 = vmatpush1.msra.mxu0 0.0
  %1478 = vmatprep.mubr.f32.mxu0 0.0
  %v1479 = vand.u32 %v942, 4294901760
  %v1480 = vsub.f32 %v942, %v1479
  %v1481 = vand.u32 %v1480, 4294901760
  %1482 = vmatmul.mubr.f32.gmra.mrb[0].mxu0 %v1481
  %v1483 = vpop.f32.mrb[0].mxu0
  %v1484 = vadd.f32 %v1346, %v1483
  %v1485 = vpop.f32.mrb[0].mxu0
  %1486 = vmatprep.mubr.f32.mxu0 0.0
  %v1487 = vand.u32 %v945, 4294901760
  %v1488 = vsub.f32 %v945, %v1487
  %v1489 = vand.u32 %v1488, 4294901760
  %1490 = vmatmul.mubr.f32.gmra.mrb[0].mxu0 %v1489
  %v1491 = vpop.f32.mrb[0].mxu0
  %v1492 = vadd.f32 %v1353, %v1491
  %v1493 = vpop.f32.mrb[0].mxu0
  %1494 = vmatprep.mubr.f32.mxu0 0.0
  %v1495 = vand.u32 %v948, 4294901760
  %v1496 = vsub.f32 %v948, %v1495
  %v1497 = vand.u32 %v1496, 4294901760
  %1498 = vmatmul.mubr.f32.gmra.mrb[0].mxu0 %v1497
  %v1499 = vpop.f32.mrb[0].mxu0
  %v1500 = vadd.f32 %v1360, %v1499
  %v1501 = vpop.f32.mrb[0].mxu0
  %1502 = vmatprep.mubr.f32.mxu0 0.0
  %v1503 = vand.u32 %v951, 4294901760
  %v1504 = vsub.f32 %v951, %v1503
  %v1505 = vand.u32 %v1504, 4294901760
  %1506 = vmatmul.mubr.f32.gmra.mrb[0].mxu0 %v1505
  %v1507 = vpop.f32.mrb[0].mxu0
  %v1508 = vadd.f32 %v1367, %v1507
  %v1509 = vpop.f32.mrb[0].mxu0
  %1510 = vmatprep.mubr.f32.mxu0 0.0
  %v1511 = vand.u32 %v954, 4294901760
  %v1512 = vsub.f32 %v954, %v1511
  %v1513 = vand.u32 %v1512, 4294901760
  %1514 = vmatmul.mubr.f32.gmra.mrb[0].mxu0 %v1513
  %v1515 = vpop.f32.mrb[0].mxu0
  %v1516 = vadd.f32 %v1374, %v1515
  %v1517 = vpop.f32.mrb[0].mxu0
  %1518 = vmatprep.mubr.f32.mxu0 0.0
  %v1519 = vand.u32 %v957, 4294901760
  %v1520 = vsub.f32 %v957, %v1519
  %v1521 = vand.u32 %v1520, 4294901760
  %1522 = vmatmul.mubr.f32.gmra.mrb[0].mxu0 %v1521
  %v1523 = vpop.f32.mrb[0].mxu0
  %v1524 = vadd.f32 %v1381, %v1523
  %v1525 = vpop.f32.mrb[0].mxu0
  %1526 = vmatprep.mubr.f32.mxu0 0.0
  %v1527 = vand.u32 %v960, 4294901760
  %v1528 = vsub.f32 %v960, %v1527
  %v1529 = vand.u32 %v1528, 4294901760
  %1530 = vmatmul.mubr.f32.gmra.mrb[0].mxu0 %v1529
  %v1531 = vpop.f32.mrb[0].mxu0
  %v1532 = vadd.f32 %v1388, %v1531
  %v1533 = vpop.f32.mrb[0].mxu0
  %1534 = vmatprep.mubr.f32.mxu0 0.0
  %v1535 = vand.u32 %v963, 4294901760
  %v1536 = vsub.f32 %v963, %v1535
  %v1537 = vand.u32 %v1536, 4294901760
  %1538 = vmatmul.mubr.f32.gmra.mrb[0].mxu0 %v1537
  %v1539 = vpop.f32.mrb[0].mxu0
  %v1540 = vadd.f32 %v1395, %v1539
  %v1541 = vpop.f32.mrb[0].mxu0
  %1542 = vmatprep.mubr.f32.mxu0 0.0
  %v1543 = vand.u32 %v966, 4294901760
  %v1544 = vsub.f32 %v966, %v1543
  %v1545 = vand.u32 %v1544, 4294901760
  %1546 = vmatmul.mubr.f32.gmra.mrb[0].mxu0 %v1545
  %v1547 = vpop.f32.mrb[0].mxu0
  %v1548 = vadd.f32 %v1402, %v1547
  %v1549 = vpop.f32.mrb[0].mxu0
  %1550 = vmatprep.mubr.f32.mxu0 0.0
  %v1551 = vand.u32 %v969, 4294901760
  %v1552 = vsub.f32 %v969, %v1551
  %v1553 = vand.u32 %v1552, 4294901760
  %1554 = vmatmul.mubr.f32.gmra.mrb[0].mxu0 %v1553
  %v1555 = vpop.f32.mrb[0].mxu0
  %v1556 = vadd.f32 %v1409, %v1555
  %v1557 = vpop.f32.mrb[0].mxu0
  %1558 = vdwg.mxu0
  %1559 = vmatprep.subr.mxu0 0.0
  %v1560 = vand.u32 %v38, 4294901760
  %v1561 = vsub.f32 %v38, %v1560
  %v1562 = vand.u32 %v1561, 4294901760
  %1563 = vmatpush1.msra.mxu0 %v1562
  %1564 = vmatprep.subr.mxu0 0.0
  %v1565 = vand.u32 %v83, 4294901760
  %v1566 = vsub.f32 %v83, %v1565
  %v1567 = vand.u32 %v1566, 4294901760
  %1568 = vmatpush1.msra.mxu0 %v1567
  %1569 = vmatprep.subr.mxu0 0.0
  %1570 = vmatpush1.msra.mxu0 0.0
  %1571 = vmatprep.subr.mxu0 0.0
  %1572 = vmatpush1.msra.mxu0 0.0
  %1573 = vmatprep.subr.mxu0 0.0
  %1574 = vmatpush1.msra.mxu0 0.0
  %1575 = vmatprep.subr.mxu0 0.0
  %1576 = vmatpush1.msra.mxu0 0.0
  %1577 = vmatprep.subr.mxu0 0.0
  %1578 = vmatpush1.msra.mxu0 0.0
  %1579 = vmatprep.subr.mxu0 0.0
  %1580 = vmatpush1.msra.mxu0 0.0
  %1581 = vmatprep.subr.mxu0 0.0
  %1582 = vmatpush1.msra.mxu0 0.0
  %1583 = vmatprep.subr.mxu0 0.0
  %1584 = vmatpush1.msra.mxu0 0.0
  %1585 = vmatprep.subr.mxu0 0.0
  %1586 = vmatpush1.msra.mxu0 0.0
  %1587 = vmatprep.subr.mxu0 0.0
  %1588 = vmatpush1.msra.mxu0 0.0
  %1589 = vmatprep.subr.mxu0 0.0
  %1590 = vmatpush1.msra.mxu0 0.0
  %1591 = vmatprep.subr.mxu0 0.0
  %1592 = vmatpush1.msra.mxu0 0.0
  %1593 = vmatprep.subr.mxu0 0.0
  %1594 = vmatpush1.msra.mxu0 0.0
  %1595 = vmatprep.subr.mxu0 0.0
  %1596 = vmatpush1.msra.mxu0 0.0
  %1597 = vmatprep.subr.mxu0 0.0
  %1598 = vmatpush1.msra.mxu0 0.0
  %1599 = vmatprep.subr.mxu0 0.0
  %1600 = vmatpush1.msra.mxu0 0.0
  %1601 = vmatprep.subr.mxu0 0.0
  %1602 = vmatpush1.msra.mxu0 0.0
  %1603 = vmatprep.subr.mxu0 0.0
  %1604 = vmatpush1.msra.mxu0 0.0
  %1605 = vmatprep.subr.mxu0 0.0
  %1606 = vmatpush1.msra.mxu0 0.0
  %1607 = vmatprep.subr.mxu0 0.0
  %1608 = vmatpush1.msra.mxu0 0.0
  %1609 = vmatprep.subr.mxu0 0.0
  %1610 = vmatpush1.msra.mxu0 0.0
  %1611 = vmatprep.subr.mxu0 0.0
  %1612 = vmatpush1.msra.mxu0 0.0
  %1613 = vmatprep.subr.mxu0 0.0
  %1614 = vmatpush1.msra.mxu0 0.0
  %1615 = vmatprep.subr.mxu0 0.0
  %1616 = vmatpush1.msra.mxu0 0.0
  %1617 = vmatprep.subr.mxu0 0.0
  %1618 = vmatpush1.msra.mxu0 0.0
  %1619 = vmatprep.subr.mxu0 0.0
  %1620 = vmatpush1.msra.mxu0 0.0
  %1621 = vmatprep.subr.mxu0 0.0
  %1622 = vmatpush1.msra.mxu0 0.0
  %1623 = vmatprep.subr.mxu0 0.0
  %1624 = vmatpush1.msra.mxu0 0.0
  %1625 = vmatprep.subr.mxu0 0.0
  %1626 = vmatpush1.msra.mxu0 0.0
  %1627 = vmatprep.subr.mxu0 0.0
  %1628 = vmatpush1.msra.mxu0 0.0
  %1629 = vmatprep.mubr.f32.mxu0 0.0
  %v1630 = vand.u32 %v942, 4294901760
  %1631 = vmatmul.mubr.f32.gmra.mrb[0].mxu0 %v1630
  %v1632 = vpop.f32.mrb[0].mxu0
  %v1633 = vadd.f32 %v1484, %v1632
  %v1634 = vpop.f32.mrb[0].mxu0
  %1635 = vmatprep.mubr.f32.mxu0 0.0
  %v1636 = vand.u32 %v945, 4294901760
  %1637 = vmatmul.mubr.f32.gmra.mrb[0].mxu0 %v1636
  %v1638 = vpop.f32.mrb[0].mxu0
  %v1639 = vadd.f32 %v1492, %v1638
  %v1640 = vpop.f32.mrb[0].mxu0
  %1641 = vmatprep.mubr.f32.mxu0 0.0
  %v1642 = vand.u32 %v948, 4294901760
  %1643 = vmatmul.mubr.f32.gmra.mrb[0].mxu0 %v1642
  %v1644 = vpop.f32.mrb[0].mxu0
  %v1645 = vadd.f32 %v1500, %v1644
  %v1646 = vpop.f32.mrb[0].mxu0
  %1647 = vmatprep.mubr.f32.mxu0 0.0
  %v1648 = vand.u32 %v951, 4294901760
  %1649 = vmatmul.mubr.f32.gmra.mrb[0].mxu0 %v1648
  %v1650 = vpop.f32.mrb[0].mxu0
  %v1651 = vadd.f32 %v1508, %v1650
  %v1652 = vpop.f32.mrb[0].mxu0
  %1653 = vmatprep.mubr.f32.mxu0 0.0
  %v1654 = vand.u32 %v954, 4294901760
  %1655 = vmatmul.mubr.f32.gmra.mrb[0].mxu0 %v1654
  %v1656 = vpop.f32.mrb[0].mxu0
  %v1657 = vadd.f32 %v1516, %v1656
  %v1658 = vpop.f32.mrb[0].mxu0
  %1659 = vmatprep.mubr.f32.mxu0 0.0
  %v1660 = vand.u32 %v957, 4294901760
  %1661 = vmatmul.mubr.f32.gmra.mrb[0].mxu0 %v1660
  %v1662 = vpop.f32.mrb[0].mxu0
  %v1663 = vadd.f32 %v1524, %v1662
  %v1664 = vpop.f32.mrb[0].mxu0
  %1665 = vmatprep.mubr.f32.mxu0 0.0
  %v1666 = vand.u32 %v960, 4294901760
  %1667 = vmatmul.mubr.f32.gmra.mrb[0].mxu0 %v1666
  %v1668 = vpop.f32.mrb[0].mxu0
  %v1669 = vadd.f32 %v1532, %v1668
  %v1670 = vpop.f32.mrb[0].mxu0
  %1671 = vmatprep.mubr.f32.mxu0 0.0
  %v1672 = vand.u32 %v963, 4294901760
  %1673 = vmatmul.mubr.f32.gmra.mrb[0].mxu0 %v1672
  %v1674 = vpop.f32.mrb[0].mxu0
  %v1675 = vadd.f32 %v1540, %v1674
  %v1676 = vpop.f32.mrb[0].mxu0
  %1677 = vmatprep.mubr.f32.mxu0 0.0
  %v1678 = vand.u32 %v966, 4294901760
  %1679 = vmatmul.mubr.f32.gmra.mrb[0].mxu0 %v1678
  %v1680 = vpop.f32.mrb[0].mxu0
  %v1681 = vadd.f32 %v1548, %v1680
  %v1682 = vpop.f32.mrb[0].mxu0
  %1683 = vmatprep.mubr.f32.mxu0 0.0
  %v1684 = vand.u32 %v969, 4294901760
  %1685 = vmatmul.mubr.f32.gmra.mrb[0].mxu0 %v1684
  %v1686 = vpop.f32.mrb[0].mxu0
  %v1687 = vadd.f32 %v1556, %v1686
  %v1688 = vpop.f32.mrb[0].mxu0
  %1689 = vdwg.mxu0
  %1690 = vmatprep.subr.mxu0 0.0
  %v1691 = vand.u32 %v38, 4294901760
  %1692 = vmatpush1.msra.mxu0 %v1691
  %1693 = vmatprep.subr.mxu0 0.0
  %v1694 = vand.u32 %v83, 4294901760
  %1695 = vmatpush1.msra.mxu0 %v1694
  %1696 = vmatprep.subr.mxu0 0.0
  %1697 = vmatpush1.msra.mxu0 0.0
  %1698 = vmatprep.subr.mxu0 0.0
  %1699 = vmatpush1.msra.mxu0 0.0
  %1700 = vmatprep.subr.mxu0 0.0
  %1701 = vmatpush1.msra.mxu0 0.0
  %1702 = vmatprep.subr.mxu0 0.0
  %1703 = vmatpush1.msra.mxu0 0.0
  %1704 = vmatprep.subr.mxu0 0.0
  %1705 = vmatpush1.msra.mxu0 0.0
  %1706 = vmatprep.subr.mxu0 0.0
  %1707 = vmatpush1.msra.mxu0 0.0
  %1708 = vmatprep.subr.mxu0 0.0
  %1709 = vmatpush1.msra.mxu0 0.0
  %1710 = vmatprep.subr.mxu0 0.0
  %1711 = vmatpush1.msra.mxu0 0.0
  %1712 = vmatprep.subr.mxu0 0.0
  %1713 = vmatpush1.msra.mxu0 0.0
  %1714 = vmatprep.subr.mxu0 0.0
  %1715 = vmatpush1.msra.mxu0 0.0
  %1716 = vmatprep.subr.mxu0 0.0
  %1717 = vmatpush1.msra.mxu0 0.0
  %1718 = vmatprep.subr.mxu0 0.0
  %1719 = vmatpush1.msra.mxu0 0.0
  %1720 = vmatprep.subr.mxu0 0.0
  %1721 = vmatpush1.msra.mxu0 0.0
  %1722 = vmatprep.subr.mxu0 0.0
  %1723 = vmatpush1.msra.mxu0 0.0
  %1724 = vmatprep.subr.mxu0 0.0
  %1725 = vmatpush1.msra.mxu0 0.0
  %1726 = vmatprep.subr.mxu0 0.0
  %1727 = vmatpush1.msra.mxu0 0.0
  %1728 = vmatprep.subr.mxu0 0.0
  %1729 = vmatpush1.msra.mxu0 0.0
  %1730 = vmatprep.subr.mxu0 0.0
  %1731 = vmatpush1.msra.mxu0 0.0
  %1732 = vmatprep.subr.mxu0 0.0
  %1733 = vmatpush1.msra.mxu0 0.0
  %1734 = vmatprep.subr.mxu0 0.0
  %1735 = vmatpush1.msra.mxu0 0.0
  %1736 = vmatprep.subr.mxu0 0.0
  %1737 = vmatpush1.msra.mxu0 0.0
  %1738 = vmatprep.subr.mxu0 0.0
  %1739 = vmatpush1.msra.mxu0 0.0
  %1740 = vmatprep.subr.mxu0 0.0
  %1741 = vmatpush1.msra.mxu0 0.0
  %1742 = vmatprep.subr.mxu0 0.0
  %1743 = vmatpush1.msra.mxu0 0.0
  %1744 = vmatprep.subr.mxu0 0.0
  %1745 = vmatpush1.msra.mxu0 0.0
  %1746 = vmatprep.subr.mxu0 0.0
  %1747 = vmatpush1.msra.mxu0 0.0
  %1748 = vmatprep.subr.mxu0 0.0
  %1749 = vmatpush1.msra.mxu0 0.0
  %1750 = vmatprep.subr.mxu0 0.0
  %1751 = vmatpush1.msra.mxu0 0.0
  %1752 = vmatprep.subr.mxu0 0.0
  %1753 = vmatpush1.msra.mxu0 0.0
  %1754 = vmatprep.subr.mxu0 0.0
  %1755 = vmatpush1.msra.mxu0 0.0
  %1756 = vmatprep.mubr.f32.mxu0 0.0
  %v1757 = vand.u32 %v942, 4294901760
  %1758 = vmatmul.mubr.f32.gmra.mrb[0].mxu0 %v1757
  %v1759 = vpop.f32.mrb[0].mxu0
  %v1760 = vadd.f32 %v1633, %v1759
  %v1761 = vpop.f32.mrb[0].mxu0
  %1762 = vmatprep.mubr.f32.mxu0 0.0
  %v1763 = vand.u32 %v945, 4294901760
  %1764 = vmatmul.mubr.f32.gmra.mrb[0].mxu0 %v1763
  %v1765 = vpop.f32.mrb[0].mxu0
  %v1766 = vadd.f32 %v1639, %v1765
  %v1767 = vpop.f32.mrb[0].mxu0
  %1768 = vmatprep.mubr.f32.mxu0 0.0
  %v1769 = vand.u32 %v948, 4294901760
  %1770 = vmatmul.mubr.f32.gmra.mrb[0].mxu0 %v1769
  %v1771 = vpop.f32.mrb[0].mxu0
  %v1772 = vadd.f32 %v1645, %v1771
  %v1773 = vpop.f32.mrb[0].mxu0
  %1774 = vmatprep.mubr.f32.mxu0 0.0
  %v1775 = vand.u32 %v951, 4294901760
  %1776 = vmatmul.mubr.f32.gmra.mrb[0].mxu0 %v1775
  %v1777 = vpop.f32.mrb[0].mxu0
  %v1778 = vadd.f32 %v1651, %v1777
  %v1779 = vpop.f32.mrb[0].mxu0
  %1780 = vmatprep.mubr.f32.mxu0 0.0
  %v1781 = vand.u32 %v954, 4294901760
  %1782 = vmatmul.mubr.f32.gmra.mrb[0].mxu0 %v1781
  %v1783 = vpop.f32.mrb[0].mxu0
  %v1784 = vadd.f32 %v1657, %v1783
  %v1785 = vpop.f32.mrb[0].mxu0
  %1786 = vmatprep.mubr.f32.mxu0 0.0
  %v1787 = vand.u32 %v957, 4294901760
  %1788 = vmatmul.mubr.f32.gmra.mrb[0].mxu0 %v1787
  %v1789 = vpop.f32.mrb[0].mxu0
  %v1790 = vadd.f32 %v1663, %v1789
  %v1791 = vpop.f32.mrb[0].mxu0
  %1792 = vmatprep.mubr.f32.mxu0 0.0
  %v1793 = vand.u32 %v960, 4294901760
  %1794 = vmatmul.mubr.f32.gmra.mrb[0].mxu0 %v1793
  %v1795 = vpop.f32.mrb[0].mxu0
  %v1796 = vadd.f32 %v1669, %v1795
  %v1797 = vpop.f32.mrb[0].mxu0
  %1798 = vmatprep.mubr.f32.mxu0 0.0
  %v1799 = vand.u32 %v963, 4294901760
  %1800 = vmatmul.mubr.f32.gmra.mrb[0].mxu0 %v1799
  %v1801 = vpop.f32.mrb[0].mxu0
  %v1802 = vadd.f32 %v1675, %v1801
  %v1803 = vpop.f32.mrb[0].mxu0
  %1804 = vmatprep.mubr.f32.mxu0 0.0
  %v1805 = vand.u32 %v966, 4294901760
  %1806 = vmatmul.mubr.f32.gmra.mrb[0].mxu0 %v1805
  %v1807 = vpop.f32.mrb[0].mxu0
  %v1808 = vadd.f32 %v1681, %v1807
  %v1809 = vpop.f32.mrb[0].mxu0
  %1810 = vmatprep.mubr.f32.mxu0 0.0
  %v1811 = vand.u32 %v969, 4294901760
  %1812 = vmatmul.mubr.f32.gmra.mrb[0].mxu0 %v1811
  %v1813 = vpop.f32.mrb[0].mxu0
  %v1814 = vadd.f32 %v1687, %v1813
  %v1815 = vpop.f32.mrb[0].mxu0
  %1816 = vdwg.mxu0
  %v1817 = vld [vmem:[%s3] sm:$0xff]
  %v1818 = vld [vmem:[%s3 + $0x8] sm:$0xff]
  %v1819 = vld [vmem:[%s3 + $0x10] sm:$0xff]
  %v1820 = vld [vmem:[%s3 + $0x18] sm:$0xff]
  %v1821 = vld [vmem:[%s3 + $0x20] sm:$0xff]
  %v1822 = vld [vmem:[%s3 + $0x28] sm:$0xff]
  %v1823 = vld [vmem:[%s3 + $0x30] sm:$0xff]
  %v1824 = vld [vmem:[%s3 + $0x38] sm:$0xff]
  %v1825 = vld [vmem:[%s3 + $0x40] sm:$0xff]
  %v1826 = vld [vmem:[%s3 + $0x48] sm:$0xff]
  %1828 = vset.pattern.permute.xlu0 0
  %1829 = vperm.xlu0 %1828, %v1817
  %v1830 = vpop.permute.xlu0 %1829
  %1833 = vset.pattern.permute.xlu0 0
  %1834 = vperm.xlu0 %1833, %v1818
  %v1835 = vpop.permute.xlu0 %1834
  %1838 = vset.pattern.permute.xlu0 0
  %1839 = vperm.xlu0 %1838, %v1819
  %v1840 = vpop.permute.xlu0 %1839
  %1843 = vset.pattern.permute.xlu0 0
  %1844 = vperm.xlu0 %1843, %v1820
  %v1845 = vpop.permute.xlu0 %1844
  %1848 = vset.pattern.permute.xlu0 0
  %1849 = vperm.xlu0 %1848, %v1821
  %v1850 = vpop.permute.xlu0 %1849
  %1853 = vset.pattern.permute.xlu0 0
  %1854 = vperm.xlu0 %1853, %v1822
  %v1855 = vpop.permute.xlu0 %1854
  %1858 = vset.pattern.permute.xlu0 0
  %1859 = vperm.xlu0 %1858, %v1823
  %v1860 = vpop.permute.xlu0 %1859
  %1863 = vset.pattern.permute.xlu0 0
  %1864 = vperm.xlu0 %1863, %v1824
  %v1865 = vpop.permute.xlu0 %1864
  %1868 = vset.pattern.permute.xlu0 0
  %1869 = vperm.xlu0 %1868, %v1825
  %v1870 = vpop.permute.xlu0 %1869
  %1873 = vset.pattern.permute.xlu0 0
  %1874 = vperm.xlu0 %1873, %v1826
  %v1875 = vpop.permute.xlu0 %1874
  %v1877 = vadd.f32 %v874, %v1830
  %v1878 = vadd.f32 %v1760, %v1830
  %v1879 = vadd.f32 %v880, %v1835
  %v1880 = vadd.f32 %v1766, %v1835
  %v1881 = vadd.f32 %v886, %v1840
  %v1882 = vadd.f32 %v1772, %v1840
  %v1883 = vadd.f32 %v892, %v1845
  %v1884 = vadd.f32 %v1778, %v1845
  %v1885 = vadd.f32 %v898, %v1850
  %v1886 = vadd.f32 %v1784, %v1850
  %v1887 = vadd.f32 %v904, %v1855
  %v1888 = vadd.f32 %v1790, %v1855
  %v1889 = vadd.f32 %v910, %v1860
  %v1890 = vadd.f32 %v1796, %v1860
  %v1891 = vadd.f32 %v916, %v1865
  %v1892 = vadd.f32 %v1802, %v1865
  %v1893 = vadd.f32 %v922, %v1870
  %v1894 = vadd.f32 %v1808, %v1870
  %v1895 = vadd.f32 %v928, %v1875
  %v1896 = vadd.f32 %v1814, %v1875
  %vm1897 = vcmp.gt.f32.partialorder %v1877, 0.0
  %vm1898 = vcmp.gt.f32.partialorder %v1878, 0.0
  %vm1899 = vcmp.gt.f32.partialorder %v1879, 0.0
  %vm1900 = vcmp.gt.f32.partialorder %v1880, 0.0
  %vm1901 = vcmp.gt.f32.partialorder %v1881, 0.0
  %vm1902 = vcmp.gt.f32.partialorder %v1882, 0.0
  %vm1903 = vcmp.gt.f32.partialorder %v1883, 0.0
  %vm1904 = vcmp.gt.f32.partialorder %v1884, 0.0
  %vm1905 = vcmp.gt.f32.partialorder %v1885, 0.0
  %vm1906 = vcmp.gt.f32.partialorder %v1886, 0.0
  %vm1907 = vcmp.gt.f32.partialorder %v1887, 0.0
  %vm1908 = vcmp.gt.f32.partialorder %v1888, 0.0
  %vm1909 = vcmp.gt.f32.partialorder %v1889, 0.0
  %vm1910 = vcmp.gt.f32.partialorder %v1890, 0.0
  %vm1911 = vcmp.gt.f32.partialorder %v1891, 0.0
  %vm1912 = vcmp.gt.f32.partialorder %v1892, 0.0
  %vm1913 = vcmp.gt.f32.partialorder %v1893, 0.0
  %vm1914 = vcmp.gt.f32.partialorder %v1894, 0.0
  %vm1915 = vcmp.gt.f32.partialorder %v1895, 0.0
  %vm1916 = vcmp.gt.f32.partialorder %v1896, 0.0
  %v1917 = vmul.f32 %v1877, 0.01
  %v1918 = vmul.f32 %v1878, 0.01
  %v1919 = vmul.f32 %v1879, 0.01
  %v1920 = vmul.f32 %v1880, 0.01
  %v1921 = vmul.f32 %v1881, 0.01
  %v1922 = vmul.f32 %v1882, 0.01
  %v1923 = vmul.f32 %v1883, 0.01
  %v1924 = vmul.f32 %v1884, 0.01
  %v1925 = vmul.f32 %v1885, 0.01
  %v1926 = vmul.f32 %v1886, 0.01
  %v1927 = vmul.f32 %v1887, 0.01
  %v1928 = vmul.f32 %v1888, 0.01
  %v1929 = vmul.f32 %v1889, 0.01
  %v1930 = vmul.f32 %v1890, 0.01
  %v1931 = vmul.f32 %v1891, 0.01
  %v1932 = vmul.f32 %v1892, 0.01
  %v1933 = vmul.f32 %v1893, 0.01
  %v1934 = vmul.f32 %v1894, 0.01
  %v1935 = vmul.f32 %v1895, 0.01
  %v1936 = vmul.f32 %v1896, 0.01
  %v1937 = vsel %vm1897, %v1877, %v1917
  %v1938 = vsel %vm1898, %v1878, %v1918
  %v1939 = vsel %vm1899, %v1879, %v1919
  %v1940 = vsel %vm1900, %v1880, %v1920
  %v1941 = vsel %vm1901, %v1881, %v1921
  %v1942 = vsel %vm1902, %v1882, %v1922
  %v1943 = vsel %vm1903, %v1883, %v1923
  %v1944 = vsel %vm1904, %v1884, %v1924
  %v1945 = vsel %vm1905, %v1885, %v1925
  %v1946 = vsel %vm1906, %v1886, %v1926
  %v1947 = vsel %vm1907, %v1887, %v1927
  %v1948 = vsel %vm1908, %v1888, %v1928
  %v1949 = vsel %vm1909, %v1889, %v1929
  %v1950 = vsel %vm1910, %v1890, %v1930
  %v1951 = vsel %vm1911, %v1891, %v1931
  %v1952 = vsel %vm1912, %v1892, %v1932
  %v1953 = vsel %vm1913, %v1893, %v1933
  %v1954 = vsel %vm1914, %v1894, %v1934
  %v1955 = vsel %vm1915, %v1895, %v1935
  %v1956 = vsel %vm1916, %v1896, %v1936
  %v1957 = vld [vmem:[%s4] sm:$0xff]
  %v1958 = vld [vmem:[%s4 + $0x8] sm:$0xff]
  %v1959 = vld [vmem:[%s4 + $0x10] sm:$0xff]
  %v1960 = vld [vmem:[%s4 + $0x18] sm:$0xff]
  %v1961 = vld [vmem:[%s4 + $0x20] sm:$0xff]
  %v1962 = vld [vmem:[%s4 + $0x28] sm:$0xff]
  %v1963 = vld [vmem:[%s4 + $0x30] sm:$0xff]
  %v1964 = vld [vmem:[%s4 + $0x38] sm:$0xff]
  %v1965 = vld [vmem:[%s4 + $0x40] sm:$0xff]
  %v1966 = vld [vmem:[%s4 + $0x48] sm:$0xff]
  %v1967 = vld [vmem:[%s5] sm:$0xff]
  %v1968 = vld [vmem:[%s5 + $0x8] sm:$0xff]
  %v1969 = vld [vmem:[%s5 + $0x10] sm:$0xff]
  %v1970 = vld [vmem:[%s5 + $0x18] sm:$0xff]
  %v1971 = vld [vmem:[%s5 + $0x20] sm:$0xff]
  %v1972 = vld [vmem:[%s5 + $0x28] sm:$0xff]
  %v1973 = vld [vmem:[%s5 + $0x30] sm:$0xff]
  %v1974 = vld [vmem:[%s5 + $0x38] sm:$0xff]
  %v1975 = vld [vmem:[%s5 + $0x40] sm:$0xff]
  %v1976 = vld [vmem:[%s5 + $0x48] sm:$0xff]
  %1978 = vset.pattern.permute.xlu0 0
  %1979 = vperm.xlu0 %1978, %v1967
  %v1980 = vpop.permute.xlu0 %1979
  %1983 = vset.pattern.permute.xlu0 0
  %1984 = vperm.xlu0 %1983, %v1968
  %v1985 = vpop.permute.xlu0 %1984
  %1988 = vset.pattern.permute.xlu0 0
  %1989 = vperm.xlu0 %1988, %v1969
  %v1990 = vpop.permute.xlu0 %1989
  %1993 = vset.pattern.permute.xlu0 0
  %1994 = vperm.xlu0 %1993, %v1970
  %v1995 = vpop.permute.xlu0 %1994
  %1998 = vset.pattern.permute.xlu0 0
  %1999 = vperm.xlu0 %1998, %v1971
  %v2000 = vpop.permute.xlu0 %1999
  %2003 = vset.pattern.permute.xlu0 0
  %2004 = vperm.xlu0 %2003, %v1972
  %v2005 = vpop.permute.xlu0 %2004
  %2008 = vset.pattern.permute.xlu0 0
  %2009 = vperm.xlu0 %2008, %v1973
  %v2010 = vpop.permute.xlu0 %2009
  %2013 = vset.pattern.permute.xlu0 0
  %2014 = vperm.xlu0 %2013, %v1974
  %v2015 = vpop.permute.xlu0 %2014
  %2018 = vset.pattern.permute.xlu0 0
  %2019 = vperm.xlu0 %2018, %v1975
  %v2020 = vpop.permute.xlu0 %2019
  %2023 = vset.pattern.permute.xlu0 0
  %2024 = vperm.xlu0 %2023, %v1976
  %v2025 = vpop.permute.xlu0 %2024
  %vm2027 = vcmask 654336
  %v2029 = vsel %vm2027, %v1957, 0
  %v2032 = vsel %vm2027, %v1958, 0
  %v2035 = vsel %vm2027, %v1959, 0
  %v2038 = vsel %vm2027, %v1960, 0
  %v2041 = vsel %vm2027, %v1961, 0
  %v2044 = vsel %vm2027, %v1962, 0
  %v2047 = vsel %vm2027, %v1963, 0
  %v2050 = vsel %vm2027, %v1964, 0
  %v2053 = vsel %vm2027, %v1965, 0
  %v2056 = vsel %vm2027, %v1966, 0
  %v2058 = vand.u32 %v1938, 4294901760
  %2059 = vmatprep.subr.mxu0 %v2058
  %v2060 = vand.u32 %v1937, 4294901760
  %2061 = vmatpush1.msra.mxu0 %v2060
  %v2062 = vand.u32 %v1940, 4294901760
  %2063 = vmatprep.subr.mxu0 %v2062
  %v2064 = vand.u32 %v1939, 4294901760
  %2065 = vmatpush1.msra.mxu0 %v2064
  %v2066 = vand.u32 %v1942, 4294901760
  %2067 = vmatprep.subr.mxu0 %v2066
  %v2068 = vand.u32 %v1941, 4294901760
  %2069 = vmatpush1.msra.mxu0 %v2068
  %v2070 = vand.u32 %v1944, 4294901760
  %2071 = vmatprep.subr.mxu0 %v2070
  %v2072 = vand.u32 %v1943, 4294901760
  %2073 = vmatpush1.msra.mxu0 %v2072
  %v2074 = vand.u32 %v1946, 4294901760
  %2075 = vmatprep.subr.mxu0 %v2074
  %v2076 = vand.u32 %v1945, 4294901760
  %2077 = vmatpush1.msra.mxu0 %v2076
  %v2078 = vand.u32 %v1948, 4294901760
  %2079 = vmatprep.subr.mxu0 %v2078
  %v2080 = vand.u32 %v1947, 4294901760
  %2081 = vmatpush1.msra.mxu0 %v2080
  %v2082 = vand.u32 %v1950, 4294901760
  %2083 = vmatprep.subr.mxu0 %v2082
  %v2084 = vand.u32 %v1949, 4294901760
  %2085 = vmatpush1.msra.mxu0 %v2084
  %v2086 = vand.u32 %v1952, 4294901760
  %2087 = vmatprep.subr.mxu0 %v2086
  %v2088 = vand.u32 %v1951, 4294901760
  %2089 = vmatpush1.msra.mxu0 %v2088
  %v2090 = vand.u32 %v1954, 4294901760
  %2091 = vmatprep.subr.mxu0 %v2090
  %v2092 = vand.u32 %v1953, 4294901760
  %2093 = vmatpush1.msra.mxu0 %v2092
  %v2094 = vand.u32 %v1956, 4294901760
  %2095 = vmatprep.subr.mxu0 %v2094
  %v2096 = vand.u32 %v1955, 4294901760
  %2097 = vmatpush1.msra.mxu0 %v2096
  %2098 = vmatprep.subr.mxu0 0.0
  %2099 = vmatpush1.msra.mxu0 0.0
  %2100 = vmatprep.subr.mxu0 0.0
  %2101 = vmatpush1.msra.mxu0 0.0
  %2102 = vmatprep.subr.mxu0 0.0
  %2103 = vmatpush1.msra.mxu0 0.0
  %2104 = vmatprep.subr.mxu0 0.0
  %2105 = vmatpush1.msra.mxu0 0.0
  %2106 = vmatprep.subr.mxu0 0.0
  %2107 = vmatpush1.msra.mxu0 0.0
  %2108 = vmatprep.subr.mxu0 0.0
  %2109 = vmatpush1.msra.mxu0 0.0
  %2110 = vmatprep.subr.mxu0 0.0
  %2111 = vmatpush1.msra.mxu0 0.0
  %2112 = vmatprep.subr.mxu0 0.0
  %2113 = vmatpush1.msra.mxu0 0.0
  %2114 = vmatprep.subr.mxu0 0.0
  %2115 = vmatpush1.msra.mxu0 0.0
  %2116 = vmatprep.subr.mxu0 0.0
  %2117 = vmatpush1.msra.mxu0 0.0
  %2118 = vmatprep.subr.mxu0 0.0
  %2119 = vmatpush1.msra.mxu0 0.0
  %2120 = vmatprep.subr.mxu0 0.0
  %2121 = vmatpush1.msra.mxu0 0.0
  %2122 = vmatprep.subr.mxu0 0.0
  %2123 = vmatpush1.msra.mxu0 0.0
  %2124 = vmatprep.subr.mxu0 0.0
  %2125 = vmatpush1.msra.mxu0 0.0
  %2126 = vmatprep.subr.mxu0 0.0
  %2127 = vmatpush1.msra.mxu0 0.0
  %2128 = vmatprep.subr.mxu0 0.0
  %2129 = vmatpush1.msra.mxu0 0.0
  %2130 = vmatprep.subr.mxu0 0.0
  %2131 = vmatpush1.msra.mxu0 0.0
  %2132 = vmatprep.subr.mxu0 0.0
  %2133 = vmatpush1.msra.mxu0 0.0
  %2134 = vmatprep.subr.mxu0 0.0
  %2135 = vmatpush1.msra.mxu0 0.0
  %2136 = vmatprep.subr.mxu0 0.0
  %2137 = vmatpush1.msra.mxu0 0.0
  %2138 = vmatprep.subr.mxu0 0.0
  %2139 = vmatpush1.msra.mxu0 0.0
  %2140 = vmatprep.subr.mxu0 0.0
  %2141 = vmatpush1.msra.mxu0 0.0
  %2142 = vmatprep.mubr.f32.mxu0 0.0
  %v2143 = vand.u32 %v2029, 4294901760
  %v2144 = vsub.f32 %v2029, %v2143
  %v2145 = vand.u32 %v2144, 4294901760
  %v2146 = vsub.f32 %v2144, %v2145
  %v2147 = vand.u32 %v2146, 4294901760
  %2148 = vmatmul.mubr.f32.gmra.mrb[0].mxu0 %v2147
  %v2149 = vpop.f32.mrb[0].mxu0
  %v2150 = vadd.f32 %v1980, %v2149
  %v2151 = vpop.f32.mrb[0].mxu0
  %v2152 = vadd.f32 %v1980, %v2151
  %2153 = vmatprep.mubr.f32.mxu0 0.0
  %v2154 = vand.u32 %v2032, 4294901760
  %v2155 = vsub.f32 %v2032, %v2154
  %v2156 = vand.u32 %v2155, 4294901760
  %v2157 = vsub.f32 %v2155, %v2156
  %v2158 = vand.u32 %v2157, 4294901760
  %2159 = vmatmul.mubr.f32.gmra.mrb[0].mxu0 %v2158
  %v2160 = vpop.f32.mrb[0].mxu0
  %v2161 = vadd.f32 %v1985, %v2160
  %v2162 = vpop.f32.mrb[0].mxu0
  %v2163 = vadd.f32 %v1985, %v2162
  %2164 = vmatprep.mubr.f32.mxu0 0.0
  %v2165 = vand.u32 %v2035, 4294901760
  %v2166 = vsub.f32 %v2035, %v2165
  %v2167 = vand.u32 %v2166, 4294901760
  %v2168 = vsub.f32 %v2166, %v2167
  %v2169 = vand.u32 %v2168, 4294901760
  %2170 = vmatmul.mubr.f32.gmra.mrb[0].mxu0 %v2169
  %v2171 = vpop.f32.mrb[0].mxu0
  %v2172 = vadd.f32 %v1990, %v2171
  %v2173 = vpop.f32.mrb[0].mxu0
  %v2174 = vadd.f32 %v1990, %v2173
  %2175 = vmatprep.mubr.f32.mxu0 0.0
  %v2176 = vand.u32 %v2038, 4294901760
  %v2177 = vsub.f32 %v2038, %v2176
  %v2178 = vand.u32 %v2177, 4294901760
  %v2179 = vsub.f32 %v2177, %v2178
  %v2180 = vand.u32 %v2179, 4294901760
  %2181 = vmatmul.mubr.f32.gmra.mrb[0].mxu0 %v2180
  %v2182 = vpop.f32.mrb[0].mxu0
  %v2183 = vadd.f32 %v1995, %v2182
  %v2184 = vpop.f32.mrb[0].mxu0
  %v2185 = vadd.f32 %v1995, %v2184
  %2186 = vmatprep.mubr.f32.mxu0 0.0
  %v2187 = vand.u32 %v2041, 4294901760
  %v2188 = vsub.f32 %v2041, %v2187
  %v2189 = vand.u32 %v2188, 4294901760
  %v2190 = vsub.f32 %v2188, %v2189
  %v2191 = vand.u32 %v2190, 4294901760
  %2192 = vmatmul.mubr.f32.gmra.mrb[0].mxu0 %v2191
  %v2193 = vpop.f32.mrb[0].mxu0
  %v2194 = vadd.f32 %v2000, %v2193
  %v2195 = vpop.f32.mrb[0].mxu0
  %v2196 = vadd.f32 %v2000, %v2195
  %2197 = vmatprep.mubr.f32.mxu0 0.0
  %v2198 = vand.u32 %v2044, 4294901760
  %v2199 = vsub.f32 %v2044, %v2198
  %v2200 = vand.u32 %v2199, 4294901760
  %v2201 = vsub.f32 %v2199, %v2200
  %v2202 = vand.u32 %v2201, 4294901760
  %2203 = vmatmul.mubr.f32.gmra.mrb[0].mxu0 %v2202
  %v2204 = vpop.f32.mrb[0].mxu0
  %v2205 = vadd.f32 %v2005, %v2204
  %v2206 = vpop.f32.mrb[0].mxu0
  %v2207 = vadd.f32 %v2005, %v2206
  %2208 = vmatprep.mubr.f32.mxu0 0.0
  %v2209 = vand.u32 %v2047, 4294901760
  %v2210 = vsub.f32 %v2047, %v2209
  %v2211 = vand.u32 %v2210, 4294901760
  %v2212 = vsub.f32 %v2210, %v2211
  %v2213 = vand.u32 %v2212, 4294901760
  %2214 = vmatmul.mubr.f32.gmra.mrb[0].mxu0 %v2213
  %v2215 = vpop.f32.mrb[0].mxu0
  %v2216 = vadd.f32 %v2010, %v2215
  %v2217 = vpop.f32.mrb[0].mxu0
  %v2218 = vadd.f32 %v2010, %v2217
  %2219 = vmatprep.mubr.f32.mxu0 0.0
  %v2220 = vand.u32 %v2050, 4294901760
  %v2221 = vsub.f32 %v2050, %v2220
  %v2222 = vand.u32 %v2221, 4294901760
  %v2223 = vsub.f32 %v2221, %v2222
  %v2224 = vand.u32 %v2223, 4294901760
  %2225 = vmatmul.mubr.f32.gmra.mrb[0].mxu0 %v2224
  %v2226 = vpop.f32.mrb[0].mxu0
  %v2227 = vadd.f32 %v2015, %v2226
  %v2228 = vpop.f32.mrb[0].mxu0
  %v2229 = vadd.f32 %v2015, %v2228
  %2230 = vmatprep.mubr.f32.mxu0 0.0
  %v2231 = vand.u32 %v2053, 4294901760
  %v2232 = vsub.f32 %v2053, %v2231
  %v2233 = vand.u32 %v2232, 4294901760
  %v2234 = vsub.f32 %v2232, %v2233
  %v2235 = vand.u32 %v2234, 4294901760
  %2236 = vmatmul.mubr.f32.gmra.mrb[0].mxu0 %v2235
  %v2237 = vpop.f32.mrb[0].mxu0
  %v2238 = vadd.f32 %v2020, %v2237
  %v2239 = vpop.f32.mrb[0].mxu0
  %v2240 = vadd.f32 %v2020, %v2239
  %2241 = vmatprep.mubr.f32.mxu0 0.0
  %v2242 = vand.u32 %v2056, 4294901760
  %v2243 = vsub.f32 %v2056, %v2242
  %v2244 = vand.u32 %v2243, 4294901760
  %v2245 = vsub.f32 %v2243, %v2244
  %v2246 = vand.u32 %v2245, 4294901760
  %2247 = vmatmul.mubr.f32.gmra.mrb[0].mxu0 %v2246
  %v2248 = vpop.f32.mrb[0].mxu0
  %v2249 = vadd.f32 %v2025, %v2248
  %v2250 = vpop.f32.mrb[0].mxu0
  %v2251 = vadd.f32 %v2025, %v2250
  %2252 = vdwg.mxu0
  %v2253 = vand.u32 %v1938, 4294901760
  %v2254 = vsub.f32 %v1938, %v2253
  %v2255 = vand.u32 %v2254, 4294901760
  %v2256 = vsub.f32 %v2254, %v2255
  %v2257 = vand.u32 %v2256, 4294901760
  %2258 = vmatprep.subr.mxu0 %v2257
  %v2259 = vand.u32 %v1937, 4294901760
  %v2260 = vsub.f32 %v1937, %v2259
  %v2261 = vand.u32 %v2260, 4294901760
  %v2262 = vsub.f32 %v2260, %v2261
  %v2263 = vand.u32 %v2262, 4294901760
  %2264 = vmatpush1.msra.mxu0 %v2263
  %v2265 = vand.u32 %v1940, 4294901760
  %v2266 = vsub.f32 %v1940, %v2265
  %v2267 = vand.u32 %v2266, 4294901760
  %v2268 = vsub.f32 %v2266, %v2267
  %v2269 = vand.u32 %v2268, 4294901760
  %2270 = vmatprep.subr.mxu0 %v2269
  %v2271 = vand.u32 %v1939, 4294901760
  %v2272 = vsub.f32 %v1939, %v2271
  %v2273 = vand.u32 %v2272, 4294901760
  %v2274 = vsub.f32 %v2272, %v2273
  %v2275 = vand.u32 %v2274, 4294901760
  %2276 = vmatpush1.msra.mxu0 %v2275
  %v2277 = vand.u32 %v1942, 4294901760
  %v2278 = vsub.f32 %v1942, %v2277
  %v2279 = vand.u32 %v2278, 4294901760
  %v2280 = vsub.f32 %v2278, %v2279
  %v2281 = vand.u32 %v2280, 4294901760
  %2282 = vmatprep.subr.mxu0 %v2281
  %v2283 = vand.u32 %v1941, 4294901760
  %v2284 = vsub.f32 %v1941, %v2283
  %v2285 = vand.u32 %v2284, 4294901760
  %v2286 = vsub.f32 %v2284, %v2285
  %v2287 = vand.u32 %v2286, 4294901760
  %2288 = vmatpush1.msra.mxu0 %v2287
  %v2289 = vand.u32 %v1944, 4294901760
  %v2290 = vsub.f32 %v1944, %v2289
  %v2291 = vand.u32 %v2290, 4294901760
  %v2292 = vsub.f32 %v2290, %v2291
  %v2293 = vand.u32 %v2292, 4294901760
  %2294 = vmatprep.subr.mxu0 %v2293
  %v2295 = vand.u32 %v1943, 4294901760
  %v2296 = vsub.f32 %v1943, %v2295
  %v2297 = vand.u32 %v2296, 4294901760
  %v2298 = vsub.f32 %v2296, %v2297
  %v2299 = vand.u32 %v2298, 4294901760
  %2300 = vmatpush1.msra.mxu0 %v2299
  %v2301 = vand.u32 %v1946, 4294901760
  %v2302 = vsub.f32 %v1946, %v2301
  %v2303 = vand.u32 %v2302, 4294901760
  %v2304 = vsub.f32 %v2302, %v2303
  %v2305 = vand.u32 %v2304, 4294901760
  %2306 = vmatprep.subr.mxu0 %v2305
  %v2307 = vand.u32 %v1945, 4294901760
  %v2308 = vsub.f32 %v1945, %v2307
  %v2309 = vand.u32 %v2308, 4294901760
  %v2310 = vsub.f32 %v2308, %v2309
  %v2311 = vand.u32 %v2310, 4294901760
  %2312 = vmatpush1.msra.mxu0 %v2311
  %v2313 = vand.u32 %v1948, 4294901760
  %v2314 = vsub.f32 %v1948, %v2313
  %v2315 = vand.u32 %v2314, 4294901760
  %v2316 = vsub.f32 %v2314, %v2315
  %v2317 = vand.u32 %v2316, 4294901760
  %2318 = vmatprep.subr.mxu0 %v2317
  %v2319 = vand.u32 %v1947, 4294901760
  %v2320 = vsub.f32 %v1947, %v2319
  %v2321 = vand.u32 %v2320, 4294901760
  %v2322 = vsub.f32 %v2320, %v2321
  %v2323 = vand.u32 %v2322, 4294901760
  %2324 = vmatpush1.msra.mxu0 %v2323
  %v2325 = vand.u32 %v1950, 4294901760
  %v2326 = vsub.f32 %v1950, %v2325
  %v2327 = vand.u32 %v2326, 4294901760
  %v2328 = vsub.f32 %v2326, %v2327
  %v2329 = vand.u32 %v2328, 4294901760
  %2330 = vmatprep.subr.mxu0 %v2329
  %v2331 = vand.u32 %v1949, 4294901760
  %v2332 = vsub.f32 %v1949, %v2331
  %v2333 = vand.u32 %v2332, 4294901760
  %v2334 = vsub.f32 %v2332, %v2333
  %v2335 = vand.u32 %v2334, 4294901760
  %2336 = vmatpush1.msra.mxu0 %v2335
  %v2337 = vand.u32 %v1952, 4294901760
  %v2338 = vsub.f32 %v1952, %v2337
  %v2339 = vand.u32 %v2338, 4294901760
  %v2340 = vsub.f32 %v2338, %v2339
  %v2341 = vand.u32 %v2340, 4294901760
  %2342 = vmatprep.subr.mxu0 %v2341
  %v2343 = vand.u32 %v1951, 4294901760
  %v2344 = vsub.f32 %v1951, %v2343
  %v2345 = vand.u32 %v2344, 4294901760
  %v2346 = vsub.f32 %v2344, %v2345
  %v2347 = vand.u32 %v2346, 4294901760
  %2348 = vmatpush1.msra.mxu0 %v2347
  %v2349 = vand.u32 %v1954, 4294901760
  %v2350 = vsub.f32 %v1954, %v2349
  %v2351 = vand.u32 %v2350, 4294901760
  %v2352 = vsub.f32 %v2350, %v2351
  %v2353 = vand.u32 %v2352, 4294901760
  %2354 = vmatprep.subr.mxu0 %v2353
  %v2355 = vand.u32 %v1953, 4294901760
  %v2356 = vsub.f32 %v1953, %v2355
  %v2357 = vand.u32 %v2356, 4294901760
  %v2358 = vsub.f32 %v2356, %v2357
  %v2359 = vand.u32 %v2358, 4294901760
  %2360 = vmatpush1.msra.mxu0 %v2359
  %v2361 = vand.u32 %v1956, 4294901760
  %v2362 = vsub.f32 %v1956, %v2361
  %v2363 = vand.u32 %v2362, 4294901760
  %v2364 = vsub.f32 %v2362, %v2363
  %v2365 = vand.u32 %v2364, 4294901760
  %2366 = vmatprep.subr.mxu0 %v2365
  %v2367 = vand.u32 %v1955, 4294901760
  %v2368 = vsub.f32 %v1955, %v2367
  %v2369 = vand.u32 %v2368, 4294901760
  %v2370 = vsub.f32 %v2368, %v2369
  %v2371 = vand.u32 %v2370, 4294901760
  %2372 = vmatpush1.msra.mxu0 %v2371
  %2373 = vmatprep.subr.mxu0 0.0
  %2374 = vmatpush1.msra.mxu0 0.0
  %2375 = vmatprep.subr.mxu0 0.0
  %2376 = vmatpush1.msra.mxu0 0.0
  %2377 = vmatprep.subr.mxu0 0.0
  %2378 = vmatpush1.msra.mxu0 0.0
  %2379 = vmatprep.subr.mxu0 0.0
  %2380 = vmatpush1.msra.mxu0 0.0
  %2381 = vmatprep.subr.mxu0 0.0
  %2382 = vmatpush1.msra.mxu0 0.0
  %2383 = vmatprep.subr.mxu0 0.0
  %2384 = vmatpush1.msra.mxu0 0.0
  %2385 = vmatprep.subr.mxu0 0.0
  %2386 = vmatpush1.msra.mxu0 0.0
  %2387 = vmatprep.subr.mxu0 0.0
  %2388 = vmatpush1.msra.mxu0 0.0
  %2389 = vmatprep.subr.mxu0 0.0
  %2390 = vmatpush1.msra.mxu0 0.0
  %2391 = vmatprep.subr.mxu0 0.0
  %2392 = vmatpush1.msra.mxu0 0.0
  %2393 = vmatprep.subr.mxu0 0.0
  %2394 = vmatpush1.msra.mxu0 0.0
  %2395 = vmatprep.subr.mxu0 0.0
  %2396 = vmatpush1.msra.mxu0 0.0
  %2397 = vmatprep.subr.mxu0 0.0
  %2398 = vmatpush1.msra.mxu0 0.0
  %2399 = vmatprep.subr.mxu0 0.0
  %2400 = vmatpush1.msra.mxu0 0.0
  %2401 = vmatprep.subr.mxu0 0.0
  %2402 = vmatpush1.msra.mxu0 0.0
  %2403 = vmatprep.subr.mxu0 0.0
  %2404 = vmatpush1.msra.mxu0 0.0
  %2405 = vmatprep.subr.mxu0 0.0
  %2406 = vmatpush1.msra.mxu0 0.0
  %2407 = vmatprep.subr.mxu0 0.0
  %2408 = vmatpush1.msra.mxu0 0.0
  %2409 = vmatprep.subr.mxu0 0.0
  %2410 = vmatpush1.msra.mxu0 0.0
  %2411 = vmatprep.subr.mxu0 0.0
  %2412 = vmatpush1.msra.mxu0 0.0
  %2413 = vmatprep.subr.mxu0 0.0
  %2414 = vmatpush1.msra.mxu0 0.0
  %2415 = vmatprep.subr.mxu0 0.0
  %2416 = vmatpush1.msra.mxu0 0.0
  %2417 = vmatprep.mubr.f32.mxu0 0.0
  %v2418 = vand.u32 %v2029, 4294901760
  %2419 = vmatmul.mubr.f32.gmra.mrb[0].mxu0 %v2418
  %v2420 = vpop.f32.mrb[0].mxu0
  %v2421 = vadd.f32 %v2150, %v2420
  %v2422 = vpop.f32.mrb[0].mxu0
  %v2423 = vadd.f32 %v2152, %v2422
  %2424 = vmatprep.mubr.f32.mxu0 0.0
  %v2425 = vand.u32 %v2032, 4294901760
  %2426 = vmatmul.mubr.f32.gmra.mrb[0].mxu0 %v2425
  %v2427 = vpop.f32.mrb[0].mxu0
  %v2428 = vadd.f32 %v2161, %v2427
  %v2429 = vpop.f32.mrb[0].mxu0
  %v2430 = vadd.f32 %v2163, %v2429
  %2431 = vmatprep.mubr.f32.mxu0 0.0
  %v2432 = vand.u32 %v2035, 4294901760
  %2433 = vmatmul.mubr.f32.gmra.mrb[0].mxu0 %v2432
  %v2434 = vpop.f32.mrb[0].mxu0
  %v2435 = vadd.f32 %v2172, %v2434
  %v2436 = vpop.f32.mrb[0].mxu0
  %v2437 = vadd.f32 %v2174, %v2436
  %2438 = vmatprep.mubr.f32.mxu0 0.0
  %v2439 = vand.u32 %v2038, 4294901760
  %2440 = vmatmul.mubr.f32.gmra.mrb[0].mxu0 %v2439
  %v2441 = vpop.f32.mrb[0].mxu0
  %v2442 = vadd.f32 %v2183, %v2441
  %v2443 = vpop.f32.mrb[0].mxu0
  %v2444 = vadd.f32 %v2185, %v2443
  %2445 = vmatprep.mubr.f32.mxu0 0.0
  %v2446 = vand.u32 %v2041, 4294901760
  %2447 = vmatmul.mubr.f32.gmra.mrb[0].mxu0 %v2446
  %v2448 = vpop.f32.mrb[0].mxu0
  %v2449 = vadd.f32 %v2194, %v2448
  %v2450 = vpop.f32.mrb[0].mxu0
  %v2451 = vadd.f32 %v2196, %v2450
  %2452 = vmatprep.mubr.f32.mxu0 0.0
  %v2453 = vand.u32 %v2044, 4294901760
  %2454 = vmatmul.mubr.f32.gmra.mrb[0].mxu0 %v2453
  %v2455 = vpop.f32.mrb[0].mxu0
  %v2456 = vadd.f32 %v2205, %v2455
  %v2457 = vpop.f32.mrb[0].mxu0
  %v2458 = vadd.f32 %v2207, %v2457
  %2459 = vmatprep.mubr.f32.mxu0 0.0
  %v2460 = vand.u32 %v2047, 4294901760
  %2461 = vmatmul.mubr.f32.gmra.mrb[0].mxu0 %v2460
  %v2462 = vpop.f32.mrb[0].mxu0
  %v2463 = vadd.f32 %v2216, %v2462
  %v2464 = vpop.f32.mrb[0].mxu0
  %v2465 = vadd.f32 %v2218, %v2464
  %2466 = vmatprep.mubr.f32.mxu0 0.0
  %v2467 = vand.u32 %v2050, 4294901760
  %2468 = vmatmul.mubr.f32.gmra.mrb[0].mxu0 %v2467
  %v2469 = vpop.f32.mrb[0].mxu0
  %v2470 = vadd.f32 %v2227, %v2469
  %v2471 = vpop.f32.mrb[0].mxu0
  %v2472 = vadd.f32 %v2229, %v2471
  %2473 = vmatprep.mubr.f32.mxu0 0.0
  %v2474 = vand.u32 %v2053, 4294901760
  %2475 = vmatmul.mubr.f32.gmra.mrb[0].mxu0 %v2474
  %v2476 = vpop.f32.mrb[0].mxu0
  %v2477 = vadd.f32 %v2238, %v2476
  %v2478 = vpop.f32.mrb[0].mxu0
  %v2479 = vadd.f32 %v2240, %v2478
  %2480 = vmatprep.mubr.f32.mxu0 0.0
  %v2481 = vand.u32 %v2056, 4294901760
  %2482 = vmatmul.mubr.f32.gmra.mrb[0].mxu0 %v2481
  %v2483 = vpop.f32.mrb[0].mxu0
  %v2484 = vadd.f32 %v2249, %v2483
  %v2485 = vpop.f32.mrb[0].mxu0
  %v2486 = vadd.f32 %v2251, %v2485
  %2487 = vdwg.mxu0
  %v2488 = vand.u32 %v1938, 4294901760
  %v2489 = vsub.f32 %v1938, %v2488
  %2490 = vmatprep.subr.mxu0 %v2489
  %v2491 = vand.u32 %v1937, 4294901760
  %v2492 = vsub.f32 %v1937, %v2491
  %2493 = vmatpush1.msra.mxu0 %v2492
  %v2494 = vand.u32 %v1940, 4294901760
  %v2495 = vsub.f32 %v1940, %v2494
  %2496 = vmatprep.subr.mxu0 %v2495
  %v2497 = vand.u32 %v1939, 4294901760
  %v2498 = vsub.f32 %v1939, %v2497
  %2499 = vmatpush1.msra.mxu0 %v2498
  %v2500 = vand.u32 %v1942, 4294901760
  %v2501 = vsub.f32 %v1942, %v2500
  %2502 = vmatprep.subr.mxu0 %v2501
  %v2503 = vand.u32 %v1941, 4294901760
  %v2504 = vsub.f32 %v1941, %v2503
  %2505 = vmatpush1.msra.mxu0 %v2504
  %v2506 = vand.u32 %v1944, 4294901760
  %v2507 = vsub.f32 %v1944, %v2506
  %2508 = vmatprep.subr.mxu0 %v2507
  %v2509 = vand.u32 %v1943, 4294901760
  %v2510 = vsub.f32 %v1943, %v2509
  %2511 = vmatpush1.msra.mxu0 %v2510
  %v2512 = vand.u32 %v1946, 4294901760
  %v2513 = vsub.f32 %v1946, %v2512
  %2514 = vmatprep.subr.mxu0 %v2513
  %v2515 = vand.u32 %v1945, 4294901760
  %v2516 = vsub.f32 %v1945, %v2515
  %2517 = vmatpush1.msra.mxu0 %v2516
  %v2518 = vand.u32 %v1948, 4294901760
  %v2519 = vsub.f32 %v1948, %v2518
  %2520 = vmatprep.subr.mxu0 %v2519
  %v2521 = vand.u32 %v1947, 4294901760
  %v2522 = vsub.f32 %v1947, %v2521
  %2523 = vmatpush1.msra.mxu0 %v2522
  %v2524 = vand.u32 %v1950, 4294901760
  %v2525 = vsub.f32 %v1950, %v2524
  %2526 = vmatprep.subr.mxu0 %v2525
  %v2527 = vand.u32 %v1949, 4294901760
  %v2528 = vsub.f32 %v1949, %v2527
  %2529 = vmatpush1.msra.mxu0 %v2528
  %v2530 = vand.u32 %v1952, 4294901760
  %v2531 = vsub.f32 %v1952, %v2530
  %2532 = vmatprep.subr.mxu0 %v2531
  %v2533 = vand.u32 %v1951, 4294901760
  %v2534 = vsub.f32 %v1951, %v2533
  %2535 = vmatpush1.msra.mxu0 %v2534
  %v2536 = vand.u32 %v1954, 4294901760
  %v2537 = vsub.f32 %v1954, %v2536
  %2538 = vmatprep.subr.mxu0 %v2537
  %v2539 = vand.u32 %v1953, 4294901760
  %v2540 = vsub.f32 %v1953, %v2539
  %2541 = vmatpush1.msra.mxu0 %v2540
  %v2542 = vand.u32 %v1956, 4294901760
  %v2543 = vsub.f32 %v1956, %v2542
  %2544 = vmatprep.subr.mxu0 %v2543
  %v2545 = vand.u32 %v1955, 4294901760
  %v2546 = vsub.f32 %v1955, %v2545
  %2547 = vmatpush1.msra.mxu0 %v2546
  %2548 = vmatprep.subr.mxu0 0.0
  %2549 = vmatpush1.msra.mxu0 0.0
  %2550 = vmatprep.subr.mxu0 0.0
  %2551 = vmatpush1.msra.mxu0 0.0
  %2552 = vmatprep.subr.mxu0 0.0
  %2553 = vmatpush1.msra.mxu0 0.0
  %2554 = vmatprep.subr.mxu0 0.0
  %2555 = vmatpush1.msra.mxu0 0.0
  %2556 = vmatprep.subr.mxu0 0.0
  %2557 = vmatpush1.msra.mxu0 0.0
  %2558 = vmatprep.subr.mxu0 0.0
  %2559 = vmatpush1.msra.mxu0 0.0
  %2560 = vmatprep.subr.mxu0 0.0
  %2561 = vmatpush1.msra.mxu0 0.0
  %2562 = vmatprep.subr.mxu0 0.0
  %2563 = vmatpush1.msra.mxu0 0.0
  %2564 = vmatprep.subr.mxu0 0.0
  %2565 = vmatpush1.msra.mxu0 0.0
  %2566 = vmatprep.subr.mxu0 0.0
  %2567 = vmatpush1.msra.mxu0 0.0
  %2568 = vmatprep.subr.mxu0 0.0
  %2569 = vmatpush1.msra.mxu0 0.0
  %2570 = vmatprep.subr.mxu0 0.0
  %2571 = vmatpush1.msra.mxu0 0.0
  %2572 = vmatprep.subr.mxu0 0.0
  %2573 = vmatpush1.msra.mxu0 0.0
  %2574 = vmatprep.subr.mxu0 0.0
  %2575 = vmatpush1.msra.mxu0 0.0
  %2576 = vmatprep.subr.mxu0 0.0
  %2577 = vmatpush1.msra.mxu0 0.0
  %2578 = vmatprep.subr.mxu0 0.0
  %2579 = vmatpush1.msra.mxu0 0.0
  %2580 = vmatprep.subr.mxu0 0.0
  %2581 = vmatpush1.msra.mxu0 0.0
  %2582 = vmatprep.subr.mxu0 0.0
  %2583 = vmatpush1.msra.mxu0 0.0
  %2584 = vmatprep.subr.mxu0 0.0
  %2585 = vmatpush1.msra.mxu0 0.0
  %2586 = vmatprep.subr.mxu0 0.0
  %2587 = vmatpush1.msra.mxu0 0.0
  %2588 = vmatprep.subr.mxu0 0.0
  %2589 = vmatpush1.msra.mxu0 0.0
  %2590 = vmatprep.subr.mxu0 0.0
  %2591 = vmatpush1.msra.mxu0 0.0
  %2592 = vmatprep.mubr.f32.mxu0 0.0
  %v2593 = vand.u32 %v2029, 4294901760
  %v2594 = vsub.f32 %v2029, %v2593
  %2595 = vmatmul.mubr.f32.gmra.mrb[0].mxu0 %v2594
  %v2596 = vpop.f32.mrb[0].mxu0
  %v2597 = vadd.f32 %v2421, %v2596
  %v2598 = vpop.f32.mrb[0].mxu0
  %v2599 = vadd.f32 %v2423, %v2598
  %2600 = vmatprep.mubr.f32.mxu0 0.0
  %v2601 = vand.u32 %v2032, 4294901760
  %v2602 = vsub.f32 %v2032, %v2601
  %2603 = vmatmul.mubr.f32.gmra.mrb[0].mxu0 %v2602
  %v2604 = vpop.f32.mrb[0].mxu0
  %v2605 = vadd.f32 %v2428, %v2604
  %v2606 = vpop.f32.mrb[0].mxu0
  %v2607 = vadd.f32 %v2430, %v2606
  %2608 = vmatprep.mubr.f32.mxu0 0.0
  %v2609 = vand.u32 %v2035, 4294901760
  %v2610 = vsub.f32 %v2035, %v2609
  %2611 = vmatmul.mubr.f32.gmra.mrb[0].mxu0 %v2610
  %v2612 = vpop.f32.mrb[0].mxu0
  %v2613 = vadd.f32 %v2435, %v2612
  %v2614 = vpop.f32.mrb[0].mxu0
  %v2615 = vadd.f32 %v2437, %v2614
  %2616 = vmatprep.mubr.f32.mxu0 0.0
  %v2617 = vand.u32 %v2038, 4294901760
  %v2618 = vsub.f32 %v2038, %v2617
  %2619 = vmatmul.mubr.f32.gmra.mrb[0].mxu0 %v2618
  %v2620 = vpop.f32.mrb[0].mxu0
  %v2621 = vadd.f32 %v2442, %v2620
  %v2622 = vpop.f32.mrb[0].mxu0
  %v2623 = vadd.f32 %v2444, %v2622
  %2624 = vmatprep.mubr.f32.mxu0 0.0
  %v2625 = vand.u32 %v2041, 4294901760
  %v2626 = vsub.f32 %v2041, %v2625
  %2627 = vmatmul.mubr.f32.gmra.mrb[0].mxu0 %v2626
  %v2628 = vpop.f32.mrb[0].mxu0
  %v2629 = vadd.f32 %v2449, %v2628
  %v2630 = vpop.f32.mrb[0].mxu0
  %v2631 = vadd.f32 %v2451, %v2630
  %2632 = vmatprep.mubr.f32.mxu0 0.0
  %v2633 = vand.u32 %v2044, 4294901760
  %v2634 = vsub.f32 %v2044, %v2633
  %2635 = vmatmul.mubr.f32.gmra.mrb[0].mxu0 %v2634
  %v2636 = vpop.f32.mrb[0].mxu0
  %v2637 = vadd.f32 %v2456, %v2636
  %v2638 = vpop.f32.mrb[0].mxu0
  %v2639 = vadd.f32 %v2458, %v2638
  %2640 = vmatprep.mubr.f32.mxu0 0.0
  %v2641 = vand.u32 %v2047, 4294901760
  %v2642 = vsub.f32 %v2047, %v2641
  %2643 = vmatmul.mubr.f32.gmra.mrb[0].mxu0 %v2642
  %v2644 = vpop.f32.mrb[0].mxu0
  %v2645 = vadd.f32 %v2463, %v2644
  %v2646 = vpop.f32.mrb[0].mxu0
  %v2647 = vadd.f32 %v2465, %v2646
  %2648 = vmatprep.mubr.f32.mxu0 0.0
  %v2649 = vand.u32 %v2050, 4294901760
  %v2650 = vsub.f32 %v2050, %v2649
  %2651 = vmatmul.mubr.f32.gmra.mrb[0].mxu0 %v2650
  %v2652 = vpop.f32.mrb[0].mxu0
  %v2653 = vadd.f32 %v2470, %v2652
  %v2654 = vpop.f32.mrb[0].mxu0
  %v2655 = vadd.f32 %v2472, %v2654
  %2656 = vmatprep.mubr.f32.mxu0 0.0
  %v2657 = vand.u32 %v2053, 4294901760
  %v2658 = vsub.f32 %v2053, %v2657
  %2659 = vmatmul.mubr.f32.gmra.mrb[0].mxu0 %v2658
  %v2660 = vpop.f32.mrb[0].mxu0
  %v2661 = vadd.f32 %v2477, %v2660
  %v2662 = vpop.f32.mrb[0].mxu0
  %v2663 = vadd.f32 %v2479, %v2662
  %2664 = vmatprep.mubr.f32.mxu0 0.0
  %v2665 = vand.u32 %v2056, 4294901760
  %v2666 = vsub.f32 %v2056, %v2665
  %2667 = vmatmul.mubr.f32.gmra.mrb[0].mxu0 %v2666
  %v2668 = vpop.f32.mrb[0].mxu0
  %v2669 = vadd.f32 %v2484, %v2668
  %v2670 = vpop.f32.mrb[0].mxu0
  %v2671 = vadd.f32 %v2486, %v2670
  %2672 = vdwg.mxu0
  %v2673 = vand.u32 %v1938, 4294901760
  %2674 = vmatprep.subr.mxu0 %v2673
  %v2675 = vand.u32 %v1937, 4294901760
  %2676 = vmatpush1.msra.mxu0 %v2675
  %v2677 = vand.u32 %v1940, 4294901760
  %2678 = vmatprep.subr.mxu0 %v2677
  %v2679 = vand.u32 %v1939, 4294901760
  %2680 = vmatpush1.msra.mxu0 %v2679
  %v2681 = vand.u32 %v1942, 4294901760
  %2682 = vmatprep.subr.mxu0 %v2681
  %v2683 = vand.u32 %v1941, 4294901760
  %2684 = vmatpush1.msra.mxu0 %v2683
  %v2685 = vand.u32 %v1944, 4294901760
  %2686 = vmatprep.subr.mxu0 %v2685
  %v2687 = vand.u32 %v1943, 4294901760
  %2688 = vmatpush1.msra.mxu0 %v2687
  %v2689 = vand.u32 %v1946, 4294901760
  %2690 = vmatprep.subr.mxu0 %v2689
  %v2691 = vand.u32 %v1945, 4294901760
  %2692 = vmatpush1.msra.mxu0 %v2691
  %v2693 = vand.u32 %v1948, 4294901760
  %2694 = vmatprep.subr.mxu0 %v2693
  %v2695 = vand.u32 %v1947, 4294901760
  %2696 = vmatpush1.msra.mxu0 %v2695
  %v2697 = vand.u32 %v1950, 4294901760
  %2698 = vmatprep.subr.mxu0 %v2697
  %v2699 = vand.u32 %v1949, 4294901760
  %2700 = vmatpush1.msra.mxu0 %v2699
  %v2701 = vand.u32 %v1952, 4294901760
  %2702 = vmatprep.subr.mxu0 %v2701
  %v2703 = vand.u32 %v1951, 4294901760
  %2704 = vmatpush1.msra.mxu0 %v2703
  %v2705 = vand.u32 %v1954, 4294901760
  %2706 = vmatprep.subr.mxu0 %v2705
  %v2707 = vand.u32 %v1953, 4294901760
  %2708 = vmatpush1.msra.mxu0 %v2707
  %v2709 = vand.u32 %v1956, 4294901760
  %2710 = vmatprep.subr.mxu0 %v2709
  %v2711 = vand.u32 %v1955, 4294901760
  %2712 = vmatpush1.msra.mxu0 %v2711
  %2713 = vmatprep.subr.mxu0 0.0
  %2714 = vmatpush1.msra.mxu0 0.0
  %2715 = vmatprep.subr.mxu0 0.0
  %2716 = vmatpush1.msra.mxu0 0.0
  %2717 = vmatprep.subr.mxu0 0.0
  %2718 = vmatpush1.msra.mxu0 0.0
  %2719 = vmatprep.subr.mxu0 0.0
  %2720 = vmatpush1.msra.mxu0 0.0
  %2721 = vmatprep.subr.mxu0 0.0
  %2722 = vmatpush1.msra.mxu0 0.0
  %2723 = vmatprep.subr.mxu0 0.0
  %2724 = vmatpush1.msra.mxu0 0.0
  %2725 = vmatprep.subr.mxu0 0.0
  %2726 = vmatpush1.msra.mxu0 0.0
  %2727 = vmatprep.subr.mxu0 0.0
  %2728 = vmatpush1.msra.mxu0 0.0
  %2729 = vmatprep.subr.mxu0 0.0
  %2730 = vmatpush1.msra.mxu0 0.0
  %2731 = vmatprep.subr.mxu0 0.0
  %2732 = vmatpush1.msra.mxu0 0.0
  %2733 = vmatprep.subr.mxu0 0.0
  %2734 = vmatpush1.msra.mxu0 0.0
  %2735 = vmatprep.subr.mxu0 0.0
  %2736 = vmatpush1.msra.mxu0 0.0
  %2737 = vmatprep.subr.mxu0 0.0
  %2738 = vmatpush1.msra.mxu0 0.0
  %2739 = vmatprep.subr.mxu0 0.0
  %2740 = vmatpush1.msra.mxu0 0.0
  %2741 = vmatprep.subr.mxu0 0.0
  %2742 = vmatpush1.msra.mxu0 0.0
  %2743 = vmatprep.subr.mxu0 0.0
  %2744 = vmatpush1.msra.mxu0 0.0
  %2745 = vmatprep.subr.mxu0 0.0
  %2746 = vmatpush1.msra.mxu0 0.0
  %2747 = vmatprep.subr.mxu0 0.0
  %2748 = vmatpush1.msra.mxu0 0.0
  %2749 = vmatprep.subr.mxu0 0.0
  %2750 = vmatpush1.msra.mxu0 0.0
  %2751 = vmatprep.subr.mxu0 0.0
  %2752 = vmatpush1.msra.mxu0 0.0
  %2753 = vmatprep.subr.mxu0 0.0
  %2754 = vmatpush1.msra.mxu0 0.0
  %2755 = vmatprep.subr.mxu0 0.0
  %2756 = vmatpush1.msra.mxu0 0.0
  %2757 = vmatprep.mubr.f32.mxu0 0.0
  %v2758 = vand.u32 %v2029, 4294901760
  %v2759 = vsub.f32 %v2029, %v2758
  %v2760 = vand.u32 %v2759, 4294901760
  %2761 = vmatmul.mubr.f32.gmra.mrb[0].mxu0 %v2760
  %v2762 = vpop.f32.mrb[0].mxu0
  %v2763 = vadd.f32 %v2597, %v2762
  %v2764 = vpop.f32.mrb[0].mxu0
  %v2765 = vadd.f32 %v2599, %v2764
  %2766 = vmatprep.mubr.f32.mxu0 0.0
  %v2767 = vand.u32 %v2032, 4294901760
  %v2768 = vsub.f32 %v2032, %v2767
  %v2769 = vand.u32 %v2768, 4294901760
  %2770 = vmatmul.mubr.f32.gmra.mrb[0].mxu0 %v2769
  %v2771 = vpop.f32.mrb[0].mxu0
  %v2772 = vadd.f32 %v2605, %v2771
  %v2773 = vpop.f32.mrb[0].mxu0
  %v2774 = vadd.f32 %v2607, %v2773
  %2775 = vmatprep.mubr.f32.mxu0 0.0
  %v2776 = vand.u32 %v2035, 4294901760
  %v2777 = vsub.f32 %v2035, %v2776
  %v2778 = vand.u32 %v2777, 4294901760
  %2779 = vmatmul.mubr.f32.gmra.mrb[0].mxu0 %v2778
  %v2780 = vpop.f32.mrb[0].mxu0
  %v2781 = vadd.f32 %v2613, %v2780
  %v2782 = vpop.f32.mrb[0].mxu0
  %v2783 = vadd.f32 %v2615, %v2782
  %2784 = vmatprep.mubr.f32.mxu0 0.0
  %v2785 = vand.u32 %v2038, 4294901760
  %v2786 = vsub.f32 %v2038, %v2785
  %v2787 = vand.u32 %v2786, 4294901760
  %2788 = vmatmul.mubr.f32.gmra.mrb[0].mxu0 %v2787
  %v2789 = vpop.f32.mrb[0].mxu0
  %v2790 = vadd.f32 %v2621, %v2789
  %v2791 = vpop.f32.mrb[0].mxu0
  %v2792 = vadd.f32 %v2623, %v2791
  %2793 = vmatprep.mubr.f32.mxu0 0.0
  %v2794 = vand.u32 %v2041, 4294901760
  %v2795 = vsub.f32 %v2041, %v2794
  %v2796 = vand.u32 %v2795, 4294901760
  %2797 = vmatmul.mubr.f32.gmra.mrb[0].mxu0 %v2796
  %v2798 = vpop.f32.mrb[0].mxu0
  %v2799 = vadd.f32 %v2629, %v2798
  %v2800 = vpop.f32.mrb[0].mxu0
  %v2801 = vadd.f32 %v2631, %v2800
  %2802 = vmatprep.mubr.f32.mxu0 0.0
  %v2803 = vand.u32 %v2044, 4294901760
  %v2804 = vsub.f32 %v2044, %v2803
  %v2805 = vand.u32 %v2804, 4294901760
  %2806 = vmatmul.mubr.f32.gmra.mrb[0].mxu0 %v2805
  %v2807 = vpop.f32.mrb[0].mxu0
  %v2808 = vadd.f32 %v2637, %v2807
  %v2809 = vpop.f32.mrb[0].mxu0
  %v2810 = vadd.f32 %v2639, %v2809
  %2811 = vmatprep.mubr.f32.mxu0 0.0
  %v2812 = vand.u32 %v2047, 4294901760
  %v2813 = vsub.f32 %v2047, %v2812
  %v2814 = vand.u32 %v2813, 4294901760
  %2815 = vmatmul.mubr.f32.gmra.mrb[0].mxu0 %v2814
  %v2816 = vpop.f32.mrb[0].mxu0
  %v2817 = vadd.f32 %v2645, %v2816
  %v2818 = vpop.f32.mrb[0].mxu0
  %v2819 = vadd.f32 %v2647, %v2818
  %2820 = vmatprep.mubr.f32.mxu0 0.0
  %v2821 = vand.u32 %v2050, 4294901760
  %v2822 = vsub.f32 %v2050, %v2821
  %v2823 = vand.u32 %v2822, 4294901760
  %2824 = vmatmul.mubr.f32.gmra.mrb[0].mxu0 %v2823
  %v2825 = vpop.f32.mrb[0].mxu0
  %v2826 = vadd.f32 %v2653, %v2825
  %v2827 = vpop.f32.mrb[0].mxu0
  %v2828 = vadd.f32 %v2655, %v2827
  %2829 = vmatprep.mubr.f32.mxu0 0.0
  %v2830 = vand.u32 %v2053, 4294901760
  %v2831 = vsub.f32 %v2053, %v2830
  %v2832 = vand.u32 %v2831, 4294901760
  %2833 = vmatmul.mubr.f32.gmra.mrb[0].mxu0 %v2832
  %v2834 = vpop.f32.mrb[0].mxu0
  %v2835 = vadd.f32 %v2661, %v2834
  %v2836 = vpop.f32.mrb[0].mxu0
  %v2837 = vadd.f32 %v2663, %v2836
  %2838 = vmatprep.mubr.f32.mxu0 0.0
  %v2839 = vand.u32 %v2056, 4294901760
  %v2840 = vsub.f32 %v2056, %v2839
  %v2841 = vand.u32 %v2840, 4294901760
  %2842 = vmatmul.mubr.f32.gmra.mrb[0].mxu0 %v2841
  %v2843 = vpop.f32.mrb[0].mxu0
  %v2844 = vadd.f32 %v2669, %v2843
  %v2845 = vpop.f32.mrb[0].mxu0
  %v2846 = vadd.f32 %v2671, %v2845
  %2847 = vdwg.mxu0
  %v2848 = vand.u32 %v1938, 4294901760
  %v2849 = vsub.f32 %v1938, %v2848
  %v2850 = vand.u32 %v2849, 4294901760
  %2851 = vmatprep.subr.mxu0 %v2850
  %v2852 = vand.u32 %v1937, 4294901760
  %v2853 = vsub.f32 %v1937, %v2852
  %v2854 = vand.u32 %v2853, 4294901760
  %2855 = vmatpush1.msra.mxu0 %v2854
  %v2856 = vand.u32 %v1940, 4294901760
  %v2857 = vsub.f32 %v1940, %v2856
  %v2858 = vand.u32 %v2857, 4294901760
  %2859 = vmatprep.subr.mxu0 %v2858
  %v2860 = vand.u32 %v1939, 4294901760
  %v2861 = vsub.f32 %v1939, %v2860
  %v2862 = vand.u32 %v2861, 4294901760
  %2863 = vmatpush1.msra.mxu0 %v2862
  %v2864 = vand.u32 %v1942, 4294901760
  %v2865 = vsub.f32 %v1942, %v2864
  %v2866 = vand.u32 %v2865, 4294901760
  %2867 = vmatprep.subr.mxu0 %v2866
  %v2868 = vand.u32 %v1941, 4294901760
  %v2869 = vsub.f32 %v1941, %v2868
  %v2870 = vand.u32 %v2869, 4294901760
  %2871 = vmatpush1.msra.mxu0 %v2870
  %v2872 = vand.u32 %v1944, 4294901760
  %v2873 = vsub.f32 %v1944, %v2872
  %v2874 = vand.u32 %v2873, 4294901760
  %2875 = vmatprep.subr.mxu0 %v2874
  %v2876 = vand.u32 %v1943, 4294901760
  %v2877 = vsub.f32 %v1943, %v2876
  %v2878 = vand.u32 %v2877, 4294901760
  %2879 = vmatpush1.msra.mxu0 %v2878
  %v2880 = vand.u32 %v1946, 4294901760
  %v2881 = vsub.f32 %v1946, %v2880
  %v2882 = vand.u32 %v2881, 4294901760
  %2883 = vmatprep.subr.mxu0 %v2882
  %v2884 = vand.u32 %v1945, 4294901760
  %v2885 = vsub.f32 %v1945, %v2884
  %v2886 = vand.u32 %v2885, 4294901760
  %2887 = vmatpush1.msra.mxu0 %v2886
  %v2888 = vand.u32 %v1948, 4294901760
  %v2889 = vsub.f32 %v1948, %v2888
  %v2890 = vand.u32 %v2889, 4294901760
  %2891 = vmatprep.subr.mxu0 %v2890
  %v2892 = vand.u32 %v1947, 4294901760
  %v2893 = vsub.f32 %v1947, %v2892
  %v2894 = vand.u32 %v2893, 4294901760
  %2895 = vmatpush1.msra.mxu0 %v2894
  %v2896 = vand.u32 %v1950, 4294901760
  %v2897 = vsub.f32 %v1950, %v2896
  %v2898 = vand.u32 %v2897, 4294901760
  %2899 = vmatprep.subr.mxu0 %v2898
  %v2900 = vand.u32 %v1949, 4294901760
  %v2901 = vsub.f32 %v1949, %v2900
  %v2902 = vand.u32 %v2901, 4294901760
  %2903 = vmatpush1.msra.mxu0 %v2902
  %v2904 = vand.u32 %v1952, 4294901760
  %v2905 = vsub.f32 %v1952, %v2904
  %v2906 = vand.u32 %v2905, 4294901760
  %2907 = vmatprep.subr.mxu0 %v2906
  %v2908 = vand.u32 %v1951, 4294901760
  %v2909 = vsub.f32 %v1951, %v2908
  %v2910 = vand.u32 %v2909, 4294901760
  %2911 = vmatpush1.msra.mxu0 %v2910
  %v2912 = vand.u32 %v1954, 4294901760
  %v2913 = vsub.f32 %v1954, %v2912
  %v2914 = vand.u32 %v2913, 4294901760
  %2915 = vmatprep.subr.mxu0 %v2914
  %v2916 = vand.u32 %v1953, 4294901760
  %v2917 = vsub.f32 %v1953, %v2916
  %v2918 = vand.u32 %v2917, 4294901760
  %2919 = vmatpush1.msra.mxu0 %v2918
  %v2920 = vand.u32 %v1956, 4294901760
  %v2921 = vsub.f32 %v1956, %v2920
  %v2922 = vand.u32 %v2921, 4294901760
  %2923 = vmatprep.subr.mxu0 %v2922
  %v2924 = vand.u32 %v1955, 4294901760
  %v2925 = vsub.f32 %v1955, %v2924
  %v2926 = vand.u32 %v2925, 4294901760
  %2927 = vmatpush1.msra.mxu0 %v2926
  %2928 = vmatprep.subr.mxu0 0.0
  %2929 = vmatpush1.msra.mxu0 0.0
  %2930 = vmatprep.subr.mxu0 0.0
  %2931 = vmatpush1.msra.mxu0 0.0
  %2932 = vmatprep.subr.mxu0 0.0
  %2933 = vmatpush1.msra.mxu0 0.0
  %2934 = vmatprep.subr.mxu0 0.0
  %2935 = vmatpush1.msra.mxu0 0.0
  %2936 = vmatprep.subr.mxu0 0.0
  %2937 = vmatpush1.msra.mxu0 0.0
  %2938 = vmatprep.subr.mxu0 0.0
  %2939 = vmatpush1.msra.mxu0 0.0
  %2940 = vmatprep.subr.mxu0 0.0
  %2941 = vmatpush1.msra.mxu0 0.0
  %2942 = vmatprep.subr.mxu0 0.0
  %2943 = vmatpush1.msra.mxu0 0.0
  %2944 = vmatprep.subr.mxu0 0.0
  %2945 = vmatpush1.msra.mxu0 0.0
  %2946 = vmatprep.subr.mxu0 0.0
  %2947 = vmatpush1.msra.mxu0 0.0
  %2948 = vmatprep.subr.mxu0 0.0
  %2949 = vmatpush1.msra.mxu0 0.0
  %2950 = vmatprep.subr.mxu0 0.0
  %2951 = vmatpush1.msra.mxu0 0.0
  %2952 = vmatprep.subr.mxu0 0.0
  %2953 = vmatpush1.msra.mxu0 0.0
  %2954 = vmatprep.subr.mxu0 0.0
  %2955 = vmatpush1.msra.mxu0 0.0
  %2956 = vmatprep.subr.mxu0 0.0
  %2957 = vmatpush1.msra.mxu0 0.0
  %2958 = vmatprep.subr.mxu0 0.0
  %2959 = vmatpush1.msra.mxu0 0.0
  %2960 = vmatprep.subr.mxu0 0.0
  %2961 = vmatpush1.msra.mxu0 0.0
  %2962 = vmatprep.subr.mxu0 0.0
  %2963 = vmatpush1.msra.mxu0 0.0
  %2964 = vmatprep.subr.mxu0 0.0
  %2965 = vmatpush1.msra.mxu0 0.0
  %2966 = vmatprep.subr.mxu0 0.0
  %2967 = vmatpush1.msra.mxu0 0.0
  %2968 = vmatprep.subr.mxu0 0.0
  %2969 = vmatpush1.msra.mxu0 0.0
  %2970 = vmatprep.subr.mxu0 0.0
  %2971 = vmatpush1.msra.mxu0 0.0
  %2972 = vmatprep.mubr.f32.mxu0 0.0
  %v2973 = vand.u32 %v2029, 4294901760
  %2974 = vmatmul.mubr.f32.gmra.mrb[0].mxu0 %v2973
  %v2975 = vpop.f32.mrb[0].mxu0
  %v2976 = vadd.f32 %v2763, %v2975
  %v2977 = vpop.f32.mrb[0].mxu0
  %v2978 = vadd.f32 %v2765, %v2977
  %2979 = vmatprep.mubr.f32.mxu0 0.0
  %v2980 = vand.u32 %v2032, 4294901760
  %2981 = vmatmul.mubr.f32.gmra.mrb[0].mxu0 %v2980
  %v2982 = vpop.f32.mrb[0].mxu0
  %v2983 = vadd.f32 %v2772, %v2982
  %v2984 = vpop.f32.mrb[0].mxu0
  %v2985 = vadd.f32 %v2774, %v2984
  %2986 = vmatprep.mubr.f32.mxu0 0.0
  %v2987 = vand.u32 %v2035, 4294901760
  %2988 = vmatmul.mubr.f32.gmra.mrb[0].mxu0 %v2987
  %v2989 = vpop.f32.mrb[0].mxu0
  %v2990 = vadd.f32 %v2781, %v2989
  %v2991 = vpop.f32.mrb[0].mxu0
  %v2992 = vadd.f32 %v2783, %v2991
  %2993 = vmatprep.mubr.f32.mxu0 0.0
  %v2994 = vand.u32 %v2038, 4294901760
  %2995 = vmatmul.mubr.f32.gmra.mrb[0].mxu0 %v2994
  %v2996 = vpop.f32.mrb[0].mxu0
  %v2997 = vadd.f32 %v2790, %v2996
  %v2998 = vpop.f32.mrb[0].mxu0
  %v2999 = vadd.f32 %v2792, %v2998
  %3000 = vmatprep.mubr.f32.mxu0 0.0
  %v3001 = vand.u32 %v2041, 4294901760
  %3002 = vmatmul.mubr.f32.gmra.mrb[0].mxu0 %v3001
  %v3003 = vpop.f32.mrb[0].mxu0
  %v3004 = vadd.f32 %v2799, %v3003
  %v3005 = vpop.f32.mrb[0].mxu0
  %v3006 = vadd.f32 %v2801, %v3005
  %3007 = vmatprep.mubr.f32.mxu0 0.0
  %v3008 = vand.u32 %v2044, 4294901760
  %3009 = vmatmul.mubr.f32.gmra.mrb[0].mxu0 %v3008
  %v3010 = vpop.f32.mrb[0].mxu0
  %v3011 = vadd.f32 %v2808, %v3010
  %v3012 = vpop.f32.mrb[0].mxu0
  %v3013 = vadd.f32 %v2810, %v3012
  %3014 = vmatprep.mubr.f32.mxu0 0.0
  %v3015 = vand.u32 %v2047, 4294901760
  %3016 = vmatmul.mubr.f32.gmra.mrb[0].mxu0 %v3015
  %v3017 = vpop.f32.mrb[0].mxu0
  %v3018 = vadd.f32 %v2817, %v3017
  %v3019 = vpop.f32.mrb[0].mxu0
  %v3020 = vadd.f32 %v2819, %v3019
  %3021 = vmatprep.mubr.f32.mxu0 0.0
  %v3022 = vand.u32 %v2050, 4294901760
  %3023 = vmatmul.mubr.f32.gmra.mrb[0].mxu0 %v3022
  %v3024 = vpop.f32.mrb[0].mxu0
  %v3025 = vadd.f32 %v2826, %v3024
  %v3026 = vpop.f32.mrb[0].mxu0
  %v3027 = vadd.f32 %v2828, %v3026
  %3028 = vmatprep.mubr.f32.mxu0 0.0
  %v3029 = vand.u32 %v2053, 4294901760
  %3030 = vmatmul.mubr.f32.gmra.mrb[0].mxu0 %v3029
  %v3031 = vpop.f32.mrb[0].mxu0
  %v3032 = vadd.f32 %v2835, %v3031
  %v3033 = vpop.f32.mrb[0].mxu0
  %v3034 = vadd.f32 %v2837, %v3033
  %3035 = vmatprep.mubr.f32.mxu0 0.0
  %v3036 = vand.u32 %v2056, 4294901760
  %3037 = vmatmul.mubr.f32.gmra.mrb[0].mxu0 %v3036
  %v3038 = vpop.f32.mrb[0].mxu0
  %v3039 = vadd.f32 %v2844, %v3038
  %v3040 = vpop.f32.mrb[0].mxu0
  %v3041 = vadd.f32 %v2846, %v3040
  %3042 = vdwg.mxu0
  %v3043 = vand.u32 %v1938, 4294901760
  %3044 = vmatprep.subr.mxu0 %v3043
  %v3045 = vand.u32 %v1937, 4294901760
  %3046 = vmatpush1.msra.mxu0 %v3045
  %v3047 = vand.u32 %v1940, 4294901760
  %3048 = vmatprep.subr.mxu0 %v3047
  %v3049 = vand.u32 %v1939, 4294901760
  %3050 = vmatpush1.msra.mxu0 %v3049
  %v3051 = vand.u32 %v1942, 4294901760
  %3052 = vmatprep.subr.mxu0 %v3051
  %v3053 = vand.u32 %v1941, 4294901760
  %3054 = vmatpush1.msra.mxu0 %v3053
  %v3055 = vand.u32 %v1944, 4294901760
  %3056 = vmatprep.subr.mxu0 %v3055
  %v3057 = vand.u32 %v1943, 4294901760
  %3058 = vmatpush1.msra.mxu0 %v3057
  %v3059 = vand.u32 %v1946, 4294901760
  %3060 = vmatprep.subr.mxu0 %v3059
  %v3061 = vand.u32 %v1945, 4294901760
  %3062 = vmatpush1.msra.mxu0 %v3061
  %v3063 = vand.u32 %v1948, 4294901760
  %3064 = vmatprep.subr.mxu0 %v3063
  %v3065 = vand.u32 %v1947, 4294901760
  %3066 = vmatpush1.msra.mxu0 %v3065
  %v3067 = vand.u32 %v1950, 4294901760
  %3068 = vmatprep.subr.mxu0 %v3067
  %v3069 = vand.u32 %v1949, 4294901760
  %3070 = vmatpush1.msra.mxu0 %v3069
  %v3071 = vand.u32 %v1952, 4294901760
  %3072 = vmatprep.subr.mxu0 %v3071
  %v3073 = vand.u32 %v1951, 4294901760
  %3074 = vmatpush1.msra.mxu0 %v3073
  %v3075 = vand.u32 %v1954, 4294901760
  %3076 = vmatprep.subr.mxu0 %v3075
  %v3077 = vand.u32 %v1953, 4294901760
  %3078 = vmatpush1.msra.mxu0 %v3077
  %v3079 = vand.u32 %v1956, 4294901760
  %3080 = vmatprep.subr.mxu0 %v3079
  %v3081 = vand.u32 %v1955, 4294901760
  %3082 = vmatpush1.msra.mxu0 %v3081
  %3083 = vmatprep.subr.mxu0 0.0
  %3084 = vmatpush1.msra.mxu0 0.0
  %3085 = vmatprep.subr.mxu0 0.0
  %3086 = vmatpush1.msra.mxu0 0.0
  %3087 = vmatprep.subr.mxu0 0.0
  %3088 = vmatpush1.msra.mxu0 0.0
  %3089 = vmatprep.subr.mxu0 0.0
  %3090 = vmatpush1.msra.mxu0 0.0
  %3091 = vmatprep.subr.mxu0 0.0
  %3092 = vmatpush1.msra.mxu0 0.0
  %3093 = vmatprep.subr.mxu0 0.0
  %3094 = vmatpush1.msra.mxu0 0.0
  %3095 = vmatprep.subr.mxu0 0.0
  %3096 = vmatpush1.msra.mxu0 0.0
  %3097 = vmatprep.subr.mxu0 0.0
  %3098 = vmatpush1.msra.mxu0 0.0
  %3099 = vmatprep.subr.mxu0 0.0
  %3100 = vmatpush1.msra.mxu0 0.0
  %3101 = vmatprep.subr.mxu0 0.0
  %3102 = vmatpush1.msra.mxu0 0.0
  %3103 = vmatprep.subr.mxu0 0.0
  %3104 = vmatpush1.msra.mxu0 0.0
  %3105 = vmatprep.subr.mxu0 0.0
  %3106 = vmatpush1.msra.mxu0 0.0
  %3107 = vmatprep.subr.mxu0 0.0
  %3108 = vmatpush1.msra.mxu0 0.0
  %3109 = vmatprep.subr.mxu0 0.0
  %3110 = vmatpush1.msra.mxu0 0.0
  %3111 = vmatprep.subr.mxu0 0.0
  %3112 = vmatpush1.msra.mxu0 0.0
  %3113 = vmatprep.subr.mxu0 0.0
  %3114 = vmatpush1.msra.mxu0 0.0
  %3115 = vmatprep.subr.mxu0 0.0
  %3116 = vmatpush1.msra.mxu0 0.0
  %3117 = vmatprep.subr.mxu0 0.0
  %3118 = vmatpush1.msra.mxu0 0.0
  %3119 = vmatprep.subr.mxu0 0.0
  %3120 = vmatpush1.msra.mxu0 0.0
  %3121 = vmatprep.subr.mxu0 0.0
  %3122 = vmatpush1.msra.mxu0 0.0
  %3123 = vmatprep.subr.mxu0 0.0
  %3124 = vmatpush1.msra.mxu0 0.0
  %3125 = vmatprep.subr.mxu0 0.0
  %3126 = vmatpush1.msra.mxu0 0.0
  %3127 = vmatprep.mubr.f32.mxu0 0.0
  %v3128 = vand.u32 %v2029, 4294901760
  %3129 = vmatmul.mubr.f32.gmra.mrb[0].mxu0 %v3128
  %v3130 = vpop.f32.mrb[0].mxu0
  %v3131 = vadd.f32 %v2976, %v3130
  %v3132 = vpop.f32.mrb[0].mxu0
  %v3133 = vadd.f32 %v2978, %v3132
  %3134 = vmatprep.mubr.f32.mxu0 0.0
  %v3135 = vand.u32 %v2032, 4294901760
  %3136 = vmatmul.mubr.f32.gmra.mrb[0].mxu0 %v3135
  %v3137 = vpop.f32.mrb[0].mxu0
  %v3138 = vadd.f32 %v2983, %v3137
  %v3139 = vpop.f32.mrb[0].mxu0
  %v3140 = vadd.f32 %v2985, %v3139
  %3141 = vmatprep.mubr.f32.mxu0 0.0
  %v3142 = vand.u32 %v2035, 4294901760
  %3143 = vmatmul.mubr.f32.gmra.mrb[0].mxu0 %v3142
  %v3144 = vpop.f32.mrb[0].mxu0
  %v3145 = vadd.f32 %v2990, %v3144
  %v3146 = vpop.f32.mrb[0].mxu0
  %v3147 = vadd.f32 %v2992, %v3146
  %3148 = vmatprep.mubr.f32.mxu0 0.0
  %v3149 = vand.u32 %v2038, 4294901760
  %3150 = vmatmul.mubr.f32.gmra.mrb[0].mxu0 %v3149
  %v3151 = vpop.f32.mrb[0].mxu0
  %v3152 = vadd.f32 %v2997, %v3151
  %v3153 = vpop.f32.mrb[0].mxu0
  %v3154 = vadd.f32 %v2999, %v3153
  %3155 = vmatprep.mubr.f32.mxu0 0.0
  %v3156 = vand.u32 %v2041, 4294901760
  %3157 = vmatmul.mubr.f32.gmra.mrb[0].mxu0 %v3156
  %v3158 = vpop.f32.mrb[0].mxu0
  %v3159 = vadd.f32 %v3004, %v3158
  %v3160 = vpop.f32.mrb[0].mxu0
  %v3161 = vadd.f32 %v3006, %v3160
  %3162 = vmatprep.mubr.f32.mxu0 0.0
  %v3163 = vand.u32 %v2044, 4294901760
  %3164 = vmatmul.mubr.f32.gmra.mrb[0].mxu0 %v3163
  %v3165 = vpop.f32.mrb[0].mxu0
  %v3166 = vadd.f32 %v3011, %v3165
  %v3167 = vpop.f32.mrb[0].mxu0
  %v3168 = vadd.f32 %v3013, %v3167
  %3169 = vmatprep.mubr.f32.mxu0 0.0
  %v3170 = vand.u32 %v2047, 4294901760
  %3171 = vmatmul.mubr.f32.gmra.mrb[0].mxu0 %v3170
  %v3172 = vpop.f32.mrb[0].mxu0
  %v3173 = vadd.f32 %v3018, %v3172
  %v3174 = vpop.f32.mrb[0].mxu0
  %v3175 = vadd.f32 %v3020, %v3174
  %3176 = vmatprep.mubr.f32.mxu0 0.0
  %v3177 = vand.u32 %v2050, 4294901760
  %3178 = vmatmul.mubr.f32.gmra.mrb[0].mxu0 %v3177
  %v3179 = vpop.f32.mrb[0].mxu0
  %v3180 = vadd.f32 %v3025, %v3179
  %v3181 = vpop.f32.mrb[0].mxu0
  %v3182 = vadd.f32 %v3027, %v3181
  %3183 = vmatprep.mubr.f32.mxu0 0.0
  %v3184 = vand.u32 %v2053, 4294901760
  %3185 = vmatmul.mubr.f32.gmra.mrb[0].mxu0 %v3184
  %v3186 = vpop.f32.mrb[0].mxu0
  %v3187 = vadd.f32 %v3032, %v3186
  %v3188 = vpop.f32.mrb[0].mxu0
  %v3189 = vadd.f32 %v3034, %v3188
  %3190 = vmatprep.mubr.f32.mxu0 0.0
  %v3191 = vand.u32 %v2056, 4294901760
  %3192 = vmatmul.mubr.f32.gmra.mrb[0].mxu0 %v3191
  %v3193 = vpop.f32.mrb[0].mxu0
  %v3194 = vadd.f32 %v3039, %v3193
  %v3195 = vpop.f32.mrb[0].mxu0
  %v3196 = vadd.f32 %v3041, %v3195
  %3197 = vdwg.mxu0
  %vm3198 = vcmp.gt.f32.partialorder %v3131, 0.0
  %vm3199 = vcmp.gt.f32.partialorder %v3133, 0.0
  %vm3200 = vcmp.gt.f32.partialorder %v3138, 0.0
  %vm3201 = vcmp.gt.f32.partialorder %v3140, 0.0
  %vm3202 = vcmp.gt.f32.partialorder %v3145, 0.0
  %vm3203 = vcmp.gt.f32.partialorder %v3147, 0.0
  %vm3204 = vcmp.gt.f32.partialorder %v3152, 0.0
  %vm3205 = vcmp.gt.f32.partialorder %v3154, 0.0
  %vm3206 = vcmp.gt.f32.partialorder %v3159, 0.0
  %vm3207 = vcmp.gt.f32.partialorder %v3161, 0.0
  %vm3208 = vcmp.gt.f32.partialorder %v3166, 0.0
  %vm3209 = vcmp.gt.f32.partialorder %v3168, 0.0
  %vm3210 = vcmp.gt.f32.partialorder %v3173, 0.0
  %vm3211 = vcmp.gt.f32.partialorder %v3175, 0.0
  %vm3212 = vcmp.gt.f32.partialorder %v3180, 0.0
  %vm3213 = vcmp.gt.f32.partialorder %v3182, 0.0
  %vm3214 = vcmp.gt.f32.partialorder %v3187, 0.0
  %vm3215 = vcmp.gt.f32.partialorder %v3189, 0.0
  %vm3216 = vcmp.gt.f32.partialorder %v3194, 0.0
  %vm3217 = vcmp.gt.f32.partialorder %v3196, 0.0
  %v3218 = vmul.f32 %v3131, 0.01
  %v3219 = vmul.f32 %v3133, 0.01
  %v3220 = vmul.f32 %v3138, 0.01
  %v3221 = vmul.f32 %v3140, 0.01
  %v3222 = vmul.f32 %v3145, 0.01
  %v3223 = vmul.f32 %v3147, 0.01
  %v3224 = vmul.f32 %v3152, 0.01
  %v3225 = vmul.f32 %v3154, 0.01
  %v3226 = vmul.f32 %v3159, 0.01
  %v3227 = vmul.f32 %v3161, 0.01
  %v3228 = vmul.f32 %v3166, 0.01
  %v3229 = vmul.f32 %v3168, 0.01
  %v3230 = vmul.f32 %v3173, 0.01
  %v3231 = vmul.f32 %v3175, 0.01
  %v3232 = vmul.f32 %v3180, 0.01
  %v3233 = vmul.f32 %v3182, 0.01
  %v3234 = vmul.f32 %v3187, 0.01
  %v3235 = vmul.f32 %v3189, 0.01
  %v3236 = vmul.f32 %v3194, 0.01
  %v3237 = vmul.f32 %v3196, 0.01
  %v3238 = vsel %vm3198, %v3131, %v3218
  %v3239 = vsel %vm3199, %v3133, %v3219
  %v3240 = vsel %vm3200, %v3138, %v3220
  %v3241 = vsel %vm3201, %v3140, %v3221
  %v3242 = vsel %vm3202, %v3145, %v3222
  %v3243 = vsel %vm3203, %v3147, %v3223
  %v3244 = vsel %vm3204, %v3152, %v3224
  %v3245 = vsel %vm3205, %v3154, %v3225
  %v3246 = vsel %vm3206, %v3159, %v3226
  %v3247 = vsel %vm3207, %v3161, %v3227
  %v3248 = vsel %vm3208, %v3166, %v3228
  %v3249 = vsel %vm3209, %v3168, %v3229
  %v3250 = vsel %vm3210, %v3173, %v3230
  %v3251 = vsel %vm3211, %v3175, %v3231
  %v3252 = vsel %vm3212, %v3180, %v3232
  %v3253 = vsel %vm3213, %v3182, %v3233
  %v3254 = vsel %vm3214, %v3187, %v3234
  %v3255 = vsel %vm3215, %v3189, %v3235
  %v3256 = vsel %vm3216, %v3194, %v3236
  %v3257 = vsel %vm3217, %v3196, %v3237
  %v3258 = vld [vmem:[%s6] sm:$0xff]
  %v3259 = vld [vmem:[%s6 + $0x8] sm:$0xff]
  %v3260 = vld [vmem:[%s6 + $0x10] sm:$0xff]
  %v3261 = vld [vmem:[%s6 + $0x18] sm:$0xff]
  %v3262 = vld [vmem:[%s6 + $0x20] sm:$0xff]
  %v3263 = vld [vmem:[%s7] sm:$0xff]
  %v3264 = vld [vmem:[%s7 + $0x8] sm:$0xff]
  %v3265 = vld [vmem:[%s7 + $0x10] sm:$0xff]
  %v3266 = vld [vmem:[%s7 + $0x18] sm:$0xff]
  %v3267 = vld [vmem:[%s7 + $0x20] sm:$0xff]
  %3269 = vset.pattern.permute.xlu0 0
  %3270 = vperm.xlu0 %3269, %v3263
  %v3271 = vpop.permute.xlu0 %3270
  %3274 = vset.pattern.permute.xlu0 0
  %3275 = vperm.xlu0 %3274, %v3264
  %v3276 = vpop.permute.xlu0 %3275
  %3279 = vset.pattern.permute.xlu0 0
  %3280 = vperm.xlu0 %3279, %v3265
  %v3281 = vpop.permute.xlu0 %3280
  %3284 = vset.pattern.permute.xlu0 0
  %3285 = vperm.xlu0 %3284, %v3266
  %v3286 = vpop.permute.xlu0 %3285
  %3289 = vset.pattern.permute.xlu0 0
  %3290 = vperm.xlu0 %3289, %v3267
  %v3291 = vpop.permute.xlu0 %3290
  %v3294 = vsel %vm2027, %v3258, 0
  %v3297 = vsel %vm2027, %v3259, 0
  %v3300 = vsel %vm2027, %v3260, 0
  %v3303 = vsel %vm2027, %v3261, 0
  %v3306 = vsel %vm2027, %v3262, 0
  %v3308 = vand.u32 %v3239, 4294901760
  %3309 = vmatprep.subr.mxu0 %v3308
  %v3310 = vand.u32 %v3238, 4294901760
  %3311 = vmatpush1.msra.mxu0 %v3310
  %v3312 = vand.u32 %v3241, 4294901760
  %3313 = vmatprep.subr.mxu0 %v3312
  %v3314 = vand.u32 %v3240, 4294901760
  %3315 = vmatpush1.msra.mxu0 %v3314
  %v3316 = vand.u32 %v3243, 4294901760
  %3317 = vmatprep.subr.mxu0 %v3316
  %v3318 = vand.u32 %v3242, 4294901760
  %3319 = vmatpush1.msra.mxu0 %v3318
  %v3320 = vand.u32 %v3245, 4294901760
  %3321 = vmatprep.subr.mxu0 %v3320
  %v3322 = vand.u32 %v3244, 4294901760
  %3323 = vmatpush1.msra.mxu0 %v3322
  %v3324 = vand.u32 %v3247, 4294901760
  %3325 = vmatprep.subr.mxu0 %v3324
  %v3326 = vand.u32 %v3246, 4294901760
  %3327 = vmatpush1.msra.mxu0 %v3326
  %v3328 = vand.u32 %v3249, 4294901760
  %3329 = vmatprep.subr.mxu0 %v3328
  %v3330 = vand.u32 %v3248, 4294901760
  %3331 = vmatpush1.msra.mxu0 %v3330
  %v3332 = vand.u32 %v3251, 4294901760
  %3333 = vmatprep.subr.mxu0 %v3332
  %v3334 = vand.u32 %v3250, 4294901760
  %3335 = vmatpush1.msra.mxu0 %v3334
  %v3336 = vand.u32 %v3253, 4294901760
  %3337 = vmatprep.subr.mxu0 %v3336
  %v3338 = vand.u32 %v3252, 4294901760
  %3339 = vmatpush1.msra.mxu0 %v3338
  %v3340 = vand.u32 %v3255, 4294901760
  %3341 = vmatprep.subr.mxu0 %v3340
  %v3342 = vand.u32 %v3254, 4294901760
  %3343 = vmatpush1.msra.mxu0 %v3342
  %v3344 = vand.u32 %v3257, 4294901760
  %3345 = vmatprep.subr.mxu0 %v3344
  %v3346 = vand.u32 %v3256, 4294901760
  %3347 = vmatpush1.msra.mxu0 %v3346
  %3348 = vmatprep.subr.mxu0 0.0
  %3349 = vmatpush1.msra.mxu0 0.0
  %3350 = vmatprep.subr.mxu0 0.0
  %3351 = vmatpush1.msra.mxu0 0.0
  %3352 = vmatprep.subr.mxu0 0.0
  %3353 = vmatpush1.msra.mxu0 0.0
  %3354 = vmatprep.subr.mxu0 0.0
  %3355 = vmatpush1.msra.mxu0 0.0
  %3356 = vmatprep.subr.mxu0 0.0
  %3357 = vmatpush1.msra.mxu0 0.0
  %3358 = vmatprep.subr.mxu0 0.0
  %3359 = vmatpush1.msra.mxu0 0.0
  %3360 = vmatprep.subr.mxu0 0.0
  %3361 = vmatpush1.msra.mxu0 0.0
  %3362 = vmatprep.subr.mxu0 0.0
  %3363 = vmatpush1.msra.mxu0 0.0
  %3364 = vmatprep.subr.mxu0 0.0
  %3365 = vmatpush1.msra.mxu0 0.0
  %3366 = vmatprep.subr.mxu0 0.0
  %3367 = vmatpush1.msra.mxu0 0.0
  %3368 = vmatprep.subr.mxu0 0.0
  %3369 = vmatpush1.msra.mxu0 0.0
  %3370 = vmatprep.subr.mxu0 0.0
  %3371 = vmatpush1.msra.mxu0 0.0
  %3372 = vmatprep.subr.mxu0 0.0
  %3373 = vmatpush1.msra.mxu0 0.0
  %3374 = vmatprep.subr.mxu0 0.0
  %3375 = vmatpush1.msra.mxu0 0.0
  %3376 = vmatprep.subr.mxu0 0.0
  %3377 = vmatpush1.msra.mxu0 0.0
  %3378 = vmatprep.subr.mxu0 0.0
  %3379 = vmatpush1.msra.mxu0 0.0
  %3380 = vmatprep.subr.mxu0 0.0
  %3381 = vmatpush1.msra.mxu0 0.0
  %3382 = vmatprep.subr.mxu0 0.0
  %3383 = vmatpush1.msra.mxu0 0.0
  %3384 = vmatprep.subr.mxu0 0.0
  %3385 = vmatpush1.msra.mxu0 0.0
  %3386 = vmatprep.subr.mxu0 0.0
  %3387 = vmatpush1.msra.mxu0 0.0
  %3388 = vmatprep.subr.mxu0 0.0
  %3389 = vmatpush1.msra.mxu0 0.0
  %3390 = vmatprep.subr.mxu0 0.0
  %3391 = vmatpush1.msra.mxu0 0.0
  %3392 = vmatprep.mubr.f32.mxu0 0.0
  %v3393 = vand.u32 %v3294, 4294901760
  %v3394 = vsub.f32 %v3294, %v3393
  %v3395 = vand.u32 %v3394, 4294901760
  %v3396 = vsub.f32 %v3394, %v3395
  %v3397 = vand.u32 %v3396, 4294901760
  %3398 = vmatmul.mubr.f32.gmra.mrb[0].mxu0 %v3397
  %v3399 = vpop.f32.mrb[0].mxu0
  %v3400 = vadd.f32 %v3271, %v3399
  %v3401 = vpop.f32.mrb[0].mxu0
  %v3402 = vadd.f32 %v3271, %v3401
  %3403 = vmatprep.mubr.f32.mxu0 0.0
  %v3404 = vand.u32 %v3297, 4294901760
  %v3405 = vsub.f32 %v3297, %v3404
  %v3406 = vand.u32 %v3405, 4294901760
  %v3407 = vsub.f32 %v3405, %v3406
  %v3408 = vand.u32 %v3407, 4294901760
  %3409 = vmatmul.mubr.f32.gmra.mrb[0].mxu0 %v3408
  %v3410 = vpop.f32.mrb[0].mxu0
  %v3411 = vadd.f32 %v3276, %v3410
  %v3412 = vpop.f32.mrb[0].mxu0
  %v3413 = vadd.f32 %v3276, %v3412
  %3414 = vmatprep.mubr.f32.mxu0 0.0
  %v3415 = vand.u32 %v3300, 4294901760
  %v3416 = vsub.f32 %v3300, %v3415
  %v3417 = vand.u32 %v3416, 4294901760
  %v3418 = vsub.f32 %v3416, %v3417
  %v3419 = vand.u32 %v3418, 4294901760
  %3420 = vmatmul.mubr.f32.gmra.mrb[0].mxu0 %v3419
  %v3421 = vpop.f32.mrb[0].mxu0
  %v3422 = vadd.f32 %v3281, %v3421
  %v3423 = vpop.f32.mrb[0].mxu0
  %v3424 = vadd.f32 %v3281, %v3423
  %3425 = vmatprep.mubr.f32.mxu0 0.0
  %v3426 = vand.u32 %v3303, 4294901760
  %v3427 = vsub.f32 %v3303, %v3426
  %v3428 = vand.u32 %v3427, 4294901760
  %v3429 = vsub.f32 %v3427, %v3428
  %v3430 = vand.u32 %v3429, 4294901760
  %3431 = vmatmul.mubr.f32.gmra.mrb[0].mxu0 %v3430
  %v3432 = vpop.f32.mrb[0].mxu0
  %v3433 = vadd.f32 %v3286, %v3432
  %v3434 = vpop.f32.mrb[0].mxu0
  %v3435 = vadd.f32 %v3286, %v3434
  %3436 = vmatprep.mubr.f32.mxu0 0.0
  %v3437 = vand.u32 %v3306, 4294901760
  %v3438 = vsub.f32 %v3306, %v3437
  %v3439 = vand.u32 %v3438, 4294901760
  %v3440 = vsub.f32 %v3438, %v3439
  %v3441 = vand.u32 %v3440, 4294901760
  %3442 = vmatmul.mubr.f32.gmra.mrb[0].mxu0 %v3441
  %v3443 = vpop.f32.mrb[0].mxu0
  %v3444 = vadd.f32 %v3291, %v3443
  %v3445 = vpop.f32.mrb[0].mxu0
  %v3446 = vadd.f32 %v3291, %v3445
  %3447 = vdwg.mxu0
  %v3448 = vand.u32 %v3239, 4294901760
  %v3449 = vsub.f32 %v3239, %v3448
  %v3450 = vand.u32 %v3449, 4294901760
  %v3451 = vsub.f32 %v3449, %v3450
  %v3452 = vand.u32 %v3451, 4294901760
  %3453 = vmatprep.subr.mxu0 %v3452
  %v3454 = vand.u32 %v3238, 4294901760
  %v3455 = vsub.f32 %v3238, %v3454
  %v3456 = vand.u32 %v3455, 4294901760
  %v3457 = vsub.f32 %v3455, %v3456
  %v3458 = vand.u32 %v3457, 4294901760
  %3459 = vmatpush1.msra.mxu0 %v3458
  %v3460 = vand.u32 %v3241, 4294901760
  %v3461 = vsub.f32 %v3241, %v3460
  %v3462 = vand.u32 %v3461, 4294901760
  %v3463 = vsub.f32 %v3461, %v3462
  %v3464 = vand.u32 %v3463, 4294901760
  %3465 = vmatprep.subr.mxu0 %v3464
  %v3466 = vand.u32 %v3240, 4294901760
  %v3467 = vsub.f32 %v3240, %v3466
  %v3468 = vand.u32 %v3467, 4294901760
  %v3469 = vsub.f32 %v3467, %v3468
  %v3470 = vand.u32 %v3469, 4294901760
  %3471 = vmatpush1.msra.mxu0 %v3470
  %v3472 = vand.u32 %v3243, 4294901760
  %v3473 = vsub.f32 %v3243, %v3472
  %v3474 = vand.u32 %v3473, 4294901760
  %v3475 = vsub.f32 %v3473, %v3474
  %v3476 = vand.u32 %v3475, 4294901760
  %3477 = vmatprep.subr.mxu0 %v3476
  %v3478 = vand.u32 %v3242, 4294901760
  %v3479 = vsub.f32 %v3242, %v3478
  %v3480 = vand.u32 %v3479, 4294901760
  %v3481 = vsub.f32 %v3479, %v3480
  %v3482 = vand.u32 %v3481, 4294901760
  %3483 = vmatpush1.msra.mxu0 %v3482
  %v3484 = vand.u32 %v3245, 4294901760
  %v3485 = vsub.f32 %v3245, %v3484
  %v3486 = vand.u32 %v3485, 4294901760
  %v3487 = vsub.f32 %v3485, %v3486
  %v3488 = vand.u32 %v3487, 4294901760
  %3489 = vmatprep.subr.mxu0 %v3488
  %v3490 = vand.u32 %v3244, 4294901760
  %v3491 = vsub.f32 %v3244, %v3490
  %v3492 = vand.u32 %v3491, 4294901760
  %v3493 = vsub.f32 %v3491, %v3492
  %v3494 = vand.u32 %v3493, 4294901760
  %3495 = vmatpush1.msra.mxu0 %v3494
  %v3496 = vand.u32 %v3247, 4294901760
  %v3497 = vsub.f32 %v3247, %v3496
  %v3498 = vand.u32 %v3497, 4294901760
  %v3499 = vsub.f32 %v3497, %v3498
  %v3500 = vand.u32 %v3499, 4294901760
  %3501 = vmatprep.subr.mxu0 %v3500
  %v3502 = vand.u32 %v3246, 4294901760
  %v3503 = vsub.f32 %v3246, %v3502
  %v3504 = vand.u32 %v3503, 4294901760
  %v3505 = vsub.f32 %v3503, %v3504
  %v3506 = vand.u32 %v3505, 4294901760
  %3507 = vmatpush1.msra.mxu0 %v3506
  %v3508 = vand.u32 %v3249, 4294901760
  %v3509 = vsub.f32 %v3249, %v3508
  %v3510 = vand.u32 %v3509, 4294901760
  %v3511 = vsub.f32 %v3509, %v3510
  %v3512 = vand.u32 %v3511, 4294901760
  %3513 = vmatprep.subr.mxu0 %v3512
  %v3514 = vand.u32 %v3248, 4294901760
  %v3515 = vsub.f32 %v3248, %v3514
  %v3516 = vand.u32 %v3515, 4294901760
  %v3517 = vsub.f32 %v3515, %v3516
  %v3518 = vand.u32 %v3517, 4294901760
  %3519 = vmatpush1.msra.mxu0 %v3518
  %v3520 = vand.u32 %v3251, 4294901760
  %v3521 = vsub.f32 %v3251, %v3520
  %v3522 = vand.u32 %v3521, 4294901760
  %v3523 = vsub.f32 %v3521, %v3522
  %v3524 = vand.u32 %v3523, 4294901760
  %3525 = vmatprep.subr.mxu0 %v3524
  %v3526 = vand.u32 %v3250, 4294901760
  %v3527 = vsub.f32 %v3250, %v3526
  %v3528 = vand.u32 %v3527, 4294901760
  %v3529 = vsub.f32 %v3527, %v3528
  %v3530 = vand.u32 %v3529, 4294901760
  %3531 = vmatpush1.msra.mxu0 %v3530
  %v3532 = vand.u32 %v3253, 4294901760
  %v3533 = vsub.f32 %v3253, %v3532
  %v3534 = vand.u32 %v3533, 4294901760
  %v3535 = vsub.f32 %v3533, %v3534
  %v3536 = vand.u32 %v3535, 4294901760
  %3537 = vmatprep.subr.mxu0 %v3536
  %v3538 = vand.u32 %v3252, 4294901760
  %v3539 = vsub.f32 %v3252, %v3538
  %v3540 = vand.u32 %v3539, 4294901760
  %v3541 = vsub.f32 %v3539, %v3540
  %v3542 = vand.u32 %v3541, 4294901760
  %3543 = vmatpush1.msra.mxu0 %v3542
  %v3544 = vand.u32 %v3255, 4294901760
  %v3545 = vsub.f32 %v3255, %v3544
  %v3546 = vand.u32 %v3545, 4294901760
  %v3547 = vsub.f32 %v3545, %v3546
  %v3548 = vand.u32 %v3547, 4294901760
  %3549 = vmatprep.subr.mxu0 %v3548
  %v3550 = vand.u32 %v3254, 4294901760
  %v3551 = vsub.f32 %v3254, %v3550
  %v3552 = vand.u32 %v3551, 4294901760
  %v3553 = vsub.f32 %v3551, %v3552
  %v3554 = vand.u32 %v3553, 4294901760
  %3555 = vmatpush1.msra.mxu0 %v3554
  %v3556 = vand.u32 %v3257, 4294901760
  %v3557 = vsub.f32 %v3257, %v3556
  %v3558 = vand.u32 %v3557, 4294901760
  %v3559 = vsub.f32 %v3557, %v3558
  %v3560 = vand.u32 %v3559, 4294901760
  %3561 = vmatprep.subr.mxu0 %v3560
  %v3562 = vand.u32 %v3256, 4294901760
  %v3563 = vsub.f32 %v3256, %v3562
  %v3564 = vand.u32 %v3563, 4294901760
  %v3565 = vsub.f32 %v3563, %v3564
  %v3566 = vand.u32 %v3565, 4294901760
  %3567 = vmatpush1.msra.mxu0 %v3566
  %3568 = vmatprep.subr.mxu0 0.0
  %3569 = vmatpush1.msra.mxu0 0.0
  %3570 = vmatprep.subr.mxu0 0.0
  %3571 = vmatpush1.msra.mxu0 0.0
  %3572 = vmatprep.subr.mxu0 0.0
  %3573 = vmatpush1.msra.mxu0 0.0
  %3574 = vmatprep.subr.mxu0 0.0
  %3575 = vmatpush1.msra.mxu0 0.0
  %3576 = vmatprep.subr.mxu0 0.0
  %3577 = vmatpush1.msra.mxu0 0.0
  %3578 = vmatprep.subr.mxu0 0.0
  %3579 = vmatpush1.msra.mxu0 0.0
  %3580 = vmatprep.subr.mxu0 0.0
  %3581 = vmatpush1.msra.mxu0 0.0
  %3582 = vmatprep.subr.mxu0 0.0
  %3583 = vmatpush1.msra.mxu0 0.0
  %3584 = vmatprep.subr.mxu0 0.0
  %3585 = vmatpush1.msra.mxu0 0.0
  %3586 = vmatprep.subr.mxu0 0.0
  %3587 = vmatpush1.msra.mxu0 0.0
  %3588 = vmatprep.subr.mxu0 0.0
  %3589 = vmatpush1.msra.mxu0 0.0
  %3590 = vmatprep.subr.mxu0 0.0
  %3591 = vmatpush1.msra.mxu0 0.0
  %3592 = vmatprep.subr.mxu0 0.0
  %3593 = vmatpush1.msra.mxu0 0.0
  %3594 = vmatprep.subr.mxu0 0.0
  %3595 = vmatpush1.msra.mxu0 0.0
  %3596 = vmatprep.subr.mxu0 0.0
  %3597 = vmatpush1.msra.mxu0 0.0
  %3598 = vmatprep.subr.mxu0 0.0
  %3599 = vmatpush1.msra.mxu0 0.0
  %3600 = vmatprep.subr.mxu0 0.0
  %3601 = vmatpush1.msra.mxu0 0.0
  %3602 = vmatprep.subr.mxu0 0.0
  %3603 = vmatpush1.msra.mxu0 0.0
  %3604 = vmatprep.subr.mxu0 0.0
  %3605 = vmatpush1.msra.mxu0 0.0
  %3606 = vmatprep.subr.mxu0 0.0
  %3607 = vmatpush1.msra.mxu0 0.0
  %3608 = vmatprep.subr.mxu0 0.0
  %3609 = vmatpush1.msra.mxu0 0.0
  %3610 = vmatprep.subr.mxu0 0.0
  %3611 = vmatpush1.msra.mxu0 0.0
  %3612 = vmatprep.mubr.f32.mxu0 0.0
  %v3613 = vand.u32 %v3294, 4294901760
  %3614 = vmatmul.mubr.f32.gmra.mrb[0].mxu0 %v3613
  %v3615 = vpop.f32.mrb[0].mxu0
  %v3616 = vadd.f32 %v3400, %v3615
  %v3617 = vpop.f32.mrb[0].mxu0
  %v3618 = vadd.f32 %v3402, %v3617
  %3619 = vmatprep.mubr.f32.mxu0 0.0
  %v3620 = vand.u32 %v3297, 4294901760
  %3621 = vmatmul.mubr.f32.gmra.mrb[0].mxu0 %v3620
  %v3622 = vpop.f32.mrb[0].mxu0
  %v3623 = vadd.f32 %v3411, %v3622
  %v3624 = vpop.f32.mrb[0].mxu0
  %v3625 = vadd.f32 %v3413, %v3624
  %3626 = vmatprep.mubr.f32.mxu0 0.0
  %v3627 = vand.u32 %v3300, 4294901760
  %3628 = vmatmul.mubr.f32.gmra.mrb[0].mxu0 %v3627
  %v3629 = vpop.f32.mrb[0].mxu0
  %v3630 = vadd.f32 %v3422, %v3629
  %v3631 = vpop.f32.mrb[0].mxu0
  %v3632 = vadd.f32 %v3424, %v3631
  %3633 = vmatprep.mubr.f32.mxu0 0.0
  %v3634 = vand.u32 %v3303, 4294901760
  %3635 = vmatmul.mubr.f32.gmra.mrb[0].mxu0 %v3634
  %v3636 = vpop.f32.mrb[0].mxu0
  %v3637 = vadd.f32 %v3433, %v3636
  %v3638 = vpop.f32.mrb[0].mxu0
  %v3639 = vadd.f32 %v3435, %v3638
  %3640 = vmatprep.mubr.f32.mxu0 0.0
  %v3641 = vand.u32 %v3306, 4294901760
  %3642 = vmatmul.mubr.f32.gmra.mrb[0].mxu0 %v3641
  %v3643 = vpop.f32.mrb[0].mxu0
  %v3644 = vadd.f32 %v3444, %v3643
  %v3645 = vpop.f32.mrb[0].mxu0
  %v3646 = vadd.f32 %v3446, %v3645
  %3647 = vdwg.mxu0
  %v3648 = vand.u32 %v3239, 4294901760
  %v3649 = vsub.f32 %v3239, %v3648
  %3650 = vmatprep.subr.mxu0 %v3649
  %v3651 = vand.u32 %v3238, 4294901760
  %v3652 = vsub.f32 %v3238, %v3651
  %3653 = vmatpush1.msra.mxu0 %v3652
  %v3654 = vand.u32 %v3241, 4294901760
  %v3655 = vsub.f32 %v3241, %v3654
  %3656 = vmatprep.subr.mxu0 %v3655
  %v3657 = vand.u32 %v3240, 4294901760
  %v3658 = vsub.f32 %v3240, %v3657
  %3659 = vmatpush1.msra.mxu0 %v3658
  %v3660 = vand.u32 %v3243, 4294901760
  %v3661 = vsub.f32 %v3243, %v3660
  %3662 = vmatprep.subr.mxu0 %v3661
  %v3663 = vand.u32 %v3242, 4294901760
  %v3664 = vsub.f32 %v3242, %v3663
  %3665 = vmatpush1.msra.mxu0 %v3664
  %v3666 = vand.u32 %v3245, 4294901760
  %v3667 = vsub.f32 %v3245, %v3666
  %3668 = vmatprep.subr.mxu0 %v3667
  %v3669 = vand.u32 %v3244, 4294901760
  %v3670 = vsub.f32 %v3244, %v3669
  %3671 = vmatpush1.msra.mxu0 %v3670
  %v3672 = vand.u32 %v3247, 4294901760
  %v3673 = vsub.f32 %v3247, %v3672
  %3674 = vmatprep.subr.mxu0 %v3673
  %v3675 = vand.u32 %v3246, 4294901760
  %v3676 = vsub.f32 %v3246, %v3675
  %3677 = vmatpush1.msra.mxu0 %v3676
  %v3678 = vand.u32 %v3249, 4294901760
  %v3679 = vsub.f32 %v3249, %v3678
  %3680 = vmatprep.subr.mxu0 %v3679
  %v3681 = vand.u32 %v3248, 4294901760
  %v3682 = vsub.f32 %v3248, %v3681
  %3683 = vmatpush1.msra.mxu0 %v3682
  %v3684 = vand.u32 %v3251, 4294901760
  %v3685 = vsub.f32 %v3251, %v3684
  %3686 = vmatprep.subr.mxu0 %v3685
  %v3687 = vand.u32 %v3250, 4294901760
  %v3688 = vsub.f32 %v3250, %v3687
  %3689 = vmatpush1.msra.mxu0 %v3688
  %v3690 = vand.u32 %v3253, 4294901760
  %v3691 = vsub.f32 %v3253, %v3690
  %3692 = vmatprep.subr.mxu0 %v3691
  %v3693 = vand.u32 %v3252, 4294901760
  %v3694 = vsub.f32 %v3252, %v3693
  %3695 = vmatpush1.msra.mxu0 %v3694
  %v3696 = vand.u32 %v3255, 4294901760
  %v3697 = vsub.f32 %v3255, %v3696
  %3698 = vmatprep.subr.mxu0 %v3697
  %v3699 = vand.u32 %v3254, 4294901760
  %v3700 = vsub.f32 %v3254, %v3699
  %3701 = vmatpush1.msra.mxu0 %v3700
  %v3702 = vand.u32 %v3257, 4294901760
  %v3703 = vsub.f32 %v3257, %v3702
  %3704 = vmatprep.subr.mxu0 %v3703
  %v3705 = vand.u32 %v3256, 4294901760
  %v3706 = vsub.f32 %v3256, %v3705
  %3707 = vmatpush1.msra.mxu0 %v3706
  %3708 = vmatprep.subr.mxu0 0.0
  %3709 = vmatpush1.msra.mxu0 0.0
  %3710 = vmatprep.subr.mxu0 0.0
  %3711 = vmatpush1.msra.mxu0 0.0
  %3712 = vmatprep.subr.mxu0 0.0
  %3713 = vmatpush1.msra.mxu0 0.0
  %3714 = vmatprep.subr.mxu0 0.0
  %3715 = vmatpush1.msra.mxu0 0.0
  %3716 = vmatprep.subr.mxu0 0.0
  %3717 = vmatpush1.msra.mxu0 0.0
  %3718 = vmatprep.subr.mxu0 0.0
  %3719 = vmatpush1.msra.mxu0 0.0
  %3720 = vmatprep.subr.mxu0 0.0
  %3721 = vmatpush1.msra.mxu0 0.0
  %3722 = vmatprep.subr.mxu0 0.0
  %3723 = vmatpush1.msra.mxu0 0.0
  %3724 = vmatprep.subr.mxu0 0.0
  %3725 = vmatpush1.msra.mxu0 0.0
  %3726 = vmatprep.subr.mxu0 0.0
  %3727 = vmatpush1.msra.mxu0 0.0
  %3728 = vmatprep.subr.mxu0 0.0
  %3729 = vmatpush1.msra.mxu0 0.0
  %3730 = vmatprep.subr.mxu0 0.0
  %3731 = vmatpush1.msra.mxu0 0.0
  %3732 = vmatprep.subr.mxu0 0.0
  %3733 = vmatpush1.msra.mxu0 0.0
  %3734 = vmatprep.subr.mxu0 0.0
  %3735 = vmatpush1.msra.mxu0 0.0
  %3736 = vmatprep.subr.mxu0 0.0
  %3737 = vmatpush1.msra.mxu0 0.0
  %3738 = vmatprep.subr.mxu0 0.0
  %3739 = vmatpush1.msra.mxu0 0.0
  %3740 = vmatprep.subr.mxu0 0.0
  %3741 = vmatpush1.msra.mxu0 0.0
  %3742 = vmatprep.subr.mxu0 0.0
  %3743 = vmatpush1.msra.mxu0 0.0
  %3744 = vmatprep.subr.mxu0 0.0
  %3745 = vmatpush1.msra.mxu0 0.0
  %3746 = vmatprep.subr.mxu0 0.0
  %3747 = vmatpush1.msra.mxu0 0.0
  %3748 = vmatprep.subr.mxu0 0.0
  %3749 = vmatpush1.msra.mxu0 0.0
  %3750 = vmatprep.subr.mxu0 0.0
  %3751 = vmatpush1.msra.mxu0 0.0
  %3752 = vmatprep.mubr.f32.mxu0 0.0
  %v3753 = vand.u32 %v3294, 4294901760
  %v3754 = vsub.f32 %v3294, %v3753
  %3755 = vmatmul.mubr.f32.gmra.mrb[0].mxu0 %v3754
  %v3756 = vpop.f32.mrb[0].mxu0
  %v3757 = vadd.f32 %v3616, %v3756
  %v3758 = vpop.f32.mrb[0].mxu0
  %v3759 = vadd.f32 %v3618, %v3758
  %3760 = vmatprep.mubr.f32.mxu0 0.0
  %v3761 = vand.u32 %v3297, 4294901760
  %v3762 = vsub.f32 %v3297, %v3761
  %3763 = vmatmul.mubr.f32.gmra.mrb[0].mxu0 %v3762
  %v3764 = vpop.f32.mrb[0].mxu0
  %v3765 = vadd.f32 %v3623, %v3764
  %v3766 = vpop.f32.mrb[0].mxu0
  %v3767 = vadd.f32 %v3625, %v3766
  %3768 = vmatprep.mubr.f32.mxu0 0.0
  %v3769 = vand.u32 %v3300, 4294901760
  %v3770 = vsub.f32 %v3300, %v3769
  %3771 = vmatmul.mubr.f32.gmra.mrb[0].mxu0 %v3770
  %v3772 = vpop.f32.mrb[0].mxu0
  %v3773 = vadd.f32 %v3630, %v3772
  %v3774 = vpop.f32.mrb[0].mxu0
  %v3775 = vadd.f32 %v3632, %v3774
  %3776 = vmatprep.mubr.f32.mxu0 0.0
  %v3777 = vand.u32 %v3303, 4294901760
  %v3778 = vsub.f32 %v3303, %v3777
  %3779 = vmatmul.mubr.f32.gmra.mrb[0].mxu0 %v3778
  %v3780 = vpop.f32.mrb[0].mxu0
  %v3781 = vadd.f32 %v3637, %v3780
  %v3782 = vpop.f32.mrb[0].mxu0
  %v3783 = vadd.f32 %v3639, %v3782
  %3784 = vmatprep.mubr.f32.mxu0 0.0
  %v3785 = vand.u32 %v3306, 4294901760
  %v3786 = vsub.f32 %v3306, %v3785
  %3787 = vmatmul.mubr.f32.gmra.mrb[0].mxu0 %v3786
  %v3788 = vpop.f32.mrb[0].mxu0
  %v3789 = vadd.f32 %v3644, %v3788
  %v3790 = vpop.f32.mrb[0].mxu0
  %v3791 = vadd.f32 %v3646, %v3790
  %3792 = vdwg.mxu0
  %v3793 = vand.u32 %v3239, 4294901760
  %3794 = vmatprep.subr.mxu0 %v3793
  %v3795 = vand.u32 %v3238, 4294901760
  %3796 = vmatpush1.msra.mxu0 %v3795
  %v3797 = vand.u32 %v3241, 4294901760
  %3798 = vmatprep.subr.mxu0 %v3797
  %v3799 = vand.u32 %v3240, 4294901760
  %3800 = vmatpush1.msra.mxu0 %v3799
  %v3801 = vand.u32 %v3243, 4294901760
  %3802 = vmatprep.subr.mxu0 %v3801
  %v3803 = vand.u32 %v3242, 4294901760
  %3804 = vmatpush1.msra.mxu0 %v3803
  %v3805 = vand.u32 %v3245, 4294901760
  %3806 = vmatprep.subr.mxu0 %v3805
  %v3807 = vand.u32 %v3244, 4294901760
  %3808 = vmatpush1.msra.mxu0 %v3807
  %v3809 = vand.u32 %v3247, 4294901760
  %3810 = vmatprep.subr.mxu0 %v3809
  %v3811 = vand.u32 %v3246, 4294901760
  %3812 = vmatpush1.msra.mxu0 %v3811
  %v3813 = vand.u32 %v3249, 4294901760
  %3814 = vmatprep.subr.mxu0 %v3813
  %v3815 = vand.u32 %v3248, 4294901760
  %3816 = vmatpush1.msra.mxu0 %v3815
  %v3817 = vand.u32 %v3251, 4294901760
  %3818 = vmatprep.subr.mxu0 %v3817
  %v3819 = vand.u32 %v3250, 4294901760
  %3820 = vmatpush1.msra.mxu0 %v3819
  %v3821 = vand.u32 %v3253, 4294901760
  %3822 = vmatprep.subr.mxu0 %v3821
  %v3823 = vand.u32 %v3252, 4294901760
  %3824 = vmatpush1.msra.mxu0 %v3823
  %v3825 = vand.u32 %v3255, 4294901760
  %3826 = vmatprep.subr.mxu0 %v3825
  %v3827 = vand.u32 %v3254, 4294901760
  %3828 = vmatpush1.msra.mxu0 %v3827
  %v3829 = vand.u32 %v3257, 4294901760
  %3830 = vmatprep.subr.mxu0 %v3829
  %v3831 = vand.u32 %v3256, 4294901760
  %3832 = vmatpush1.msra.mxu0 %v3831
  %3833 = vmatprep.subr.mxu0 0.0
  %3834 = vmatpush1.msra.mxu0 0.0
  %3835 = vmatprep.subr.mxu0 0.0
  %3836 = vmatpush1.msra.mxu0 0.0
  %3837 = vmatprep.subr.mxu0 0.0
  %3838 = vmatpush1.msra.mxu0 0.0
  %3839 = vmatprep.subr.mxu0 0.0
  %3840 = vmatpush1.msra.mxu0 0.0
  %3841 = vmatprep.subr.mxu0 0.0
  %3842 = vmatpush1.msra.mxu0 0.0
  %3843 = vmatprep.subr.mxu0 0.0
  %3844 = vmatpush1.msra.mxu0 0.0
  %3845 = vmatprep.subr.mxu0 0.0
  %3846 = vmatpush1.msra.mxu0 0.0
  %3847 = vmatprep.subr.mxu0 0.0
  %3848 = vmatpush1.msra.mxu0 0.0
  %3849 = vmatprep.subr.mxu0 0.0
  %3850 = vmatpush1.msra.mxu0 0.0
  %3851 = vmatprep.subr.mxu0 0.0
  %3852 = vmatpush1.msra.mxu0 0.0
  %3853 = vmatprep.subr.mxu0 0.0
  %3854 = vmatpush1.msra.mxu0 0.0
  %3855 = vmatprep.subr.mxu0 0.0
  %3856 = vmatpush1.msra.mxu0 0.0
  %3857 = vmatprep.subr.mxu0 0.0
  %3858 = vmatpush1.msra.mxu0 0.0
  %3859 = vmatprep.subr.mxu0 0.0
  %3860 = vmatpush1.msra.mxu0 0.0
  %3861 = vmatprep.subr.mxu0 0.0
  %3862 = vmatpush1.msra.mxu0 0.0
  %3863 = vmatprep.subr.mxu0 0.0
  %3864 = vmatpush1.msra.mxu0 0.0
  %3865 = vmatprep.subr.mxu0 0.0
  %3866 = vmatpush1.msra.mxu0 0.0
  %3867 = vmatprep.subr.mxu0 0.0
  %3868 = vmatpush1.msra.mxu0 0.0
  %3869 = vmatprep.subr.mxu0 0.0
  %3870 = vmatpush1.msra.mxu0 0.0
  %3871 = vmatprep.subr.mxu0 0.0
  %3872 = vmatpush1.msra.mxu0 0.0
  %3873 = vmatprep.subr.mxu0 0.0
  %3874 = vmatpush1.msra.mxu0 0.0
  %3875 = vmatprep.subr.mxu0 0.0
  %3876 = vmatpush1.msra.mxu0 0.0
  %3877 = vmatprep.mubr.f32.mxu0 0.0
  %v3878 = vand.u32 %v3294, 4294901760
  %v3879 = vsub.f32 %v3294, %v3878
  %v3880 = vand.u32 %v3879, 4294901760
  %3881 = vmatmul.mubr.f32.gmra.mrb[0].mxu0 %v3880
  %v3882 = vpop.f32.mrb[0].mxu0
  %v3883 = vadd.f32 %v3757, %v3882
  %v3884 = vpop.f32.mrb[0].mxu0
  %v3885 = vadd.f32 %v3759, %v3884
  %3886 = vmatprep.mubr.f32.mxu0 0.0
  %v3887 = vand.u32 %v3297, 4294901760
  %v3888 = vsub.f32 %v3297, %v3887
  %v3889 = vand.u32 %v3888, 4294901760
  %3890 = vmatmul.mubr.f32.gmra.mrb[0].mxu0 %v3889
  %v3891 = vpop.f32.mrb[0].mxu0
  %v3892 = vadd.f32 %v3765, %v3891
  %v3893 = vpop.f32.mrb[0].mxu0
  %v3894 = vadd.f32 %v3767, %v3893
  %3895 = vmatprep.mubr.f32.mxu0 0.0
  %v3896 = vand.u32 %v3300, 4294901760
  %v3897 = vsub.f32 %v3300, %v3896
  %v3898 = vand.u32 %v3897, 4294901760
  %3899 = vmatmul.mubr.f32.gmra.mrb[0].mxu0 %v3898
  %v3900 = vpop.f32.mrb[0].mxu0
  %v3901 = vadd.f32 %v3773, %v3900
  %v3902 = vpop.f32.mrb[0].mxu0
  %v3903 = vadd.f32 %v3775, %v3902
  %3904 = vmatprep.mubr.f32.mxu0 0.0
  %v3905 = vand.u32 %v3303, 4294901760
  %v3906 = vsub.f32 %v3303, %v3905
  %v3907 = vand.u32 %v3906, 4294901760
  %3908 = vmatmul.mubr.f32.gmra.mrb[0].mxu0 %v3907
  %v3909 = vpop.f32.mrb[0].mxu0
  %v3910 = vadd.f32 %v3781, %v3909
  %v3911 = vpop.f32.mrb[0].mxu0
  %v3912 = vadd.f32 %v3783, %v3911
  %3913 = vmatprep.mubr.f32.mxu0 0.0
  %v3914 = vand.u32 %v3306, 4294901760
  %v3915 = vsub.f32 %v3306, %v3914
  %v3916 = vand.u32 %v3915, 4294901760
  %3917 = vmatmul.mubr.f32.gmra.mrb[0].mxu0 %v3916
  %v3918 = vpop.f32.mrb[0].mxu0
  %v3919 = vadd.f32 %v3789, %v3918
  %v3920 = vpop.f32.mrb[0].mxu0
  %v3921 = vadd.f32 %v3791, %v3920
  %3922 = vdwg.mxu0
  %v3923 = vand.u32 %v3239, 4294901760
  %v3924 = vsub.f32 %v3239, %v3923
  %v3925 = vand.u32 %v3924, 4294901760
  %3926 = vmatprep.subr.mxu0 %v3925
  %v3927 = vand.u32 %v3238, 4294901760
  %v3928 = vsub.f32 %v3238, %v3927
  %v3929 = vand.u32 %v3928, 4294901760
  %3930 = vmatpush1.msra.mxu0 %v3929
  %v3931 = vand.u32 %v3241, 4294901760
  %v3932 = vsub.f32 %v3241, %v3931
  %v3933 = vand.u32 %v3932, 4294901760
  %3934 = vmatprep.subr.mxu0 %v3933
  %v3935 = vand.u32 %v3240, 4294901760
  %v3936 = vsub.f32 %v3240, %v3935
  %v3937 = vand.u32 %v3936, 4294901760
  %3938 = vmatpush1.msra.mxu0 %v3937
  %v3939 = vand.u32 %v3243, 4294901760
  %v3940 = vsub.f32 %v3243, %v3939
  %v3941 = vand.u32 %v3940, 4294901760
  %3942 = vmatprep.subr.mxu0 %v3941
  %v3943 = vand.u32 %v3242, 4294901760
  %v3944 = vsub.f32 %v3242, %v3943
  %v3945 = vand.u32 %v3944, 4294901760
  %3946 = vmatpush1.msra.mxu0 %v3945
  %v3947 = vand.u32 %v3245, 4294901760
  %v3948 = vsub.f32 %v3245, %v3947
  %v3949 = vand.u32 %v3948, 4294901760
  %3950 = vmatprep.subr.mxu0 %v3949
  %v3951 = vand.u32 %v3244, 4294901760
  %v3952 = vsub.f32 %v3244, %v3951
  %v3953 = vand.u32 %v3952, 4294901760
  %3954 = vmatpush1.msra.mxu0 %v3953
  %v3955 = vand.u32 %v3247, 4294901760
  %v3956 = vsub.f32 %v3247, %v3955
  %v3957 = vand.u32 %v3956, 4294901760
  %3958 = vmatprep.subr.mxu0 %v3957
  %v3959 = vand.u32 %v3246, 4294901760
  %v3960 = vsub.f32 %v3246, %v3959
  %v3961 = vand.u32 %v3960, 4294901760
  %3962 = vmatpush1.msra.mxu0 %v3961
  %v3963 = vand.u32 %v3249, 4294901760
  %v3964 = vsub.f32 %v3249, %v3963
  %v3965 = vand.u32 %v3964, 4294901760
  %3966 = vmatprep.subr.mxu0 %v3965
  %v3967 = vand.u32 %v3248, 4294901760
  %v3968 = vsub.f32 %v3248, %v3967
  %v3969 = vand.u32 %v3968, 4294901760
  %3970 = vmatpush1.msra.mxu0 %v3969
  %v3971 = vand.u32 %v3251, 4294901760
  %v3972 = vsub.f32 %v3251, %v3971
  %v3973 = vand.u32 %v3972, 4294901760
  %3974 = vmatprep.subr.mxu0 %v3973
  %v3975 = vand.u32 %v3250, 4294901760
  %v3976 = vsub.f32 %v3250, %v3975
  %v3977 = vand.u32 %v3976, 4294901760
  %3978 = vmatpush1.msra.mxu0 %v3977
  %v3979 = vand.u32 %v3253, 4294901760
  %v3980 = vsub.f32 %v3253, %v3979
  %v3981 = vand.u32 %v3980, 4294901760
  %3982 = vmatprep.subr.mxu0 %v3981
  %v3983 = vand.u32 %v3252, 4294901760
  %v3984 = vsub.f32 %v3252, %v3983
  %v3985 = vand.u32 %v3984, 4294901760
  %3986 = vmatpush1.msra.mxu0 %v3985
  %v3987 = vand.u32 %v3255, 4294901760
  %v3988 = vsub.f32 %v3255, %v3987
  %v3989 = vand.u32 %v3988, 4294901760
  %3990 = vmatprep.subr.mxu0 %v3989
  %v3991 = vand.u32 %v3254, 4294901760
  %v3992 = vsub.f32 %v3254, %v3991
  %v3993 = vand.u32 %v3992, 4294901760
  %3994 = vmatpush1.msra.mxu0 %v3993
  %v3995 = vand.u32 %v3257, 4294901760
  %v3996 = vsub.f32 %v3257, %v3995
  %v3997 = vand.u32 %v3996, 4294901760
  %3998 = vmatprep.subr.mxu0 %v3997
  %v3999 = vand.u32 %v3256, 4294901760
  %v4000 = vsub.f32 %v3256, %v3999
  %v4001 = vand.u32 %v4000, 4294901760
  %4002 = vmatpush1.msra.mxu0 %v4001
  %4003 = vmatprep.subr.mxu0 0.0
  %4004 = vmatpush1.msra.mxu0 0.0
  %4005 = vmatprep.subr.mxu0 0.0
  %4006 = vmatpush1.msra.mxu0 0.0
  %4007 = vmatprep.subr.mxu0 0.0
  %4008 = vmatpush1.msra.mxu0 0.0
  %4009 = vmatprep.subr.mxu0 0.0
  %4010 = vmatpush1.msra.mxu0 0.0
  %4011 = vmatprep.subr.mxu0 0.0
  %4012 = vmatpush1.msra.mxu0 0.0
  %4013 = vmatprep.subr.mxu0 0.0
  %4014 = vmatpush1.msra.mxu0 0.0
  %4015 = vmatprep.subr.mxu0 0.0
  %4016 = vmatpush1.msra.mxu0 0.0
  %4017 = vmatprep.subr.mxu0 0.0
  %4018 = vmatpush1.msra.mxu0 0.0
  %4019 = vmatprep.subr.mxu0 0.0
  %4020 = vmatpush1.msra.mxu0 0.0
  %4021 = vmatprep.subr.mxu0 0.0
  %4022 = vmatpush1.msra.mxu0 0.0
  %4023 = vmatprep.subr.mxu0 0.0
  %4024 = vmatpush1.msra.mxu0 0.0
  %4025 = vmatprep.subr.mxu0 0.0
  %4026 = vmatpush1.msra.mxu0 0.0
  %4027 = vmatprep.subr.mxu0 0.0
  %4028 = vmatpush1.msra.mxu0 0.0
  %4029 = vmatprep.subr.mxu0 0.0
  %4030 = vmatpush1.msra.mxu0 0.0
  %4031 = vmatprep.subr.mxu0 0.0
  %4032 = vmatpush1.msra.mxu0 0.0
  %4033 = vmatprep.subr.mxu0 0.0
  %4034 = vmatpush1.msra.mxu0 0.0
  %4035 = vmatprep.subr.mxu0 0.0
  %4036 = vmatpush1.msra.mxu0 0.0
  %4037 = vmatprep.subr.mxu0 0.0
  %4038 = vmatpush1.msra.mxu0 0.0
  %4039 = vmatprep.subr.mxu0 0.0
  %4040 = vmatpush1.msra.mxu0 0.0
  %4041 = vmatprep.subr.mxu0 0.0
  %4042 = vmatpush1.msra.mxu0 0.0
  %4043 = vmatprep.subr.mxu0 0.0
  %4044 = vmatpush1.msra.mxu0 0.0
  %4045 = vmatprep.subr.mxu0 0.0
  %4046 = vmatpush1.msra.mxu0 0.0
  %4047 = vmatprep.mubr.f32.mxu0 0.0
  %v4048 = vand.u32 %v3294, 4294901760
  %4049 = vmatmul.mubr.f32.gmra.mrb[0].mxu0 %v4048
  %v4050 = vpop.f32.mrb[0].mxu0
  %v4051 = vadd.f32 %v3883, %v4050
  %v4052 = vpop.f32.mrb[0].mxu0
  %v4053 = vadd.f32 %v3885, %v4052
  %4054 = vmatprep.mubr.f32.mxu0 0.0
  %v4055 = vand.u32 %v3297, 4294901760
  %4056 = vmatmul.mubr.f32.gmra.mrb[0].mxu0 %v4055
  %v4057 = vpop.f32.mrb[0].mxu0
  %v4058 = vadd.f32 %v3892, %v4057
  %v4059 = vpop.f32.mrb[0].mxu0
  %v4060 = vadd.f32 %v3894, %v4059
  %4061 = vmatprep.mubr.f32.mxu0 0.0
  %v4062 = vand.u32 %v3300, 4294901760
  %4063 = vmatmul.mubr.f32.gmra.mrb[0].mxu0 %v4062
  %v4064 = vpop.f32.mrb[0].mxu0
  %v4065 = vadd.f32 %v3901, %v4064
  %v4066 = vpop.f32.mrb[0].mxu0
  %v4067 = vadd.f32 %v3903, %v4066
  %4068 = vmatprep.mubr.f32.mxu0 0.0
  %v4069 = vand.u32 %v3303, 4294901760
  %4070 = vmatmul.mubr.f32.gmra.mrb[0].mxu0 %v4069
  %v4071 = vpop.f32.mrb[0].mxu0
  %v4072 = vadd.f32 %v3910, %v4071
  %v4073 = vpop.f32.mrb[0].mxu0
  %v4074 = vadd.f32 %v3912, %v4073
  %4075 = vmatprep.mubr.f32.mxu0 0.0
  %v4076 = vand.u32 %v3306, 4294901760
  %4077 = vmatmul.mubr.f32.gmra.mrb[0].mxu0 %v4076
  %v4078 = vpop.f32.mrb[0].mxu0
  %v4079 = vadd.f32 %v3919, %v4078
  %v4080 = vpop.f32.mrb[0].mxu0
  %v4081 = vadd.f32 %v3921, %v4080
  %4082 = vdwg.mxu0
  %v4083 = vand.u32 %v3239, 4294901760
  %4084 = vmatprep.subr.mxu0 %v4083
  %v4085 = vand.u32 %v3238, 4294901760
  %4086 = vmatpush1.msra.mxu0 %v4085
  %v4087 = vand.u32 %v3241, 4294901760
  %4088 = vmatprep.subr.mxu0 %v4087
  %v4089 = vand.u32 %v3240, 4294901760
  %4090 = vmatpush1.msra.mxu0 %v4089
  %v4091 = vand.u32 %v3243, 4294901760
  %4092 = vmatprep.subr.mxu0 %v4091
  %v4093 = vand.u32 %v3242, 4294901760
  %4094 = vmatpush1.msra.mxu0 %v4093
  %v4095 = vand.u32 %v3245, 4294901760
  %4096 = vmatprep.subr.mxu0 %v4095
  %v4097 = vand.u32 %v3244, 4294901760
  %4098 = vmatpush1.msra.mxu0 %v4097
  %v4099 = vand.u32 %v3247, 4294901760
  %4100 = vmatprep.subr.mxu0 %v4099
  %v4101 = vand.u32 %v3246, 4294901760
  %4102 = vmatpush1.msra.mxu0 %v4101
  %v4103 = vand.u32 %v3249, 4294901760
  %4104 = vmatprep.subr.mxu0 %v4103
  %v4105 = vand.u32 %v3248, 4294901760
  %4106 = vmatpush1.msra.mxu0 %v4105
  %v4107 = vand.u32 %v3251, 4294901760
  %4108 = vmatprep.subr.mxu0 %v4107
  %v4109 = vand.u32 %v3250, 4294901760
  %4110 = vmatpush1.msra.mxu0 %v4109
  %v4111 = vand.u32 %v3253, 4294901760
  %4112 = vmatprep.subr.mxu0 %v4111
  %v4113 = vand.u32 %v3252, 4294901760
  %4114 = vmatpush1.msra.mxu0 %v4113
  %v4115 = vand.u32 %v3255, 4294901760
  %4116 = vmatprep.subr.mxu0 %v4115
  %v4117 = vand.u32 %v3254, 4294901760
  %4118 = vmatpush1.msra.mxu0 %v4117
  %v4119 = vand.u32 %v3257, 4294901760
  %4120 = vmatprep.subr.mxu0 %v4119
  %v4121 = vand.u32 %v3256, 4294901760
  %4122 = vmatpush1.msra.mxu0 %v4121
  %4123 = vmatprep.subr.mxu0 0.0
  %4124 = vmatpush1.msra.mxu0 0.0
  %4125 = vmatprep.subr.mxu0 0.0
  %4126 = vmatpush1.msra.mxu0 0.0
  %4127 = vmatprep.subr.mxu0 0.0
  %4128 = vmatpush1.msra.mxu0 0.0
  %4129 = vmatprep.subr.mxu0 0.0
  %4130 = vmatpush1.msra.mxu0 0.0
  %4131 = vmatprep.subr.mxu0 0.0
  %4132 = vmatpush1.msra.mxu0 0.0
  %4133 = vmatprep.subr.mxu0 0.0
  %4134 = vmatpush1.msra.mxu0 0.0
  %4135 = vmatprep.subr.mxu0 0.0
  %4136 = vmatpush1.msra.mxu0 0.0
  %4137 = vmatprep.subr.mxu0 0.0
  %4138 = vmatpush1.msra.mxu0 0.0
  %4139 = vmatprep.subr.mxu0 0.0
  %4140 = vmatpush1.msra.mxu0 0.0
  %4141 = vmatprep.subr.mxu0 0.0
  %4142 = vmatpush1.msra.mxu0 0.0
  %4143 = vmatprep.subr.mxu0 0.0
  %4144 = vmatpush1.msra.mxu0 0.0
  %4145 = vmatprep.subr.mxu0 0.0
  %4146 = vmatpush1.msra.mxu0 0.0
  %4147 = vmatprep.subr.mxu0 0.0
  %4148 = vmatpush1.msra.mxu0 0.0
  %4149 = vmatprep.subr.mxu0 0.0
  %4150 = vmatpush1.msra.mxu0 0.0
  %4151 = vmatprep.subr.mxu0 0.0
  %4152 = vmatpush1.msra.mxu0 0.0
  %4153 = vmatprep.subr.mxu0 0.0
  %4154 = vmatpush1.msra.mxu0 0.0
  %4155 = vmatprep.subr.mxu0 0.0
  %4156 = vmatpush1.msra.mxu0 0.0
  %4157 = vmatprep.subr.mxu0 0.0
  %4158 = vmatpush1.msra.mxu0 0.0
  %4159 = vmatprep.subr.mxu0 0.0
  %4160 = vmatpush1.msra.mxu0 0.0
  %4161 = vmatprep.subr.mxu0 0.0
  %4162 = vmatpush1.msra.mxu0 0.0
  %4163 = vmatprep.subr.mxu0 0.0
  %4164 = vmatpush1.msra.mxu0 0.0
  %4165 = vmatprep.subr.mxu0 0.0
  %4166 = vmatpush1.msra.mxu0 0.0
  %4167 = vmatprep.mubr.f32.mxu0 0.0
  %v4168 = vand.u32 %v3294, 4294901760
  %4169 = vmatmul.mubr.f32.gmra.mrb[0].mxu0 %v4168
  %v4170 = vpop.f32.mrb[0].mxu0
  %v4171 = vadd.f32 %v4051, %v4170
  %v4172 = vpop.f32.mrb[0].mxu0
  %v4173 = vadd.f32 %v4053, %v4172
  %4174 = vmatprep.mubr.f32.mxu0 0.0
  %v4175 = vand.u32 %v3297, 4294901760
  %4176 = vmatmul.mubr.f32.gmra.mrb[0].mxu0 %v4175
  %v4177 = vpop.f32.mrb[0].mxu0
  %v4178 = vadd.f32 %v4058, %v4177
  %v4179 = vpop.f32.mrb[0].mxu0
  %v4180 = vadd.f32 %v4060, %v4179
  %4181 = vmatprep.mubr.f32.mxu0 0.0
  %v4182 = vand.u32 %v3300, 4294901760
  %4183 = vmatmul.mubr.f32.gmra.mrb[0].mxu0 %v4182
  %v4184 = vpop.f32.mrb[0].mxu0
  %v4185 = vadd.f32 %v4065, %v4184
  %v4186 = vpop.f32.mrb[0].mxu0
  %v4187 = vadd.f32 %v4067, %v4186
  %4188 = vmatprep.mubr.f32.mxu0 0.0
  %v4189 = vand.u32 %v3303, 4294901760
  %4190 = vmatmul.mubr.f32.gmra.mrb[0].mxu0 %v4189
  %v4191 = vpop.f32.mrb[0].mxu0
  %v4192 = vadd.f32 %v4072, %v4191
  %v4193 = vpop.f32.mrb[0].mxu0
  %v4194 = vadd.f32 %v4074, %v4193
  %4195 = vmatprep.mubr.f32.mxu0 0.0
  %v4196 = vand.u32 %v3306, 4294901760
  %4197 = vmatmul.mubr.f32.gmra.mrb[0].mxu0 %v4196
  %v4198 = vpop.f32.mrb[0].mxu0
  %v4199 = vadd.f32 %v4079, %v4198
  %v4200 = vpop.f32.mrb[0].mxu0
  %v4201 = vadd.f32 %v4081, %v4200
  %4202 = vdwg.mxu0
  %vm4203 = vcmp.gt.f32.partialorder %v4171, 0.0
  %vm4204 = vcmp.gt.f32.partialorder %v4173, 0.0
  %vm4205 = vcmp.gt.f32.partialorder %v4178, 0.0
  %vm4206 = vcmp.gt.f32.partialorder %v4180, 0.0
  %vm4207 = vcmp.gt.f32.partialorder %v4185, 0.0
  %vm4208 = vcmp.gt.f32.partialorder %v4187, 0.0
  %vm4209 = vcmp.gt.f32.partialorder %v4192, 0.0
  %vm4210 = vcmp.gt.f32.partialorder %v4194, 0.0
  %vm4211 = vcmp.gt.f32.partialorder %v4199, 0.0
  %vm4212 = vcmp.gt.f32.partialorder %v4201, 0.0
  %v4213 = vmul.f32 %v4171, 0.01
  %v4214 = vmul.f32 %v4173, 0.01
  %v4215 = vmul.f32 %v4178, 0.01
  %v4216 = vmul.f32 %v4180, 0.01
  %v4217 = vmul.f32 %v4185, 0.01
  %v4218 = vmul.f32 %v4187, 0.01
  %v4219 = vmul.f32 %v4192, 0.01
  %v4220 = vmul.f32 %v4194, 0.01
  %v4221 = vmul.f32 %v4199, 0.01
  %v4222 = vmul.f32 %v4201, 0.01
  %v4223 = vsel %vm4203, %v4171, %v4213
  %v4224 = vsel %vm4204, %v4173, %v4214
  %v4225 = vsel %vm4205, %v4178, %v4215
  %v4226 = vsel %vm4206, %v4180, %v4216
  %v4227 = vsel %vm4207, %v4185, %v4217
  %v4228 = vsel %vm4208, %v4187, %v4218
  %v4229 = vsel %vm4209, %v4192, %v4219
  %v4230 = vsel %vm4210, %v4194, %v4220
  %v4231 = vsel %vm4211, %v4199, %v4221
  %v4232 = vsel %vm4212, %v4201, %v4222
  %v4233 = vld [vmem:[%s8] sm:$0xff]
  %v4234 = vld [vmem:[%s8 + $0x8] sm:$0xff]
  %v4235 = vld [vmem:[%s8 + $0x10] sm:$0xf]
  %v4236 = vld [vmem:[%s9] sm:$0xff]
  %v4237 = vld [vmem:[%s9 + $0x8] sm:$0xff]
  %v4238 = vld [vmem:[%s9 + $0x10] sm:$0xf]
  %4240 = vset.pattern.permute.xlu0 0
  %4241 = vperm.xlu0 %4240, %v4236
  %v4242 = vpop.permute.xlu0 %4241
  %4245 = vset.pattern.permute.xlu0 0
  %4246 = vperm.xlu0 %4245, %v4237
  %v4247 = vpop.permute.xlu0 %4246
  %4250 = vset.pattern.permute.xlu0 0
  %4251 = vperm.xlu0 %4250, %v4238
  %v4252 = vpop.permute.xlu0 %4251
  %vm4254 = vcmask 326656
  %v4256 = vsel %vm4254, %v4233, 0
  %v4259 = vsel %vm4254, %v4234, 0
  %v4262 = vsel %vm4254, %v4235, 0
  %v4264 = vand.u32 %v4224, 4294901760
  %4265 = vmatprep.subr.mxu0 %v4264
  %v4266 = vand.u32 %v4223, 4294901760
  %4267 = vmatpush1.msra.mxu0 %v4266
  %v4268 = vand.u32 %v4226, 4294901760
  %4269 = vmatprep.subr.mxu0 %v4268
  %v4270 = vand.u32 %v4225, 4294901760
  %4271 = vmatpush1.msra.mxu0 %v4270
  %v4272 = vand.u32 %v4228, 4294901760
  %4273 = vmatprep.subr.mxu0 %v4272
  %v4274 = vand.u32 %v4227, 4294901760
  %4275 = vmatpush1.msra.mxu0 %v4274
  %v4276 = vand.u32 %v4230, 4294901760
  %4277 = vmatprep.subr.mxu0 %v4276
  %v4278 = vand.u32 %v4229, 4294901760
  %4279 = vmatpush1.msra.mxu0 %v4278
  %v4280 = vand.u32 %v4232, 4294901760
  %4281 = vmatprep.subr.mxu0 %v4280
  %v4282 = vand.u32 %v4231, 4294901760
  %4283 = vmatpush1.msra.mxu0 %v4282
  %4284 = vmatprep.subr.mxu0 0.0
  %4285 = vmatpush1.msra.mxu0 0.0
  %4286 = vmatprep.subr.mxu0 0.0
  %4287 = vmatpush1.msra.mxu0 0.0
  %4288 = vmatprep.subr.mxu0 0.0
  %4289 = vmatpush1.msra.mxu0 0.0
  %4290 = vmatprep.subr.mxu0 0.0
  %4291 = vmatpush1.msra.mxu0 0.0
  %4292 = vmatprep.subr.mxu0 0.0
  %4293 = vmatpush1.msra.mxu0 0.0
  %4294 = vmatprep.subr.mxu0 0.0
  %4295 = vmatpush1.msra.mxu0 0.0
  %4296 = vmatprep.subr.mxu0 0.0
  %4297 = vmatpush1.msra.mxu0 0.0
  %4298 = vmatprep.subr.mxu0 0.0
  %4299 = vmatpush1.msra.mxu0 0.0
  %4300 = vmatprep.subr.mxu0 0.0
  %4301 = vmatpush1.msra.mxu0 0.0
  %4302 = vmatprep.subr.mxu0 0.0
  %4303 = vmatpush1.msra.mxu0 0.0
  %4304 = vmatprep.subr.mxu0 0.0
  %4305 = vmatpush1.msra.mxu0 0.0
  %4306 = vmatprep.subr.mxu0 0.0
  %4307 = vmatpush1.msra.mxu0 0.0
  %4308 = vmatprep.subr.mxu0 0.0
  %4309 = vmatpush1.msra.mxu0 0.0
  %4310 = vmatprep.subr.mxu0 0.0
  %4311 = vmatpush1.msra.mxu0 0.0
  %4312 = vmatprep.subr.mxu0 0.0
  %4313 = vmatpush1.msra.mxu0 0.0
  %4314 = vmatprep.subr.mxu0 0.0
  %4315 = vmatpush1.msra.mxu0 0.0
  %4316 = vmatprep.subr.mxu0 0.0
  %4317 = vmatpush1.msra.mxu0 0.0
  %4318 = vmatprep.subr.mxu0 0.0
  %4319 = vmatpush1.msra.mxu0 0.0
  %4320 = vmatprep.subr.mxu0 0.0
  %4321 = vmatpush1.msra.mxu0 0.0
  %4322 = vmatprep.subr.mxu0 0.0
  %4323 = vmatpush1.msra.mxu0 0.0
  %4324 = vmatprep.subr.mxu0 0.0
  %4325 = vmatpush1.msra.mxu0 0.0
  %4326 = vmatprep.subr.mxu0 0.0
  %4327 = vmatpush1.msra.mxu0 0.0
  %4328 = vmatprep.subr.mxu0 0.0
  %4329 = vmatpush1.msra.mxu0 0.0
  %4330 = vmatprep.subr.mxu0 0.0
  %4331 = vmatpush1.msra.mxu0 0.0
  %4332 = vmatprep.subr.mxu0 0.0
  %4333 = vmatpush1.msra.mxu0 0.0
  %4334 = vmatprep.subr.mxu0 0.0
  %4335 = vmatpush1.msra.mxu0 0.0
  %4336 = vmatprep.subr.mxu0 0.0
  %4337 = vmatpush1.msra.mxu0 0.0
  %4338 = vmatprep.mubr.f32.mxu0 0.0
  %v4339 = vand.u32 %v4256, 4294901760
  %v4340 = vsub.f32 %v4256, %v4339
  %v4341 = vand.u32 %v4340, 4294901760
  %v4342 = vsub.f32 %v4340, %v4341
  %v4343 = vand.u32 %v4342, 4294901760
  %4344 = vmatmul.mubr.f32.gmra.mrb[0].mxu0 %v4343
  %v4345 = vpop.f32.mrb[0].mxu0
  %v4346 = vadd.f32 %v4242, %v4345
  %v4347 = vpop.f32.mrb[0].mxu0
  %v4348 = vadd.f32 %v4242, %v4347
  %4349 = vmatprep.mubr.f32.mxu0 0.0
  %v4350 = vand.u32 %v4259, 4294901760
  %v4351 = vsub.f32 %v4259, %v4350
  %v4352 = vand.u32 %v4351, 4294901760
  %v4353 = vsub.f32 %v4351, %v4352
  %v4354 = vand.u32 %v4353, 4294901760
  %4355 = vmatmul.mubr.f32.gmra.mrb[0].mxu0 %v4354
  %v4356 = vpop.f32.mrb[0].mxu0
  %v4357 = vadd.f32 %v4247, %v4356
  %v4358 = vpop.f32.mrb[0].mxu0
  %v4359 = vadd.f32 %v4247, %v4358
  %4360 = vmatprep.mubr.f32.mxu0 0.0
  %v4361 = vand.u32 %v4262, 4294901760
  %v4362 = vsub.f32 %v4262, %v4361
  %v4363 = vand.u32 %v4362, 4294901760
  %v4364 = vsub.f32 %v4362, %v4363
  %v4365 = vand.u32 %v4364, 4294901760
  %4366 = vmatmul.mubr.f32.gmra.mrb[0].mxu0 %v4365
  %v4367 = vpop.f32.mrb[0].mxu0
  %v4368 = vadd.f32 %v4252, %v4367
  %v4369 = vpop.f32.mrb[0].mxu0
  %v4370 = vadd.f32 %v4252, %v4369
  %4371 = vdwg.mxu0
  %v4372 = vand.u32 %v4224, 4294901760
  %v4373 = vsub.f32 %v4224, %v4372
  %v4374 = vand.u32 %v4373, 4294901760
  %v4375 = vsub.f32 %v4373, %v4374
  %v4376 = vand.u32 %v4375, 4294901760
  %4377 = vmatprep.subr.mxu0 %v4376
  %v4378 = vand.u32 %v4223, 4294901760
  %v4379 = vsub.f32 %v4223, %v4378
  %v4380 = vand.u32 %v4379, 4294901760
  %v4381 = vsub.f32 %v4379, %v4380
  %v4382 = vand.u32 %v4381, 4294901760
  %4383 = vmatpush1.msra.mxu0 %v4382
  %v4384 = vand.u32 %v4226, 4294901760
  %v4385 = vsub.f32 %v4226, %v4384
  %v4386 = vand.u32 %v4385, 4294901760
  %v4387 = vsub.f32 %v4385, %v4386
  %v4388 = vand.u32 %v4387, 4294901760
  %4389 = vmatprep.subr.mxu0 %v4388
  %v4390 = vand.u32 %v4225, 4294901760
  %v4391 = vsub.f32 %v4225, %v4390
  %v4392 = vand.u32 %v4391, 4294901760
  %v4393 = vsub.f32 %v4391, %v4392
  %v4394 = vand.u32 %v4393, 4294901760
  %4395 = vmatpush1.msra.mxu0 %v4394
  %v4396 = vand.u32 %v4228, 4294901760
  %v4397 = vsub.f32 %v4228, %v4396
  %v4398 = vand.u32 %v4397, 4294901760
  %v4399 = vsub.f32 %v4397, %v4398
  %v4400 = vand.u32 %v4399, 4294901760
  %4401 = vmatprep.subr.mxu0 %v4400
  %v4402 = vand.u32 %v4227, 4294901760
  %v4403 = vsub.f32 %v4227, %v4402
  %v4404 = vand.u32 %v4403, 4294901760
  %v4405 = vsub.f32 %v4403, %v4404
  %v4406 = vand.u32 %v4405, 4294901760
  %4407 = vmatpush1.msra.mxu0 %v4406
  %v4408 = vand.u32 %v4230, 4294901760
  %v4409 = vsub.f32 %v4230, %v4408
  %v4410 = vand.u32 %v4409, 4294901760
  %v4411 = vsub.f32 %v4409, %v4410
  %v4412 = vand.u32 %v4411, 4294901760
  %4413 = vmatprep.subr.mxu0 %v4412
  %v4414 = vand.u32 %v4229, 4294901760
  %v4415 = vsub.f32 %v4229, %v4414
  %v4416 = vand.u32 %v4415, 4294901760
  %v4417 = vsub.f32 %v4415, %v4416
  %v4418 = vand.u32 %v4417, 4294901760
  %4419 = vmatpush1.msra.mxu0 %v4418
  %v4420 = vand.u32 %v4232, 4294901760
  %v4421 = vsub.f32 %v4232, %v4420
  %v4422 = vand.u32 %v4421, 4294901760
  %v4423 = vsub.f32 %v4421, %v4422
  %v4424 = vand.u32 %v4423, 4294901760
  %4425 = vmatprep.subr.mxu0 %v4424
  %v4426 = vand.u32 %v4231, 4294901760
  %v4427 = vsub.f32 %v4231, %v4426
  %v4428 = vand.u32 %v4427, 4294901760
  %v4429 = vsub.f32 %v4427, %v4428
  %v4430 = vand.u32 %v4429, 4294901760
  %4431 = vmatpush1.msra.mxu0 %v4430
  %4432 = vmatprep.subr.mxu0 0.0
  %4433 = vmatpush1.msra.mxu0 0.0
  %4434 = vmatprep.subr.mxu0 0.0
  %4435 = vmatpush1.msra.mxu0 0.0
  %4436 = vmatprep.subr.mxu0 0.0
  %4437 = vmatpush1.msra.mxu0 0.0
  %4438 = vmatprep.subr.mxu0 0.0
  %4439 = vmatpush1.msra.mxu0 0.0
  %4440 = vmatprep.subr.mxu0 0.0
  %4441 = vmatpush1.msra.mxu0 0.0
  %4442 = vmatprep.subr.mxu0 0.0
  %4443 = vmatpush1.msra.mxu0 0.0
  %4444 = vmatprep.subr.mxu0 0.0
  %4445 = vmatpush1.msra.mxu0 0.0
  %4446 = vmatprep.subr.mxu0 0.0
  %4447 = vmatpush1.msra.mxu0 0.0
  %4448 = vmatprep.subr.mxu0 0.0
  %4449 = vmatpush1.msra.mxu0 0.0
  %4450 = vmatprep.subr.mxu0 0.0
  %4451 = vmatpush1.msra.mxu0 0.0
  %4452 = vmatprep.subr.mxu0 0.0
  %4453 = vmatpush1.msra.mxu0 0.0
  %4454 = vmatprep.subr.mxu0 0.0
  %4455 = vmatpush1.msra.mxu0 0.0
  %4456 = vmatprep.subr.mxu0 0.0
  %4457 = vmatpush1.msra.mxu0 0.0
  %4458 = vmatprep.subr.mxu0 0.0
  %4459 = vmatpush1.msra.mxu0 0.0
  %4460 = vmatprep.subr.mxu0 0.0
  %4461 = vmatpush1.msra.mxu0 0.0
  %4462 = vmatprep.subr.mxu0 0.0
  %4463 = vmatpush1.msra.mxu0 0.0
  %4464 = vmatprep.subr.mxu0 0.0
  %4465 = vmatpush1.msra.mxu0 0.0
  %4466 = vmatprep.subr.mxu0 0.0
  %4467 = vmatpush1.msra.mxu0 0.0
  %4468 = vmatprep.subr.mxu0 0.0
  %4469 = vmatpush1.msra.mxu0 0.0
  %4470 = vmatprep.subr.mxu0 0.0
  %4471 = vmatpush1.msra.mxu0 0.0
  %4472 = vmatprep.subr.mxu0 0.0
  %4473 = vmatpush1.msra.mxu0 0.0
  %4474 = vmatprep.subr.mxu0 0.0
  %4475 = vmatpush1.msra.mxu0 0.0
  %4476 = vmatprep.subr.mxu0 0.0
  %4477 = vmatpush1.msra.mxu0 0.0
  %4478 = vmatprep.subr.mxu0 0.0
  %4479 = vmatpush1.msra.mxu0 0.0
  %4480 = vmatprep.subr.mxu0 0.0
  %4481 = vmatpush1.msra.mxu0 0.0
  %4482 = vmatprep.subr.mxu0 0.0
  %4483 = vmatpush1.msra.mxu0 0.0
  %4484 = vmatprep.subr.mxu0 0.0
  %4485 = vmatpush1.msra.mxu0 0.0
  %4486 = vmatprep.mubr.f32.mxu0 0.0
  %v4487 = vand.u32 %v4256, 4294901760
  %4488 = vmatmul.mubr.f32.gmra.mrb[0].mxu0 %v4487
  %v4489 = vpop.f32.mrb[0].mxu0
  %v4490 = vadd.f32 %v4346, %v4489
  %v4491 = vpop.f32.mrb[0].mxu0
  %v4492 = vadd.f32 %v4348, %v4491
  %4493 = vmatprep.mubr.f32.mxu0 0.0
  %v4494 = vand.u32 %v4259, 4294901760
  %4495 = vmatmul.mubr.f32.gmra.mrb[0].mxu0 %v4494
  %v4496 = vpop.f32.mrb[0].mxu0
  %v4497 = vadd.f32 %v4357, %v4496
  %v4498 = vpop.f32.mrb[0].mxu0
  %v4499 = vadd.f32 %v4359, %v4498
  %4500 = vmatprep.mubr.f32.mxu0 0.0
  %v4501 = vand.u32 %v4262, 4294901760
  %4502 = vmatmul.mubr.f32.gmra.mrb[0].mxu0 %v4501
  %v4503 = vpop.f32.mrb[0].mxu0
  %v4504 = vadd.f32 %v4368, %v4503
  %v4505 = vpop.f32.mrb[0].mxu0
  %v4506 = vadd.f32 %v4370, %v4505
  %4507 = vdwg.mxu0
  %v4508 = vand.u32 %v4224, 4294901760
  %v4509 = vsub.f32 %v4224, %v4508
  %4510 = vmatprep.subr.mxu0 %v4509
  %v4511 = vand.u32 %v4223, 4294901760
  %v4512 = vsub.f32 %v4223, %v4511
  %4513 = vmatpush1.msra.mxu0 %v4512
  %v4514 = vand.u32 %v4226, 4294901760
  %v4515 = vsub.f32 %v4226, %v4514
  %4516 = vmatprep.subr.mxu0 %v4515
  %v4517 = vand.u32 %v4225, 4294901760
  %v4518 = vsub.f32 %v4225, %v4517
  %4519 = vmatpush1.msra.mxu0 %v4518
  %v4520 = vand.u32 %v4228, 4294901760
  %v4521 = vsub.f32 %v4228, %v4520
  %4522 = vmatprep.subr.mxu0 %v4521
  %v4523 = vand.u32 %v4227, 4294901760
  %v4524 = vsub.f32 %v4227, %v4523
  %4525 = vmatpush1.msra.mxu0 %v4524
  %v4526 = vand.u32 %v4230, 4294901760
  %v4527 = vsub.f32 %v4230, %v4526
  %4528 = vmatprep.subr.mxu0 %v4527
  %v4529 = vand.u32 %v4229, 4294901760
  %v4530 = vsub.f32 %v4229, %v4529
  %4531 = vmatpush1.msra.mxu0 %v4530
  %v4532 = vand.u32 %v4232, 4294901760
  %v4533 = vsub.f32 %v4232, %v4532
  %4534 = vmatprep.subr.mxu0 %v4533
  %v4535 = vand.u32 %v4231, 4294901760
  %v4536 = vsub.f32 %v4231, %v4535
  %4537 = vmatpush1.msra.mxu0 %v4536
  %4538 = vmatprep.subr.mxu0 0.0
  %4539 = vmatpush1.msra.mxu0 0.0
  %4540 = vmatprep.subr.mxu0 0.0
  %4541 = vmatpush1.msra.mxu0 0.0
  %4542 = vmatprep.subr.mxu0 0.0
  %4543 = vmatpush1.msra.mxu0 0.0
  %4544 = vmatprep.subr.mxu0 0.0
  %4545 = vmatpush1.msra.mxu0 0.0
  %4546 = vmatprep.subr.mxu0 0.0
  %4547 = vmatpush1.msra.mxu0 0.0
  %4548 = vmatprep.subr.mxu0 0.0
  %4549 = vmatpush1.msra.mxu0 0.0
  %4550 = vmatprep.subr.mxu0 0.0
  %4551 = vmatpush1.msra.mxu0 0.0
  %4552 = vmatprep.subr.mxu0 0.0
  %4553 = vmatpush1.msra.mxu0 0.0
  %4554 = vmatprep.subr.mxu0 0.0
  %4555 = vmatpush1.msra.mxu0 0.0
  %4556 = vmatprep.subr.mxu0 0.0
  %4557 = vmatpush1.msra.mxu0 0.0
  %4558 = vmatprep.subr.mxu0 0.0
  %4559 = vmatpush1.msra.mxu0 0.0
  %4560 = vmatprep.subr.mxu0 0.0
  %4561 = vmatpush1.msra.mxu0 0.0
  %4562 = vmatprep.subr.mxu0 0.0
  %4563 = vmatpush1.msra.mxu0 0.0
  %4564 = vmatprep.subr.mxu0 0.0
  %4565 = vmatpush1.msra.mxu0 0.0
  %4566 = vmatprep.subr.mxu0 0.0
  %4567 = vmatpush1.msra.mxu0 0.0
  %4568 = vmatprep.subr.mxu0 0.0
  %4569 = vmatpush1.msra.mxu0 0.0
  %4570 = vmatprep.subr.mxu0 0.0
  %4571 = vmatpush1.msra.mxu0 0.0
  %4572 = vmatprep.subr.mxu0 0.0
  %4573 = vmatpush1.msra.mxu0 0.0
  %4574 = vmatprep.subr.mxu0 0.0
  %4575 = vmatpush1.msra.mxu0 0.0
  %4576 = vmatprep.subr.mxu0 0.0
  %4577 = vmatpush1.msra.mxu0 0.0
  %4578 = vmatprep.subr.mxu0 0.0
  %4579 = vmatpush1.msra.mxu0 0.0
  %4580 = vmatprep.subr.mxu0 0.0
  %4581 = vmatpush1.msra.mxu0 0.0
  %4582 = vmatprep.subr.mxu0 0.0
  %4583 = vmatpush1.msra.mxu0 0.0
  %4584 = vmatprep.subr.mxu0 0.0
  %4585 = vmatpush1.msra.mxu0 0.0
  %4586 = vmatprep.subr.mxu0 0.0
  %4587 = vmatpush1.msra.mxu0 0.0
  %4588 = vmatprep.subr.mxu0 0.0
  %4589 = vmatpush1.msra.mxu0 0.0
  %4590 = vmatprep.subr.mxu0 0.0
  %4591 = vmatpush1.msra.mxu0 0.0
  %4592 = vmatprep.mubr.f32.mxu0 0.0
  %v4593 = vand.u32 %v4256, 4294901760
  %v4594 = vsub.f32 %v4256, %v4593
  %4595 = vmatmul.mubr.f32.gmra.mrb[0].mxu0 %v4594
  %v4596 = vpop.f32.mrb[0].mxu0
  %v4597 = vadd.f32 %v4490, %v4596
  %v4598 = vpop.f32.mrb[0].mxu0
  %v4599 = vadd.f32 %v4492, %v4598
  %4600 = vmatprep.mubr.f32.mxu0 0.0
  %v4601 = vand.u32 %v4259, 4294901760
  %v4602 = vsub.f32 %v4259, %v4601
  %4603 = vmatmul.mubr.f32.gmra.mrb[0].mxu0 %v4602
  %v4604 = vpop.f32.mrb[0].mxu0
  %v4605 = vadd.f32 %v4497, %v4604
  %v4606 = vpop.f32.mrb[0].mxu0
  %v4607 = vadd.f32 %v4499, %v4606
  %4608 = vmatprep.mubr.f32.mxu0 0.0
  %v4609 = vand.u32 %v4262, 4294901760
  %v4610 = vsub.f32 %v4262, %v4609
  %4611 = vmatmul.mubr.f32.gmra.mrb[0].mxu0 %v4610
  %v4612 = vpop.f32.mrb[0].mxu0
  %v4613 = vadd.f32 %v4504, %v4612
  %v4614 = vpop.f32.mrb[0].mxu0
  %v4615 = vadd.f32 %v4506, %v4614
  %4616 = vdwg.mxu0
  %v4617 = vand.u32 %v4224, 4294901760
  %4618 = vmatprep.subr.mxu0 %v4617
  %v4619 = vand.u32 %v4223, 4294901760
  %4620 = vmatpush1.msra.mxu0 %v4619
  %v4621 = vand.u32 %v4226, 4294901760
  %4622 = vmatprep.subr.mxu0 %v4621
  %v4623 = vand.u32 %v4225, 4294901760
  %4624 = vmatpush1.msra.mxu0 %v4623
  %v4625 = vand.u32 %v4228, 4294901760
  %4626 = vmatprep.subr.mxu0 %v4625
  %v4627 = vand.u32 %v4227, 4294901760
  %4628 = vmatpush1.msra.mxu0 %v4627
  %v4629 = vand.u32 %v4230, 4294901760
  %4630 = vmatprep.subr.mxu0 %v4629
  %v4631 = vand.u32 %v4229, 4294901760
  %4632 = vmatpush1.msra.mxu0 %v4631
  %v4633 = vand.u32 %v4232, 4294901760
  %4634 = vmatprep.subr.mxu0 %v4633
  %v4635 = vand.u32 %v4231, 4294901760
  %4636 = vmatpush1.msra.mxu0 %v4635
  %4637 = vmatprep.subr.mxu0 0.0
  %4638 = vmatpush1.msra.mxu0 0.0
  %4639 = vmatprep.subr.mxu0 0.0
  %4640 = vmatpush1.msra.mxu0 0.0
  %4641 = vmatprep.subr.mxu0 0.0
  %4642 = vmatpush1.msra.mxu0 0.0
  %4643 = vmatprep.subr.mxu0 0.0
  %4644 = vmatpush1.msra.mxu0 0.0
  %4645 = vmatprep.subr.mxu0 0.0
  %4646 = vmatpush1.msra.mxu0 0.0
  %4647 = vmatprep.subr.mxu0 0.0
  %4648 = vmatpush1.msra.mxu0 0.0
  %4649 = vmatprep.subr.mxu0 0.0
  %4650 = vmatpush1.msra.mxu0 0.0
  %4651 = vmatprep.subr.mxu0 0.0
  %4652 = vmatpush1.msra.mxu0 0.0
  %4653 = vmatprep.subr.mxu0 0.0
  %4654 = vmatpush1.msra.mxu0 0.0
  %4655 = vmatprep.subr.mxu0 0.0
  %4656 = vmatpush1.msra.mxu0 0.0
  %4657 = vmatprep.subr.mxu0 0.0
  %4658 = vmatpush1.msra.mxu0 0.0
  %4659 = vmatprep.subr.mxu0 0.0
  %4660 = vmatpush1.msra.mxu0 0.0
  %4661 = vmatprep.subr.mxu0 0.0
  %4662 = vmatpush1.msra.mxu0 0.0
  %4663 = vmatprep.subr.mxu0 0.0
  %4664 = vmatpush1.msra.mxu0 0.0
  %4665 = vmatprep.subr.mxu0 0.0
  %4666 = vmatpush1.msra.mxu0 0.0
  %4667 = vmatprep.subr.mxu0 0.0
  %4668 = vmatpush1.msra.mxu0 0.0
  %4669 = vmatprep.subr.mxu0 0.0
  %4670 = vmatpush1.msra.mxu0 0.0
  %4671 = vmatprep.subr.mxu0 0.0
  %4672 = vmatpush1.msra.mxu0 0.0
  %4673 = vmatprep.subr.mxu0 0.0
  %4674 = vmatpush1.msra.mxu0 0.0
  %4675 = vmatprep.subr.mxu0 0.0
  %4676 = vmatpush1.msra.mxu0 0.0
  %4677 = vmatprep.subr.mxu0 0.0
  %4678 = vmatpush1.msra.mxu0 0.0
  %4679 = vmatprep.subr.mxu0 0.0
  %4680 = vmatpush1.msra.mxu0 0.0
  %4681 = vmatprep.subr.mxu0 0.0
  %4682 = vmatpush1.msra.mxu0 0.0
  %4683 = vmatprep.subr.mxu0 0.0
  %4684 = vmatpush1.msra.mxu0 0.0
  %4685 = vmatprep.subr.mxu0 0.0
  %4686 = vmatpush1.msra.mxu0 0.0
  %4687 = vmatprep.subr.mxu0 0.0
  %4688 = vmatpush1.msra.mxu0 0.0
  %4689 = vmatprep.subr.mxu0 0.0
  %4690 = vmatpush1.msra.mxu0 0.0
  %4691 = vmatprep.mubr.f32.mxu0 0.0
  %v4692 = vand.u32 %v4256, 4294901760
  %v4693 = vsub.f32 %v4256, %v4692
  %v4694 = vand.u32 %v4693, 4294901760
  %4695 = vmatmul.mubr.f32.gmra.mrb[0].mxu0 %v4694
  %v4696 = vpop.f32.mrb[0].mxu0
  %v4697 = vadd.f32 %v4597, %v4696
  %v4698 = vpop.f32.mrb[0].mxu0
  %v4699 = vadd.f32 %v4599, %v4698
  %4700 = vmatprep.mubr.f32.mxu0 0.0
  %v4701 = vand.u32 %v4259, 4294901760
  %v4702 = vsub.f32 %v4259, %v4701
  %v4703 = vand.u32 %v4702, 4294901760
  %4704 = vmatmul.mubr.f32.gmra.mrb[0].mxu0 %v4703
  %v4705 = vpop.f32.mrb[0].mxu0
  %v4706 = vadd.f32 %v4605, %v4705
  %v4707 = vpop.f32.mrb[0].mxu0
  %v4708 = vadd.f32 %v4607, %v4707
  %4709 = vmatprep.mubr.f32.mxu0 0.0
  %v4710 = vand.u32 %v4262, 4294901760
  %v4711 = vsub.f32 %v4262, %v4710
  %v4712 = vand.u32 %v4711, 4294901760
  %4713 = vmatmul.mubr.f32.gmra.mrb[0].mxu0 %v4712
  %v4714 = vpop.f32.mrb[0].mxu0
  %v4715 = vadd.f32 %v4613, %v4714
  %v4716 = vpop.f32.mrb[0].mxu0
  %v4717 = vadd.f32 %v4615, %v4716
  %4718 = vdwg.mxu0
  %v4719 = vand.u32 %v4224, 4294901760
  %v4720 = vsub.f32 %v4224, %v4719
  %v4721 = vand.u32 %v4720, 4294901760
  %4722 = vmatprep.subr.mxu0 %v4721
  %v4723 = vand.u32 %v4223, 4294901760
  %v4724 = vsub.f32 %v4223, %v4723
  %v4725 = vand.u32 %v4724, 4294901760
  %4726 = vmatpush1.msra.mxu0 %v4725
  %v4727 = vand.u32 %v4226, 4294901760
  %v4728 = vsub.f32 %v4226, %v4727
  %v4729 = vand.u32 %v4728, 4294901760
  %4730 = vmatprep.subr.mxu0 %v4729
  %v4731 = vand.u32 %v4225, 4294901760
  %v4732 = vsub.f32 %v4225, %v4731
  %v4733 = vand.u32 %v4732, 4294901760
  %4734 = vmatpush1.msra.mxu0 %v4733
  %v4735 = vand.u32 %v4228, 4294901760
  %v4736 = vsub.f32 %v4228, %v4735
  %v4737 = vand.u32 %v4736, 4294901760
  %4738 = vmatprep.subr.mxu0 %v4737
  %v4739 = vand.u32 %v4227, 4294901760
  %v4740 = vsub.f32 %v4227, %v4739
  %v4741 = vand.u32 %v4740, 4294901760
  %4742 = vmatpush1.msra.mxu0 %v4741
  %v4743 = vand.u32 %v4230, 4294901760
  %v4744 = vsub.f32 %v4230, %v4743
  %v4745 = vand.u32 %v4744, 4294901760
  %4746 = vmatprep.subr.mxu0 %v4745
  %v4747 = vand.u32 %v4229, 4294901760
  %v4748 = vsub.f32 %v4229, %v4747
  %v4749 = vand.u32 %v4748, 4294901760
  %4750 = vmatpush1.msra.mxu0 %v4749
  %v4751 = vand.u32 %v4232, 4294901760
  %v4752 = vsub.f32 %v4232, %v4751
  %v4753 = vand.u32 %v4752, 4294901760
  %4754 = vmatprep.subr.mxu0 %v4753
  %v4755 = vand.u32 %v4231, 4294901760
  %v4756 = vsub.f32 %v4231, %v4755
  %v4757 = vand.u32 %v4756, 4294901760
  %4758 = vmatpush1.msra.mxu0 %v4757
  %4759 = vmatprep.subr.mxu0 0.0
  %4760 = vmatpush1.msra.mxu0 0.0
  %4761 = vmatprep.subr.mxu0 0.0
  %4762 = vmatpush1.msra.mxu0 0.0
  %4763 = vmatprep.subr.mxu0 0.0
  %4764 = vmatpush1.msra.mxu0 0.0
  %4765 = vmatprep.subr.mxu0 0.0
  %4766 = vmatpush1.msra.mxu0 0.0
  %4767 = vmatprep.subr.mxu0 0.0
  %4768 = vmatpush1.msra.mxu0 0.0
  %4769 = vmatprep.subr.mxu0 0.0
  %4770 = vmatpush1.msra.mxu0 0.0
  %4771 = vmatprep.subr.mxu0 0.0
  %4772 = vmatpush1.msra.mxu0 0.0
  %4773 = vmatprep.subr.mxu0 0.0
  %4774 = vmatpush1.msra.mxu0 0.0
  %4775 = vmatprep.subr.mxu0 0.0
  %4776 = vmatpush1.msra.mxu0 0.0
  %4777 = vmatprep.subr.mxu0 0.0
  %4778 = vmatpush1.msra.mxu0 0.0
  %4779 = vmatprep.subr.mxu0 0.0
  %4780 = vmatpush1.msra.mxu0 0.0
  %4781 = vmatprep.subr.mxu0 0.0
  %4782 = vmatpush1.msra.mxu0 0.0
  %4783 = vmatprep.subr.mxu0 0.0
  %4784 = vmatpush1.msra.mxu0 0.0
  %4785 = vmatprep.subr.mxu0 0.0
  %4786 = vmatpush1.msra.mxu0 0.0
  %4787 = vmatprep.subr.mxu0 0.0
  %4788 = vmatpush1.msra.mxu0 0.0
  %4789 = vmatprep.subr.mxu0 0.0
  %4790 = vmatpush1.msra.mxu0 0.0
  %4791 = vmatprep.subr.mxu0 0.0
  %4792 = vmatpush1.msra.mxu0 0.0
  %4793 = vmatprep.subr.mxu0 0.0
  %4794 = vmatpush1.msra.mxu0 0.0
  %4795 = vmatprep.subr.mxu0 0.0
  %4796 = vmatpush1.msra.mxu0 0.0
  %4797 = vmatprep.subr.mxu0 0.0
  %4798 = vmatpush1.msra.mxu0 0.0
  %4799 = vmatprep.subr.mxu0 0.0
  %4800 = vmatpush1.msra.mxu0 0.0
  %4801 = vmatprep.subr.mxu0 0.0
  %4802 = vmatpush1.msra.mxu0 0.0
  %4803 = vmatprep.subr.mxu0 0.0
  %4804 = vmatpush1.msra.mxu0 0.0
  %4805 = vmatprep.subr.mxu0 0.0
  %4806 = vmatpush1.msra.mxu0 0.0
  %4807 = vmatprep.subr.mxu0 0.0
  %4808 = vmatpush1.msra.mxu0 0.0
  %4809 = vmatprep.subr.mxu0 0.0
  %4810 = vmatpush1.msra.mxu0 0.0
  %4811 = vmatprep.subr.mxu0 0.0
  %4812 = vmatpush1.msra.mxu0 0.0
  %4813 = vmatprep.mubr.f32.mxu0 0.0
  %v4814 = vand.u32 %v4256, 4294901760
  %4815 = vmatmul.mubr.f32.gmra.mrb[0].mxu0 %v4814
  %v4816 = vpop.f32.mrb[0].mxu0
  %v4817 = vadd.f32 %v4697, %v4816
  %v4818 = vpop.f32.mrb[0].mxu0
  %v4819 = vadd.f32 %v4699, %v4818
  %4820 = vmatprep.mubr.f32.mxu0 0.0
  %v4821 = vand.u32 %v4259, 4294901760
  %4822 = vmatmul.mubr.f32.gmra.mrb[0].mxu0 %v4821
  %v4823 = vpop.f32.mrb[0].mxu0
  %v4824 = vadd.f32 %v4706, %v4823
  %v4825 = vpop.f32.mrb[0].mxu0
  %v4826 = vadd.f32 %v4708, %v4825
  %4827 = vmatprep.mubr.f32.mxu0 0.0
  %v4828 = vand.u32 %v4262, 4294901760
  %4829 = vmatmul.mubr.f32.gmra.mrb[0].mxu0 %v4828
  %v4830 = vpop.f32.mrb[0].mxu0
  %v4831 = vadd.f32 %v4715, %v4830
  %v4832 = vpop.f32.mrb[0].mxu0
  %v4833 = vadd.f32 %v4717, %v4832
  %4834 = vdwg.mxu0
  %v4835 = vand.u32 %v4224, 4294901760
  %4836 = vmatprep.subr.mxu0 %v4835
  %v4837 = vand.u32 %v4223, 4294901760
  %4838 = vmatpush1.msra.mxu0 %v4837
  %v4839 = vand.u32 %v4226, 4294901760
  %4840 = vmatprep.subr.mxu0 %v4839
  %v4841 = vand.u32 %v4225, 4294901760
  %4842 = vmatpush1.msra.mxu0 %v4841
  %v4843 = vand.u32 %v4228, 4294901760
  %4844 = vmatprep.subr.mxu0 %v4843
  %v4845 = vand.u32 %v4227, 4294901760
  %4846 = vmatpush1.msra.mxu0 %v4845
  %v4847 = vand.u32 %v4230, 4294901760
  %4848 = vmatprep.subr.mxu0 %v4847
  %v4849 = vand.u32 %v4229, 4294901760
  %4850 = vmatpush1.msra.mxu0 %v4849
  %v4851 = vand.u32 %v4232, 4294901760
  %4852 = vmatprep.subr.mxu0 %v4851
  %v4853 = vand.u32 %v4231, 4294901760
  %4854 = vmatpush1.msra.mxu0 %v4853
  %4855 = vmatprep.subr.mxu0 0.0
  %4856 = vmatpush1.msra.mxu0 0.0
  %4857 = vmatprep.subr.mxu0 0.0
  %4858 = vmatpush1.msra.mxu0 0.0
  %4859 = vmatprep.subr.mxu0 0.0
  %4860 = vmatpush1.msra.mxu0 0.0
  %4861 = vmatprep.subr.mxu0 0.0
  %4862 = vmatpush1.msra.mxu0 0.0
  %4863 = vmatprep.subr.mxu0 0.0
  %4864 = vmatpush1.msra.mxu0 0.0
  %4865 = vmatprep.subr.mxu0 0.0
  %4866 = vmatpush1.msra.mxu0 0.0
  %4867 = vmatprep.subr.mxu0 0.0
  %4868 = vmatpush1.msra.mxu0 0.0
  %4869 = vmatprep.subr.mxu0 0.0
  %4870 = vmatpush1.msra.mxu0 0.0
  %4871 = vmatprep.subr.mxu0 0.0
  %4872 = vmatpush1.msra.mxu0 0.0
  %4873 = vmatprep.subr.mxu0 0.0
  %4874 = vmatpush1.msra.mxu0 0.0
  %4875 = vmatprep.subr.mxu0 0.0
  %4876 = vmatpush1.msra.mxu0 0.0
  %4877 = vmatprep.subr.mxu0 0.0
  %4878 = vmatpush1.msra.mxu0 0.0
  %4879 = vmatprep.subr.mxu0 0.0
  %4880 = vmatpush1.msra.mxu0 0.0
  %4881 = vmatprep.subr.mxu0 0.0
  %4882 = vmatpush1.msra.mxu0 0.0
  %4883 = vmatprep.subr.mxu0 0.0
  %4884 = vmatpush1.msra.mxu0 0.0
  %4885 = vmatprep.subr.mxu0 0.0
  %4886 = vmatpush1.msra.mxu0 0.0
  %4887 = vmatprep.subr.mxu0 0.0
  %4888 = vmatpush1.msra.mxu0 0.0
  %4889 = vmatprep.subr.mxu0 0.0
  %4890 = vmatpush1.msra.mxu0 0.0
  %4891 = vmatprep.subr.mxu0 0.0
  %4892 = vmatpush1.msra.mxu0 0.0
  %4893 = vmatprep.subr.mxu0 0.0
  %4894 = vmatpush1.msra.mxu0 0.0
  %4895 = vmatprep.subr.mxu0 0.0
  %4896 = vmatpush1.msra.mxu0 0.0
  %4897 = vmatprep.subr.mxu0 0.0
  %4898 = vmatpush1.msra.mxu0 0.0
  %4899 = vmatprep.subr.mxu0 0.0
  %4900 = vmatpush1.msra.mxu0 0.0
  %4901 = vmatprep.subr.mxu0 0.0
  %4902 = vmatpush1.msra.mxu0 0.0
  %4903 = vmatprep.subr.mxu0 0.0
  %4904 = vmatpush1.msra.mxu0 0.0
  %4905 = vmatprep.subr.mxu0 0.0
  %4906 = vmatpush1.msra.mxu0 0.0
  %4907 = vmatprep.subr.mxu0 0.0
  %4908 = vmatpush1.msra.mxu0 0.0
  %4909 = vmatprep.mubr.f32.mxu0 0.0
  %v4910 = vand.u32 %v4256, 4294901760
  %4911 = vmatmul.mubr.f32.gmra.mrb[0].mxu0 %v4910
  %v4912 = vpop.f32.mrb[0].mxu0
  %v4913 = vadd.f32 %v4817, %v4912
  %v4914 = vpop.f32.mrb[0].mxu0
  %v4915 = vadd.f32 %v4819, %v4914
  %4916 = vmatprep.mubr.f32.mxu0 0.0
  %v4917 = vand.u32 %v4259, 4294901760
  %4918 = vmatmul.mubr.f32.gmra.mrb[0].mxu0 %v4917
  %v4919 = vpop.f32.mrb[0].mxu0
  %v4920 = vadd.f32 %v4824, %v4919
  %v4921 = vpop.f32.mrb[0].mxu0
  %v4922 = vadd.f32 %v4826, %v4921
  %4923 = vmatprep.mubr.f32.mxu0 0.0
  %v4924 = vand.u32 %v4262, 4294901760
  %4925 = vmatmul.mubr.f32.gmra.mrb[0].mxu0 %v4924
  %v4926 = vpop.f32.mrb[0].mxu0
  %v4927 = vadd.f32 %v4831, %v4926
  %v4928 = vpop.f32.mrb[0].mxu0
  %v4929 = vadd.f32 %v4833, %v4928
  %4930 = vdwg.mxu0
  %vm4931 = vcmp.gt.f32.partialorder %v4913, 0.0
  %vm4932 = vcmp.gt.f32.partialorder %v4915, 0.0
  %vm4933 = vcmp.gt.f32.partialorder %v4920, 0.0
  %vm4934 = vcmp.gt.f32.partialorder %v4922, 0.0
  %vm4935 = vcmp.gt.f32.partialorder %v4927, 0.0
  %vm4936 = vcmp.gt.f32.partialorder %v4929, 0.0
  %v4937 = vmul.f32 %v4913, 0.01
  %v4938 = vmul.f32 %v4915, 0.01
  %v4939 = vmul.f32 %v4920, 0.01
  %v4940 = vmul.f32 %v4922, 0.01
  %v4941 = vmul.f32 %v4927, 0.01
  %v4942 = vmul.f32 %v4929, 0.01
  %v4943 = vsel %vm4931, %v4913, %v4937
  %v4944 = vsel %vm4932, %v4915, %v4938
  %v4945 = vsel %vm4933, %v4920, %v4939
  %v4946 = vsel %vm4934, %v4922, %v4940
  %v4947 = vsel %vm4935, %v4927, %v4941
  %v4948 = vsel %vm4936, %v4929, %v4942
  %v4949 = vsub.f32 %v4943, %v4944
  %v4950 = vsub.f32 %v4945, %v4946
  %v4951 = vsub.f32 %v4947, %v4948
  %v4952 = vld [vmem:[%s10] sm:$0xff]
  %v4953 = vld [vmem:[%s10 + $0x8] sm:$0xff]
  %v4954 = vld [vmem:[%s10 + $0x10] sm:$0xf]
  %4956 = vset.pattern.permute.xlu0 0
  %4957 = vperm.xlu0 %4956, %v4952
  %v4958 = vpop.permute.xlu0 %4957
  %4961 = vset.pattern.permute.xlu0 0
  %4962 = vperm.xlu0 %4961, %v4953
  %v4963 = vpop.permute.xlu0 %4962
  %4966 = vset.pattern.permute.xlu0 0
  %4967 = vperm.xlu0 %4966, %v4954
  %v4968 = vpop.permute.xlu0 %4967
  %v4970 = vmul.f32 %v4958, %v4949
  %v4971 = vmul.f32 %v4963, %v4950
  %v4972 = vmul.f32 %v4968, %v4951
  %v4973 = vadd.f32 %v4970, %v4971
  %vm4974 = vcmask 1043456
  %v4975 = vsel %vm4974, %v4972, 0.0
  %v4976 = vadd.f32 %v4973, %v4975
  %v4977 = vrot.slane %v4976, 4
  %v4978 = vadd.f32 %v4976, %v4977
  %v4979 = vrot.slane %v4978, 2
  %v4980 = vadd.f32 %v4978, %v4979
  %v4981 = vrot.slane %v4980, 1
  %v4982 = vadd.f32 %v4980, %v4981
  %4983 = vst [vmem:[%s11] sm:$0x1] %v4982
  // Predicated region
  $region46: #{network_forward.1} parent=0 // pred_check
    _
  $region47: #{network_forward.1} parent=0 // pred_check_branch
    %4985 = sbr.rel (0) target = $region49
  $region48: #{network_forward.1} parent=0 // pred_region
    _
  $region49: #{network_forward.1} parent=0 // pred_fallthru
    _
  // Predicated region
  $region50: #{network_forward.1} parent=0 // pred_check
    _
  $region51: #{network_forward.1} parent=0 // pred_check_branch
    %4987 = sbr.rel (0) target = $region53
  $region52: #{network_forward.1} parent=0 // pred_region
    _
  $region53: #{network_forward.1} parent=0 // pred_fallthru
    _

</llo_original>
